<compile_context>
chip_gen: v7x
topology: tpu7x:2x2x1
jax: 0.10.0
libtpu: 0.0.40
codegen_flags: <defaults>
</compile_context>

<pallas_src>
import jax
import jax.numpy as jnp
from jax import lax
from jax.experimental import pallas as pl
from jax.experimental.pallas import tpu as pltpu

# ----------------------- dimensions -----------------------
B = 2                 # batch
SEQ = 8               # token sequence length
VOCAB = 100           # synthetic vocab for the BERT-surrogate embedding table
BERT_HIDDEN = 64      # shrunk stand-in for BERT hidden size 768
LSTM_HIDDEN = 128     # nn.LSTM(hidden_size=128, bidirectional=True)
TEXT_RAW_DIM = 2 * LSTM_HIDDEN   # 256 -> text_fc input
TEXT_FEAT_DIM = 128   # Config.TEXT_FEAT_DIM
IMG_FEAT_DIM = 256    # Config.IMG_FEAT_DIM
FUSION_DIM = 124      # Config.FUSION_DIM
FINAL_DIM = 128       # Config.FINAL_DIM
MAX_IMAGES = 5        # Config.MAX_IMAGES_PER_POST
IMG_C, IMG_H, IMG_W = 3, 16, 16          # shrunk from 3x224x224
IMG_FLAT = IMG_C * IMG_H * IMG_W          # 768
RESNET_FEAT = 512     # resnet18 feature dim (fc = Identity)
SENT_DIM = 4
NUM_CLASSES = 2

# packed-bias lane offsets (all slice starts are multiples of 128 lanes)
OFF_B_LSTM = 0                         # 8*H = 1024  (b_ih + b_hh, fwd | bwd)
OFF_B_RES = 1024                       # 512
OFF_B_IMG = 1536                       # 256
OFF_B_TXT = 1792                       # 128
OFF_B_FUSE = 1920                      # 124 (padded to 128)
OFF_B_FIN = 2048                       # 128
OFF_B_CLS = 2176                       # 2   (padded to 128)
BIAS_TOTAL = 2304


# ----------------------- fused forward kernel -----------------------
def fused_kernel(emb_ref, len_ref, img_ref, sent_ref,
                 wih_ref, whh_ref, w_res_hbm, w_img_hbm,
                 w_txt_ref, wf_ref, wfin_f_ref, wfin_s_ref, wcls_ref, bias_ref,
                 out_ref,
                 w_res_vmem, w_img_vmem, dma_sems):
    H = LSTM_HIDDEN
    relu = lambda x: jnp.maximum(x, 0.0)
    bf16 = jnp.bfloat16

    # --- kick off image-branch weight DMAs; they overlap with the LSTM recurrence ---
    cp_res = pltpu.make_async_copy(w_res_hbm, w_res_vmem, dma_sems.at[0])
    cp_img = pltpu.make_async_copy(w_img_hbm, w_img_vmem, dma_sems.at[1])
    cp_res.start()
    cp_img.start()

    # --- packed bias slices (all starts 128-lane aligned) ---
    b_lstm = bias_ref[:, OFF_B_LSTM:OFF_B_LSTM + 8 * H]              # [1, 1024]
    b_res = bias_ref[:, OFF_B_RES:OFF_B_RES + RESNET_FEAT]           # [1, 512]
    b_img = bias_ref[:, OFF_B_IMG:OFF_B_IMG + IMG_FEAT_DIM]          # [1, 256]
    b_txt = bias_ref[:, OFF_B_TXT:OFF_B_TXT + TEXT_FEAT_DIM]         # [1, 128]
    b_fuse = bias_ref[:, OFF_B_FUSE:OFF_B_FUSE + FUSION_DIM]         # [1, 124]
    b_fin = bias_ref[:, OFF_B_FIN:OFF_B_FIN + FINAL_DIM]             # [1, 128]
    b_cls = bias_ref[:, OFF_B_CLS:OFF_B_CLS + NUM_CLASSES]           # [1, 2]

    # --- hoisted LSTM input projection for BOTH directions (one MXU op, off the
    #     serial recurrence).  Kept as a value: no scratch round-trip; the loop below
    #     is fully unrolled so all slices are static.  Row r = t*B + b (time-major). ---
    xw = jnp.dot(emb_ref[...], wih_ref[...],
                 preferred_element_type=jnp.float32) + b_lstm        # [S*B, 8H] f32

    # --- pack_padded_sequence mask source: per-row lengths broadcast once (hoisted) ---
    len_bh = jnp.broadcast_to(len_ref[...], (B, H))                  # [B, H] int32

    # --- fused bidirectional masked LSTM recurrence (f32 state, bf16 matmul inputs) ---
    whh_f = whh_ref[:, 0:4 * H]                                      # [H, 4H] bf16
    whh_b = whh_ref[:, 4 * H:8 * H]                                  # [H, 4H] bf16

    def gate_update(gates, c):
        # PyTorch LSTM gate order: i, f, g, o (all slices are 128-lane aligned)
        i = jax.nn.sigmoid(gates[:, 0:H])
        f = jax.nn.sigmoid(gates[:, H:2 * H])
        g = jnp.tanh(gates[:, 2 * H:3 * H])
        o = jax.nn.sigmoid(gates[:, 3 * H:4 * H])
        c_new = f * c + i * g
        h_new = o * jnp.tanh(c_new)
        return h_new, c_new

    z = jnp.zeros((B, H), jnp.float32)
    h_f, c_f, h_b, c_b = z, z, z, z
    for t in range(SEQ):                       # fully unrolled at trace time
        tb = SEQ - 1 - t
        xw_f = xw[t * B:(t + 1) * B, 0:4 * H]                  # [B, 4H] fwd pre-act
        xw_b = xw[tb * B:(tb + 1) * B, 4 * H:8 * H]            # [B, 4H] bwd pre-act

        gates_f = xw_f + jnp.dot(h_f.astype(bf16), whh_f,
                                 preferred_element_type=jnp.float32)
        gates_b = xw_b + jnp.dot(h_b.astype(bf16), whh_b,
                                 preferred_element_type=jnp.float32)
        hf_n, cf_n = gate_update(gates_f, c_f)
        hb_n, cb_n = gate_update(gates_b, c_b)

        # pack_padded_sequence semantics: freeze state for rows whose length <= t
        m_f = len_bh > t                                       # [B, H] bool
        m_b = len_bh > tb
        h_f = jnp.where(m_f, hf_n, h_f)
        c_f = jnp.where(m_f, cf_n, c_f)
        h_b = jnp.where(m_b, hb_n, h_b)
        c_b = jnp.where(m_b, cb_n, c_b)

    # --- text_fc: cat(h_fwd_final, h_bwd_final) -> Linear(256->128) + ReLU ---
    text_raw = jnp.concatenate([h_f, h_b], axis=1)                   # [B, 256] f32
    txt = relu(jnp.dot(text_raw.astype(bf16), w_txt_ref[...],
                       preferred_element_type=jnp.float32) + b_txt)  # [B, 128]

    # --- image branch (now that the overlapped weight DMAs are needed) ---
    cp_res.wait()
    cp_img.wait()
    # resnet surrogate: Linear(768->512) + ReLU ; img_fc: Linear(512->256) + ReLU
    res = relu(jnp.dot(img_ref[...], w_res_vmem[...],
                       preferred_element_type=jnp.float32) + b_res)          # [B*NI, 512]
    imgf = relu(jnp.dot(res.astype(bf16), w_img_vmem[...],
                        preferred_element_type=jnp.float32) + b_img)         # [B*NI, 256]
    # mean over MAX_IMAGES as one small MXU matmul; selection matrix built in-kernel
    rows = lax.broadcasted_iota(jnp.int32, (B, B * MAX_IMAGES), 0)
    cols = lax.broadcasted_iota(jnp.int32, (B, B * MAX_IMAGES), 1)
    sel = jnp.where((cols >= rows * MAX_IMAGES) & (cols < (rows + 1) * MAX_IMAGES),
                    1.0, 0.0).astype(bf16)                                    # [B, B*NI]
    img_mean = jnp.dot(sel, imgf.astype(bf16),
                       preferred_element_type=jnp.float32) * (1.0 / MAX_IMAGES)  # [B, 256]

    # --- fusion_fc: cat([text(128), img(256)]) @ W[384,124] + ReLU (lane-aligned concat) ---
    ti = jnp.concatenate([txt, img_mean], axis=1)                    # [B, 384]
    fused = relu(jnp.dot(ti.astype(bf16), wf_ref[...],
                         preferred_element_type=jnp.float32) + b_fuse)        # [B, 124]

    # --- final_fusion: cat([fused(124), sentiment(4)]) in split-weight form ---
    final = relu(jnp.dot(fused.astype(bf16), wfin_f_ref[...],
                         preferred_element_type=jnp.float32)
                 + jnp.dot(sent_ref[...], wfin_s_ref[...],
                           preferred_element_type=jnp.float32)
                 + b_fin)                                                     # [B, 128]

    # --- classifier: Linear(128->2) + Softmax(dim=1), softmax in f32 ---
    logits = jnp.dot(final.astype(bf16), wcls_ref[...],
                     preferred_element_type=jnp.float32) + b_cls
    m = jnp.max(logits, axis=1, keepdims=True)
    e = jnp.exp(logits - m)
    out_ref[...] = e / jnp.sum(e, axis=1, keepdims=True)


def fused_forward_pallas(emb_flat, len_col, img_flat, sentiment, p):
    vmem = pl.BlockSpec(memory_space=pltpu.MemorySpace.VMEM)
    anyspec = pl.BlockSpec(memory_space=pl.ANY)      # image weights stay in HBM; manual DMA
    in_specs = [vmem, vmem, vmem, vmem,              # emb, lengths, images, sentiment
                vmem, vmem,                          # wih_cat, whh_cat
                anyspec, anyspec,                    # w_res, w_img (overlapped DMA)
                vmem, vmem, vmem, vmem, vmem, vmem]  # w_txt, wf, wfin_f, wfin_s, wcls, bias

    return pl.pallas_call(
        fused_kernel,
        out_shape=jax.ShapeDtypeStruct((B, NUM_CLASSES), jnp.float32),
        in_specs=in_specs,
        out_specs=vmem,
        scratch_shapes=[
            pltpu.VMEM((IMG_FLAT, RESNET_FEAT), jnp.bfloat16),      # w_res landing buffer
            pltpu.VMEM((RESNET_FEAT, IMG_FEAT_DIM), jnp.bfloat16),  # w_img landing buffer
            pltpu.SemaphoreType.DMA((2,)),
        ],
        compiler_params=pltpu.CompilerParams(vmem_limit_bytes=16 * 1024 * 1024),
        cost_estimate=pl.CostEstimate(flops=15_000_000,
                                      transcendentals=20_000,
                                      bytes_accessed=1_900_000),
    )(emb_flat, len_col, img_flat, sentiment,
      p["wih_cat"], p["whh_cat"], p["w_res"], p["w_img"],
      p["w_txt"], p["wf"], p["wfin_fused"], p["wfin_sent"], p["wcls"], p["bias_cat"])


# ----------------------- parameters (deterministic, synthetic) -----------------------
def init_params(key):
    keys = jax.random.split(key, 12)

    def w(k, fan_in, shape):
        return (jax.random.normal(k, shape, jnp.float32)
                / jnp.sqrt(float(fan_in))).astype(jnp.bfloat16)

    H4 = 4 * LSTM_HIDDEN
    # BiLSTM weights stored pre-transposed: x @ W_ih + h @ W_hh + b
    wih_f = w(keys[1], BERT_HIDDEN, (BERT_HIDDEN, H4))
    wih_b = w(keys[2], BERT_HIDDEN, (BERT_HIDDEN, H4))
    whh_f = w(keys[3], LSTM_HIDDEN, (LSTM_HIDDEN, H4))
    whh_b = w(keys[4], LSTM_HIDDEN, (LSTM_HIDDEN, H4))

    # biases (zero stand-ins; a real checkpoint would pack b_ih + b_hh per direction etc.)
    zeros = lambda n: jnp.zeros((1, n), jnp.float32)
    pad_to = lambda v, n: jnp.pad(v, ((0, 0), (0, n - v.shape[1])))
    bias_cat = jnp.concatenate([
        zeros(8 * LSTM_HIDDEN),                 # LSTM biases (fwd | bwd), offset 0
        zeros(RESNET_FEAT),                     # b_res,  offset 1024
        zeros(IMG_FEAT_DIM),                    # b_img,  offset 1536
        zeros(TEXT_FEAT_DIM),                   # b_txt,  offset 1792
        pad_to(zeros(FUSION_DIM), 128),         # b_fuse, offset 1920 (padded 124->128)
        zeros(FINAL_DIM),                       # b_fin,  offset 2048
        pad_to(zeros(NUM_CLASSES), 128),        # b_cls,  offset 2176 (padded 2->128)
    ], axis=1)
    assert bias_cat.shape == (1, BIAS_TOTAL)

    p = {
        # BERT surrogate embedding table (kept f32; activations cast to bf16 in wrapper)
        "bert_emb": jax.random.normal(keys[0], (VOCAB, BERT_HIDDEN), jnp.float32) * 0.1,
        # concatenated input projection: [BERT_HIDDEN, 8H] = [fwd gates | bwd gates]
        "wih_cat": jnp.concatenate([wih_f, wih_b], axis=1),
        # concatenated recurrent weights: [H, 8H] = [fwd | bwd]
        "whh_cat": jnp.concatenate([whh_f, whh_b], axis=1),
        # resnet surrogate: 768 -> 512
        "w_res": w(keys[5], IMG_FLAT, (IMG_FLAT, RESNET_FEAT)),
        # img_fc: 512 -> 256
        "w_img": w(keys[6], RESNET_FEAT, (RESNET_FEAT, IMG_FEAT_DIM)),
        # text_fc: 256 -> 128
        "w_txt": w(keys[7], TEXT_RAW_DIM, (TEXT_RAW_DIM, TEXT_FEAT_DIM)),
        # fusion_fc: (128 + 256) -> 124, single concatenated weight
        "wf": w(keys[8], TEXT_FEAT_DIM + IMG_FEAT_DIM,
                (TEXT_FEAT_DIM + IMG_FEAT_DIM, FUSION_DIM)),
        # final_fusion: (124 + 4) -> 128, split by concat halves (lowering-safe form)
        "wfin_fused": w(keys[9], FUSION_DIM + SENT_DIM, (FUSION_DIM, FINAL_DIM)),
        "wfin_sent": w(keys[10], FUSION_DIM + SENT_DIM, (SENT_DIM, FINAL_DIM)),
        # classifier: 128 -> 2
        "wcls": w(keys[11], FINAL_DIM, (FINAL_DIM, NUM_CLASSES)),
        # all biases packed into one lane-aligned row vector (f32)
        "bias_cat": bias_cat,
    }
    return p


# ----------------------- forward (glue + single fused kernel) -----------------------
def multimodal_rumor_detector(input_ids, attention_mask, images, sentiment, params):
    # BERT surrogate: frozen embedding lookup.  TODO(synk): real DistilBERT backbone.
    emb = params["bert_emb"][input_ids]                              # [B, S, Hb] f32
    # time-major flatten (row r = t*B + b), bf16 for the MXU input projection
    emb_flat = jnp.transpose(emb, (1, 0, 2)).reshape(SEQ * B, BERT_HIDDEN).astype(jnp.bfloat16)

    # pack_padded_sequence lengths -> [B, 1] int32 (mask built in-kernel)
    len_col = jnp.sum(attention_mask, axis=1).astype(jnp.int32).reshape(B, 1)

    # images NCHW [B, 5, 3, H, W] -> batch-major flat [B*5, 3*H*W] (matches PyTorch .view)
    img_flat = images.reshape(B * MAX_IMAGES, IMG_FLAT).astype(jnp.bfloat16)

    sent_bf = sentiment.astype(jnp.bfloat16)

    return fused_forward_pallas(emb_flat, len_col, img_flat, sent_bf, params)


# ----------------------- main -----------------------
if __name__ == "__main__":
    key = jax.random.PRNGKey(0)
    k_ids, k_img, k_sent, k_param = jax.random.split(key, 4)

    input_ids = jax.random.randint(k_ids, (B, SEQ), 0, VOCAB, dtype=jnp.int32)
    seq_lengths = jnp.array([5, 8], dtype=jnp.int32)                 # valid lengths
    attention_mask = (jnp.arange(SEQ)[None, :] < seq_lengths[:, None]).astype(jnp.int32)
    images = jax.random.normal(k_img, (B, MAX_IMAGES, IMG_C, IMG_H, IMG_W), jnp.float32)
    sentiment = jax.random.normal(k_sent, (B, SENT_DIM), jnp.float32)

    params = init_params(k_param)

    fwd = jax.jit(multimodal_rumor_detector)
    probs = fwd(input_ids, attention_mask, images, sentiment, params)
    probs = jax.block_until_ready(probs)

    assert probs.shape == (B, NUM_CLASSES)
    assert bool(jnp.all(jnp.isfinite(probs)))
    assert bool(jnp.allclose(jnp.sum(probs, axis=1), 1.0, atol=1e-3))
    print("KERNEL_OK")
</pallas_src>

<mosaic_0001>
module attributes {stable_mosaic.version = 11 : i64} {
  func.func @fused_kernel(%arg0: memref<16x64xbf16, #tpu.memory_space<vmem>>, %arg1: memref<2x1xi32, #tpu.memory_space<vmem>>, %arg2: memref<10x768xbf16, #tpu.memory_space<vmem>>, %arg3: memref<2x4xbf16, #tpu.memory_space<vmem>>, %arg4: memref<64x1024xbf16, #tpu.memory_space<vmem>>, %arg5: memref<128x1024xbf16, #tpu.memory_space<vmem>>, %arg6: memref<768x512xbf16, #tpu.memory_space<any>>, %arg7: memref<512x256xbf16, #tpu.memory_space<any>>, %arg8: memref<256x128xbf16, #tpu.memory_space<vmem>>, %arg9: memref<384x124xbf16, #tpu.memory_space<vmem>>, %arg10: memref<124x128xbf16, #tpu.memory_space<vmem>>, %arg11: memref<4x128xbf16, #tpu.memory_space<vmem>>, %arg12: memref<128x2xbf16, #tpu.memory_space<vmem>>, %arg13: memref<1x2304xf32, #tpu.memory_space<vmem>>, %arg14: memref<2x2xf32, #tpu.memory_space<vmem>>, %arg15: memref<768x512xbf16, #tpu.memory_space<vmem>>, %arg16: memref<512x256xbf16, #tpu.memory_space<vmem>>, %arg17: memref<2x!tpu.dma_semaphore, #tpu.memory_space<semaphore_mem>>) attributes {dimension_semantics = [], scalar_prefetch = 0 : i64, scratch_operands = 3 : i64, tpu.core_type = #tpu.core_type<tc>} {
    %c0_i32 = arith.constant 0 : i32
    %0 = tpu.memref_slice %arg17[%c0_i32] : memref<2x!tpu.dma_semaphore, #tpu.memory_space<semaphore_mem>> -> memref<1x!tpu.dma_semaphore, #tpu.memory_space<semaphore_mem>>
    %1 = tpu.memref_squeeze %0 : memref<1x!tpu.dma_semaphore, #tpu.memory_space<semaphore_mem>> -> memref<!tpu.dma_semaphore, #tpu.memory_space<semaphore_mem>>
    tpu.enqueue_dma source(%arg6 : memref<768x512xbf16, #tpu.memory_space<any>>) target(%arg15 : memref<768x512xbf16, #tpu.memory_space<vmem>>) target_semaphore(%1 : memref<!tpu.dma_semaphore, #tpu.memory_space<semaphore_mem>>)
    %c1_i32 = arith.constant 1 : i32
    %2 = tpu.memref_slice %arg17[%c1_i32] : memref<2x!tpu.dma_semaphore, #tpu.memory_space<semaphore_mem>> -> memref<1x!tpu.dma_semaphore, #tpu.memory_space<semaphore_mem>>
    %3 = tpu.memref_squeeze %2 : memref<1x!tpu.dma_semaphore, #tpu.memory_space<semaphore_mem>> -> memref<!tpu.dma_semaphore, #tpu.memory_space<semaphore_mem>>
    tpu.enqueue_dma source(%arg7 : memref<512x256xbf16, #tpu.memory_space<any>>) target(%arg16 : memref<512x256xbf16, #tpu.memory_space<vmem>>) target_semaphore(%3 : memref<!tpu.dma_semaphore, #tpu.memory_space<semaphore_mem>>)
    %c0 = arith.constant 0 : index
    %c0_0 = arith.constant 0 : index
    %4 = vector.load %arg13[%c0, %c0_0] : memref<1x2304xf32, #tpu.memory_space<vmem>>, vector<1x1024xf32>
    %c0_1 = arith.constant 0 : index
    %c1024 = arith.constant 1024 : index
    %5 = vector.load %arg13[%c0_1, %c1024] : memref<1x2304xf32, #tpu.memory_space<vmem>>, vector<1x512xf32>
    %c0_2 = arith.constant 0 : index
    %c1536 = arith.constant 1536 : index
    %6 = vector.load %arg13[%c0_2, %c1536] : memref<1x2304xf32, #tpu.memory_space<vmem>>, vector<1x256xf32>
    %c0_3 = arith.constant 0 : index
    %c1792 = arith.constant 1792 : index
    %7 = vector.load %arg13[%c0_3, %c1792] : memref<1x2304xf32, #tpu.memory_space<vmem>>, vector<1x128xf32>
    %c0_4 = arith.constant 0 : index
    %c1920 = arith.constant 1920 : index
    %8 = vector.load %arg13[%c0_4, %c1920] : memref<1x2304xf32, #tpu.memory_space<vmem>>, vector<1x124xf32>
    %c0_5 = arith.constant 0 : index
    %c2048 = arith.constant 2048 : index
    %9 = vector.load %arg13[%c0_5, %c2048] : memref<1x2304xf32, #tpu.memory_space<vmem>>, vector<1x128xf32>
    %c0_6 = arith.constant 0 : index
    %c2176 = arith.constant 2176 : index
    %10 = vector.load %arg13[%c0_6, %c2176] : memref<1x2304xf32, #tpu.memory_space<vmem>>, vector<1x2xf32>
    %c0_7 = arith.constant 0 : index
    %c0_8 = arith.constant 0 : index
    %11 = vector.load %arg0[%c0_7, %c0_8] : memref<16x64xbf16, #tpu.memory_space<vmem>>, vector<16x64xbf16>
    %c0_9 = arith.constant 0 : index
    %c0_10 = arith.constant 0 : index
    %12 = vector.load %arg4[%c0_9, %c0_10] : memref<64x1024xbf16, #tpu.memory_space<vmem>>, vector<64x1024xbf16>
    %cst = arith.constant dense<0.000000e+00> : vector<16x1024xf32>
    %13 = tpu.matmul %11, %12, %cst {dimension_numbers = #tpu.dot_dimension_numbers<[1], [0], [0], [1], [0, 0, 1, 1], [], []>} : vector<16x64xbf16>, vector<64x1024xbf16>, vector<16x1024xf32> -> vector<16x1024xf32>
    %14 = vector.broadcast %4 : vector<1x1024xf32> to vector<16x1024xf32>
    %15 = arith.addf %13, %14 : vector<16x1024xf32>
    %c0_11 = arith.constant 0 : index
    %c0_12 = arith.constant 0 : index
    %16 = vector.load %arg1[%c0_11, %c0_12] : memref<2x1xi32, #tpu.memory_space<vmem>>, vector<2x1xi32>
    %17 = vector.shape_cast %16 : vector<2x1xi32> to vector<2x1xi32>
    %18 = vector.broadcast %17 : vector<2x1xi32> to vector<2x128xi32>
    %c0_13 = arith.constant 0 : index
    %c0_14 = arith.constant 0 : index
    %19 = vector.load %arg5[%c0_13, %c0_14] : memref<128x1024xbf16, #tpu.memory_space<vmem>>, vector<128x512xbf16>
    %c0_15 = arith.constant 0 : index
    %c512 = arith.constant 512 : index
    %20 = vector.load %arg5[%c0_15, %c512] : memref<128x1024xbf16, #tpu.memory_space<vmem>>, vector<128x512xbf16>
    %cst_16 = arith.constant 0.000000e+00 : f32
    %21 = vector.broadcast %cst_16 : f32 to vector<2x128xf32>
    %22 = vector.extract_strided_slice %15 {offsets = [0, 0], sizes = [2, 512], strides = [1, 1]} : vector<16x1024xf32> to vector<2x512xf32>
    %23 = vector.extract_strided_slice %15 {offsets = [14, 512], sizes = [2, 512], strides = [1, 1]} : vector<16x1024xf32> to vector<2x512xf32>
    %24 = arith.truncf %21 : vector<2x128xf32> to vector<2x128xbf16>
    %cst_17 = arith.constant dense<0.000000e+00> : vector<2x512xf32>
    %25 = tpu.matmul %24, %19, %cst_17 {dimension_numbers = #tpu.dot_dimension_numbers<[1], [0], [0], [1], [0, 0, 1, 1], [], []>} : vector<2x128xbf16>, vector<128x512xbf16>, vector<2x512xf32> -> vector<2x512xf32>
    %26 = arith.addf %22, %25 : vector<2x512xf32>
    %27 = arith.truncf %21 : vector<2x128xf32> to vector<2x128xbf16>
    %cst_18 = arith.constant dense<0.000000e+00> : vector<2x512xf32>
    %28 = tpu.matmul %27, %20, %cst_18 {dimension_numbers = #tpu.dot_dimension_numbers<[1], [0], [0], [1], [0, 0, 1, 1], [], []>} : vector<2x128xbf16>, vector<128x512xbf16>, vector<2x512xf32> -> vector<2x512xf32>
    %29 = arith.addf %23, %28 : vector<2x512xf32>
    %30 = vector.extract_strided_slice %26 {offsets = [0, 0], sizes = [2, 128], strides = [1, 1]} : vector<2x512xf32> to vector<2x128xf32>
    %31 = arith.negf %30 : vector<2x128xf32>
    %32 = math.exp %31 : vector<2x128xf32>
    %cst_19 = arith.constant 1.000000e+00 : f32
    %33 = vector.broadcast %cst_19 : f32 to vector<2x128xf32>
    %34 = arith.addf %33, %32 : vector<2x128xf32>
    %35 = arith.divf %33, %34 : vector<2x128xf32>
    %36 = vector.extract_strided_slice %26 {offsets = [0, 128], sizes = [2, 128], strides = [1, 1]} : vector<2x512xf32> to vector<2x128xf32>
    %37 = arith.negf %36 : vector<2x128xf32>
    %38 = math.exp %37 : vector<2x128xf32>
    %cst_20 = arith.constant 1.000000e+00 : f32
    %39 = vector.broadcast %cst_20 : f32 to vector<2x128xf32>
    %40 = arith.addf %39, %38 : vector<2x128xf32>
    %41 = arith.divf %39, %40 : vector<2x128xf32>
    %42 = vector.extract_strided_slice %26 {offsets = [0, 256], sizes = [2, 128], strides = [1, 1]} : vector<2x512xf32> to vector<2x128xf32>
    %43 = math.tanh %42 : vector<2x128xf32>
    %44 = vector.extract_strided_slice %26 {offsets = [0, 384], sizes = [2, 128], strides = [1, 1]} : vector<2x512xf32> to vector<2x128xf32>
    %45 = arith.negf %44 : vector<2x128xf32>
    %46 = math.exp %45 : vector<2x128xf32>
    %cst_21 = arith.constant 1.000000e+00 : f32
    %47 = vector.broadcast %cst_21 : f32 to vector<2x128xf32>
    %48 = arith.addf %47, %46 : vector<2x128xf32>
    %49 = arith.divf %47, %48 : vector<2x128xf32>
    %50 = arith.mulf %41, %21 : vector<2x128xf32>
    %51 = arith.mulf %35, %43 : vector<2x128xf32>
    %52 = arith.addf %50, %51 : vector<2x128xf32>
    %53 = math.tanh %52 : vector<2x128xf32>
    %54 = arith.mulf %49, %53 : vector<2x128xf32>
    %55 = vector.extract_strided_slice %29 {offsets = [0, 0], sizes = [2, 128], strides = [1, 1]} : vector<2x512xf32> to vector<2x128xf32>
    %56 = arith.negf %55 : vector<2x128xf32>
    %57 = math.exp %56 : vector<2x128xf32>
    %cst_22 = arith.constant 1.000000e+00 : f32
    %58 = vector.broadcast %cst_22 : f32 to vector<2x128xf32>
    %59 = arith.addf %58, %57 : vector<2x128xf32>
    %60 = arith.divf %58, %59 : vector<2x128xf32>
    %61 = vector.extract_strided_slice %29 {offsets = [0, 128], sizes = [2, 128], strides = [1, 1]} : vector<2x512xf32> to vector<2x128xf32>
    %62 = arith.negf %61 : vector<2x128xf32>
    %63 = math.exp %62 : vector<2x128xf32>
    %cst_23 = arith.constant 1.000000e+00 : f32
    %64 = vector.broadcast %cst_23 : f32 to vector<2x128xf32>
    %65 = arith.addf %64, %63 : vector<2x128xf32>
    %66 = arith.divf %64, %65 : vector<2x128xf32>
    %67 = vector.extract_strided_slice %29 {offsets = [0, 256], sizes = [2, 128], strides = [1, 1]} : vector<2x512xf32> to vector<2x128xf32>
    %68 = math.tanh %67 : vector<2x128xf32>
    %69 = vector.extract_strided_slice %29 {offsets = [0, 384], sizes = [2, 128], strides = [1, 1]} : vector<2x512xf32> to vector<2x128xf32>
    %70 = arith.negf %69 : vector<2x128xf32>
    %71 = math.exp %70 : vector<2x128xf32>
    %cst_24 = arith.constant 1.000000e+00 : f32
    %72 = vector.broadcast %cst_24 : f32 to vector<2x128xf32>
    %73 = arith.addf %72, %71 : vector<2x128xf32>
    %74 = arith.divf %72, %73 : vector<2x128xf32>
    %75 = arith.mulf %66, %21 : vector<2x128xf32>
    %76 = arith.mulf %60, %68 : vector<2x128xf32>
    %77 = arith.addf %75, %76 : vector<2x128xf32>
    %78 = math.tanh %77 : vector<2x128xf32>
    %79 = arith.mulf %74, %78 : vector<2x128xf32>
    %c0_i32_25 = arith.constant 0 : i32
    %80 = vector.broadcast %c0_i32_25 : i32 to vector<2x128xi32>
    %81 = arith.cmpi sgt, %18, %80 : vector<2x128xi32>
    %c7_i32 = arith.constant 7 : i32
    %82 = vector.broadcast %c7_i32 : i32 to vector<2x128xi32>
    %83 = arith.cmpi sgt, %18, %82 : vector<2x128xi32>
    %84 = arith.select %81, %54, %21 : vector<2x128xi1>, vector<2x128xf32>
    %85 = arith.select %81, %52, %21 : vector<2x128xi1>, vector<2x128xf32>
    %86 = arith.select %83, %79, %21 : vector<2x128xi1>, vector<2x128xf32>
    %87 = arith.select %83, %77, %21 : vector<2x128xi1>, vector<2x128xf32>
    %88 = vector.extract_strided_slice %15 {offsets = [2, 0], sizes = [2, 512], strides = [1, 1]} : vector<16x1024xf32> to vector<2x512xf32>
    %89 = vector.extract_strided_slice %15 {offsets = [12, 512], sizes = [2, 512], strides = [1, 1]} : vector<16x1024xf32> to vector<2x512xf32>
    %90 = arith.truncf %84 : vector<2x128xf32> to vector<2x128xbf16>
    %cst_26 = arith.constant dense<0.000000e+00> : vector<2x512xf32>
    %91 = tpu.matmul %90, %19, %cst_26 {dimension_numbers = #tpu.dot_dimension_numbers<[1], [0], [0], [1], [0, 0, 1, 1], [], []>} : vector<2x128xbf16>, vector<128x512xbf16>, vector<2x512xf32> -> vector<2x512xf32>
    %92 = arith.addf %88, %91 : vector<2x512xf32>
    %93 = arith.truncf %86 : vector<2x128xf32> to vector<2x128xbf16>
    %cst_27 = arith.constant dense<0.000000e+00> : vector<2x512xf32>
    %94 = tpu.matmul %93, %20, %cst_27 {dimension_numbers = #tpu.dot_dimension_numbers<[1], [0], [0], [1], [0, 0, 1, 1], [], []>} : vector<2x128xbf16>, vector<128x512xbf16>, vector<2x512xf32> -> vector<2x512xf32>
    %95 = arith.addf %89, %94 : vector<2x512xf32>
    %96 = vector.extract_strided_slice %92 {offsets = [0, 0], sizes = [2, 128], strides = [1, 1]} : vector<2x512xf32> to vector<2x128xf32>
    %97 = arith.negf %96 : vector<2x128xf32>
    %98 = math.exp %97 : vector<2x128xf32>
    %cst_28 = arith.constant 1.000000e+00 : f32
    %99 = vector.broadcast %cst_28 : f32 to vector<2x128xf32>
    %100 = arith.addf %99, %98 : vector<2x128xf32>
    %101 = arith.divf %99, %100 : vector<2x128xf32>
    %102 = vector.extract_strided_slice %92 {offsets = [0, 128], sizes = [2, 128], strides = [1, 1]} : vector<2x512xf32> to vector<2x128xf32>
    %103 = arith.negf %102 : vector<2x128xf32>
    %104 = math.exp %103 : vector<2x128xf32>
    %cst_29 = arith.constant 1.000000e+00 : f32
    %105 = vector.broadcast %cst_29 : f32 to vector<2x128xf32>
    %106 = arith.addf %105, %104 : vector<2x128xf32>
    %107 = arith.divf %105, %106 : vector<2x128xf32>
    %108 = vector.extract_strided_slice %92 {offsets = [0, 256], sizes = [2, 128], strides = [1, 1]} : vector<2x512xf32> to vector<2x128xf32>
    %109 = math.tanh %108 : vector<2x128xf32>
    %110 = vector.extract_strided_slice %92 {offsets = [0, 384], sizes = [2, 128], strides = [1, 1]} : vector<2x512xf32> to vector<2x128xf32>
    %111 = arith.negf %110 : vector<2x128xf32>
    %112 = math.exp %111 : vector<2x128xf32>
    %cst_30 = arith.constant 1.000000e+00 : f32
    %113 = vector.broadcast %cst_30 : f32 to vector<2x128xf32>
    %114 = arith.addf %113, %112 : vector<2x128xf32>
    %115 = arith.divf %113, %114 : vector<2x128xf32>
    %116 = arith.mulf %107, %85 : vector<2x128xf32>
    %117 = arith.mulf %101, %109 : vector<2x128xf32>
    %118 = arith.addf %116, %117 : vector<2x128xf32>
    %119 = math.tanh %118 : vector<2x128xf32>
    %120 = arith.mulf %115, %119 : vector<2x128xf32>
    %121 = vector.extract_strided_slice %95 {offsets = [0, 0], sizes = [2, 128], strides = [1, 1]} : vector<2x512xf32> to vector<2x128xf32>
    %122 = arith.negf %121 : vector<2x128xf32>
    %123 = math.exp %122 : vector<2x128xf32>
    %cst_31 = arith.constant 1.000000e+00 : f32
    %124 = vector.broadcast %cst_31 : f32 to vector<2x128xf32>
    %125 = arith.addf %124, %123 : vector<2x128xf32>
    %126 = arith.divf %124, %125 : vector<2x128xf32>
    %127 = vector.extract_strided_slice %95 {offsets = [0, 128], sizes = [2, 128], strides = [1, 1]} : vector<2x512xf32> to vector<2x128xf32>
    %128 = arith.negf %127 : vector<2x128xf32>
    %129 = math.exp %128 : vector<2x128xf32>
    %cst_32 = arith.constant 1.000000e+00 : f32
    %130 = vector.broadcast %cst_32 : f32 to vector<2x128xf32>
    %131 = arith.addf %130, %129 : vector<2x128xf32>
    %132 = arith.divf %130, %131 : vector<2x128xf32>
    %133 = vector.extract_strided_slice %95 {offsets = [0, 256], sizes = [2, 128], strides = [1, 1]} : vector<2x512xf32> to vector<2x128xf32>
    %134 = math.tanh %133 : vector<2x128xf32>
    %135 = vector.extract_strided_slice %95 {offsets = [0, 384], sizes = [2, 128], strides = [1, 1]} : vector<2x512xf32> to vector<2x128xf32>
    %136 = arith.negf %135 : vector<2x128xf32>
    %137 = math.exp %136 : vector<2x128xf32>
    %cst_33 = arith.constant 1.000000e+00 : f32
    %138 = vector.broadcast %cst_33 : f32 to vector<2x128xf32>
    %139 = arith.addf %138, %137 : vector<2x128xf32>
    %140 = arith.divf %138, %139 : vector<2x128xf32>
    %141 = arith.mulf %132, %87 : vector<2x128xf32>
    %142 = arith.mulf %126, %134 : vector<2x128xf32>
    %143 = arith.addf %141, %142 : vector<2x128xf32>
    %144 = math.tanh %143 : vector<2x128xf32>
    %145 = arith.mulf %140, %144 : vector<2x128xf32>
    %c1_i32_34 = arith.constant 1 : i32
    %146 = vector.broadcast %c1_i32_34 : i32 to vector<2x128xi32>
    %147 = arith.cmpi sgt, %18, %146 : vector<2x128xi32>
    %c6_i32 = arith.constant 6 : i32
    %148 = vector.broadcast %c6_i32 : i32 to vector<2x128xi32>
    %149 = arith.cmpi sgt, %18, %148 : vector<2x128xi32>
    %150 = arith.select %147, %120, %84 : vector<2x128xi1>, vector<2x128xf32>
    %151 = arith.select %147, %118, %85 : vector<2x128xi1>, vector<2x128xf32>
    %152 = arith.select %149, %145, %86 : vector<2x128xi1>, vector<2x128xf32>
    %153 = arith.select %149, %143, %87 : vector<2x128xi1>, vector<2x128xf32>
    %154 = vector.extract_strided_slice %15 {offsets = [4, 0], sizes = [2, 512], strides = [1, 1]} : vector<16x1024xf32> to vector<2x512xf32>
    %155 = vector.extract_strided_slice %15 {offsets = [10, 512], sizes = [2, 512], strides = [1, 1]} : vector<16x1024xf32> to vector<2x512xf32>
    %156 = arith.truncf %150 : vector<2x128xf32> to vector<2x128xbf16>
    %cst_35 = arith.constant dense<0.000000e+00> : vector<2x512xf32>
    %157 = tpu.matmul %156, %19, %cst_35 {dimension_numbers = #tpu.dot_dimension_numbers<[1], [0], [0], [1], [0, 0, 1, 1], [], []>} : vector<2x128xbf16>, vector<128x512xbf16>, vector<2x512xf32> -> vector<2x512xf32>
    %158 = arith.addf %154, %157 : vector<2x512xf32>
    %159 = arith.truncf %152 : vector<2x128xf32> to vector<2x128xbf16>
    %cst_36 = arith.constant dense<0.000000e+00> : vector<2x512xf32>
    %160 = tpu.matmul %159, %20, %cst_36 {dimension_numbers = #tpu.dot_dimension_numbers<[1], [0], [0], [1], [0, 0, 1, 1], [], []>} : vector<2x128xbf16>, vector<128x512xbf16>, vector<2x512xf32> -> vector<2x512xf32>
    %161 = arith.addf %155, %160 : vector<2x512xf32>
    %162 = vector.extract_strided_slice %158 {offsets = [0, 0], sizes = [2, 128], strides = [1, 1]} : vector<2x512xf32> to vector<2x128xf32>
    %163 = arith.negf %162 : vector<2x128xf32>
    %164 = math.exp %163 : vector<2x128xf32>
    %cst_37 = arith.constant 1.000000e+00 : f32
    %165 = vector.broadcast %cst_37 : f32 to vector<2x128xf32>
    %166 = arith.addf %165, %164 : vector<2x128xf32>
    %167 = arith.divf %165, %166 : vector<2x128xf32>
    %168 = vector.extract_strided_slice %158 {offsets = [0, 128], sizes = [2, 128], strides = [1, 1]} : vector<2x512xf32> to vector<2x128xf32>
    %169 = arith.negf %168 : vector<2x128xf32>
    %170 = math.exp %169 : vector<2x128xf32>
    %cst_38 = arith.constant 1.000000e+00 : f32
    %171 = vector.broadcast %cst_38 : f32 to vector<2x128xf32>
    %172 = arith.addf %171, %170 : vector<2x128xf32>
    %173 = arith.divf %171, %172 : vector<2x128xf32>
    %174 = vector.extract_strided_slice %158 {offsets = [0, 256], sizes = [2, 128], strides = [1, 1]} : vector<2x512xf32> to vector<2x128xf32>
    %175 = math.tanh %174 : vector<2x128xf32>
    %176 = vector.extract_strided_slice %158 {offsets = [0, 384], sizes = [2, 128], strides = [1, 1]} : vector<2x512xf32> to vector<2x128xf32>
    %177 = arith.negf %176 : vector<2x128xf32>
    %178 = math.exp %177 : vector<2x128xf32>
    %cst_39 = arith.constant 1.000000e+00 : f32
    %179 = vector.broadcast %cst_39 : f32 to vector<2x128xf32>
    %180 = arith.addf %179, %178 : vector<2x128xf32>
    %181 = arith.divf %179, %180 : vector<2x128xf32>
    %182 = arith.mulf %173, %151 : vector<2x128xf32>
    %183 = arith.mulf %167, %175 : vector<2x128xf32>
    %184 = arith.addf %182, %183 : vector<2x128xf32>
    %185 = math.tanh %184 : vector<2x128xf32>
    %186 = arith.mulf %181, %185 : vector<2x128xf32>
    %187 = vector.extract_strided_slice %161 {offsets = [0, 0], sizes = [2, 128], strides = [1, 1]} : vector<2x512xf32> to vector<2x128xf32>
    %188 = arith.negf %187 : vector<2x128xf32>
    %189 = math.exp %188 : vector<2x128xf32>
    %cst_40 = arith.constant 1.000000e+00 : f32
    %190 = vector.broadcast %cst_40 : f32 to vector<2x128xf32>
    %191 = arith.addf %190, %189 : vector<2x128xf32>
    %192 = arith.divf %190, %191 : vector<2x128xf32>
    %193 = vector.extract_strided_slice %161 {offsets = [0, 128], sizes = [2, 128], strides = [1, 1]} : vector<2x512xf32> to vector<2x128xf32>
    %194 = arith.negf %193 : vector<2x128xf32>
    %195 = math.exp %194 : vector<2x128xf32>
    %cst_41 = arith.constant 1.000000e+00 : f32
    %196 = vector.broadcast %cst_41 : f32 to vector<2x128xf32>
    %197 = arith.addf %196, %195 : vector<2x128xf32>
    %198 = arith.divf %196, %197 : vector<2x128xf32>
    %199 = vector.extract_strided_slice %161 {offsets = [0, 256], sizes = [2, 128], strides = [1, 1]} : vector<2x512xf32> to vector<2x128xf32>
    %200 = math.tanh %199 : vector<2x128xf32>
    %201 = vector.extract_strided_slice %161 {offsets = [0, 384], sizes = [2, 128], strides = [1, 1]} : vector<2x512xf32> to vector<2x128xf32>
    %202 = arith.negf %201 : vector<2x128xf32>
    %203 = math.exp %202 : vector<2x128xf32>
    %cst_42 = arith.constant 1.000000e+00 : f32
    %204 = vector.broadcast %cst_42 : f32 to vector<2x128xf32>
    %205 = arith.addf %204, %203 : vector<2x128xf32>
    %206 = arith.divf %204, %205 : vector<2x128xf32>
    %207 = arith.mulf %198, %153 : vector<2x128xf32>
    %208 = arith.mulf %192, %200 : vector<2x128xf32>
    %209 = arith.addf %207, %208 : vector<2x128xf32>
    %210 = math.tanh %209 : vector<2x128xf32>
    %211 = arith.mulf %206, %210 : vector<2x128xf32>
    %c2_i32 = arith.constant 2 : i32
    %212 = vector.broadcast %c2_i32 : i32 to vector<2x128xi32>
    %213 = arith.cmpi sgt, %18, %212 : vector<2x128xi32>
    %c5_i32 = arith.constant 5 : i32
    %214 = vector.broadcast %c5_i32 : i32 to vector<2x128xi32>
    %215 = arith.cmpi sgt, %18, %214 : vector<2x128xi32>
    %216 = arith.select %213, %186, %150 : vector<2x128xi1>, vector<2x128xf32>
    %217 = arith.select %213, %184, %151 : vector<2x128xi1>, vector<2x128xf32>
    %218 = arith.select %215, %211, %152 : vector<2x128xi1>, vector<2x128xf32>
    %219 = arith.select %215, %209, %153 : vector<2x128xi1>, vector<2x128xf32>
    %220 = vector.extract_strided_slice %15 {offsets = [6, 0], sizes = [2, 512], strides = [1, 1]} : vector<16x1024xf32> to vector<2x512xf32>
    %221 = vector.extract_strided_slice %15 {offsets = [8, 512], sizes = [2, 512], strides = [1, 1]} : vector<16x1024xf32> to vector<2x512xf32>
    %222 = arith.truncf %216 : vector<2x128xf32> to vector<2x128xbf16>
    %cst_43 = arith.constant dense<0.000000e+00> : vector<2x512xf32>
    %223 = tpu.matmul %222, %19, %cst_43 {dimension_numbers = #tpu.dot_dimension_numbers<[1], [0], [0], [1], [0, 0, 1, 1], [], []>} : vector<2x128xbf16>, vector<128x512xbf16>, vector<2x512xf32> -> vector<2x512xf32>
    %224 = arith.addf %220, %223 : vector<2x512xf32>
    %225 = arith.truncf %218 : vector<2x128xf32> to vector<2x128xbf16>
    %cst_44 = arith.constant dense<0.000000e+00> : vector<2x512xf32>
    %226 = tpu.matmul %225, %20, %cst_44 {dimension_numbers = #tpu.dot_dimension_numbers<[1], [0], [0], [1], [0, 0, 1, 1], [], []>} : vector<2x128xbf16>, vector<128x512xbf16>, vector<2x512xf32> -> vector<2x512xf32>
    %227 = arith.addf %221, %226 : vector<2x512xf32>
    %228 = vector.extract_strided_slice %224 {offsets = [0, 0], sizes = [2, 128], strides = [1, 1]} : vector<2x512xf32> to vector<2x128xf32>
    %229 = arith.negf %228 : vector<2x128xf32>
    %230 = math.exp %229 : vector<2x128xf32>
    %cst_45 = arith.constant 1.000000e+00 : f32
    %231 = vector.broadcast %cst_45 : f32 to vector<2x128xf32>
    %232 = arith.addf %231, %230 : vector<2x128xf32>
    %233 = arith.divf %231, %232 : vector<2x128xf32>
    %234 = vector.extract_strided_slice %224 {offsets = [0, 128], sizes = [2, 128], strides = [1, 1]} : vector<2x512xf32> to vector<2x128xf32>
    %235 = arith.negf %234 : vector<2x128xf32>
    %236 = math.exp %235 : vector<2x128xf32>
    %cst_46 = arith.constant 1.000000e+00 : f32
    %237 = vector.broadcast %cst_46 : f32 to vector<2x128xf32>
    %238 = arith.addf %237, %236 : vector<2x128xf32>
    %239 = arith.divf %237, %238 : vector<2x128xf32>
    %240 = vector.extract_strided_slice %224 {offsets = [0, 256], sizes = [2, 128], strides = [1, 1]} : vector<2x512xf32> to vector<2x128xf32>
    %241 = math.tanh %240 : vector<2x128xf32>
    %242 = vector.extract_strided_slice %224 {offsets = [0, 384], sizes = [2, 128], strides = [1, 1]} : vector<2x512xf32> to vector<2x128xf32>
    %243 = arith.negf %242 : vector<2x128xf32>
    %244 = math.exp %243 : vector<2x128xf32>
    %cst_47 = arith.constant 1.000000e+00 : f32
    %245 = vector.broadcast %cst_47 : f32 to vector<2x128xf32>
    %246 = arith.addf %245, %244 : vector<2x128xf32>
    %247 = arith.divf %245, %246 : vector<2x128xf32>
    %248 = arith.mulf %239, %217 : vector<2x128xf32>
    %249 = arith.mulf %233, %241 : vector<2x128xf32>
    %250 = arith.addf %248, %249 : vector<2x128xf32>
    %251 = math.tanh %250 : vector<2x128xf32>
    %252 = arith.mulf %247, %251 : vector<2x128xf32>
    %253 = vector.extract_strided_slice %227 {offsets = [0, 0], sizes = [2, 128], strides = [1, 1]} : vector<2x512xf32> to vector<2x128xf32>
    %254 = arith.negf %253 : vector<2x128xf32>
    %255 = math.exp %254 : vector<2x128xf32>
    %cst_48 = arith.constant 1.000000e+00 : f32
    %256 = vector.broadcast %cst_48 : f32 to vector<2x128xf32>
    %257 = arith.addf %256, %255 : vector<2x128xf32>
    %258 = arith.divf %256, %257 : vector<2x128xf32>
    %259 = vector.extract_strided_slice %227 {offsets = [0, 128], sizes = [2, 128], strides = [1, 1]} : vector<2x512xf32> to vector<2x128xf32>
    %260 = arith.negf %259 : vector<2x128xf32>
    %261 = math.exp %260 : vector<2x128xf32>
    %cst_49 = arith.constant 1.000000e+00 : f32
    %262 = vector.broadcast %cst_49 : f32 to vector<2x128xf32>
    %263 = arith.addf %262, %261 : vector<2x128xf32>
    %264 = arith.divf %262, %263 : vector<2x128xf32>
    %265 = vector.extract_strided_slice %227 {offsets = [0, 256], sizes = [2, 128], strides = [1, 1]} : vector<2x512xf32> to vector<2x128xf32>
    %266 = math.tanh %265 : vector<2x128xf32>
    %267 = vector.extract_strided_slice %227 {offsets = [0, 384], sizes = [2, 128], strides = [1, 1]} : vector<2x512xf32> to vector<2x128xf32>
    %268 = arith.negf %267 : vector<2x128xf32>
    %269 = math.exp %268 : vector<2x128xf32>
    %cst_50 = arith.constant 1.000000e+00 : f32
    %270 = vector.broadcast %cst_50 : f32 to vector<2x128xf32>
    %271 = arith.addf %270, %269 : vector<2x128xf32>
    %272 = arith.divf %270, %271 : vector<2x128xf32>
    %273 = arith.mulf %264, %219 : vector<2x128xf32>
    %274 = arith.mulf %258, %266 : vector<2x128xf32>
    %275 = arith.addf %273, %274 : vector<2x128xf32>
    %276 = math.tanh %275 : vector<2x128xf32>
    %277 = arith.mulf %272, %276 : vector<2x128xf32>
    %c3_i32 = arith.constant 3 : i32
    %278 = vector.broadcast %c3_i32 : i32 to vector<2x128xi32>
    %279 = arith.cmpi sgt, %18, %278 : vector<2x128xi32>
    %c4_i32 = arith.constant 4 : i32
    %280 = vector.broadcast %c4_i32 : i32 to vector<2x128xi32>
    %281 = arith.cmpi sgt, %18, %280 : vector<2x128xi32>
    %282 = arith.select %279, %252, %216 : vector<2x128xi1>, vector<2x128xf32>
    %283 = arith.select %279, %250, %217 : vector<2x128xi1>, vector<2x128xf32>
    %284 = arith.select %281, %277, %218 : vector<2x128xi1>, vector<2x128xf32>
    %285 = arith.select %281, %275, %219 : vector<2x128xi1>, vector<2x128xf32>
    %286 = vector.extract_strided_slice %15 {offsets = [8, 0], sizes = [2, 512], strides = [1, 1]} : vector<16x1024xf32> to vector<2x512xf32>
    %287 = vector.extract_strided_slice %15 {offsets = [6, 512], sizes = [2, 512], strides = [1, 1]} : vector<16x1024xf32> to vector<2x512xf32>
    %288 = arith.truncf %282 : vector<2x128xf32> to vector<2x128xbf16>
    %cst_51 = arith.constant dense<0.000000e+00> : vector<2x512xf32>
    %289 = tpu.matmul %288, %19, %cst_51 {dimension_numbers = #tpu.dot_dimension_numbers<[1], [0], [0], [1], [0, 0, 1, 1], [], []>} : vector<2x128xbf16>, vector<128x512xbf16>, vector<2x512xf32> -> vector<2x512xf32>
    %290 = arith.addf %286, %289 : vector<2x512xf32>
    %291 = arith.truncf %284 : vector<2x128xf32> to vector<2x128xbf16>
    %cst_52 = arith.constant dense<0.000000e+00> : vector<2x512xf32>
    %292 = tpu.matmul %291, %20, %cst_52 {dimension_numbers = #tpu.dot_dimension_numbers<[1], [0], [0], [1], [0, 0, 1, 1], [], []>} : vector<2x128xbf16>, vector<128x512xbf16>, vector<2x512xf32> -> vector<2x512xf32>
    %293 = arith.addf %287, %292 : vector<2x512xf32>
    %294 = vector.extract_strided_slice %290 {offsets = [0, 0], sizes = [2, 128], strides = [1, 1]} : vector<2x512xf32> to vector<2x128xf32>
    %295 = arith.negf %294 : vector<2x128xf32>
    %296 = math.exp %295 : vector<2x128xf32>
    %cst_53 = arith.constant 1.000000e+00 : f32
    %297 = vector.broadcast %cst_53 : f32 to vector<2x128xf32>
    %298 = arith.addf %297, %296 : vector<2x128xf32>
    %299 = arith.divf %297, %298 : vector<2x128xf32>
    %300 = vector.extract_strided_slice %290 {offsets = [0, 128], sizes = [2, 128], strides = [1, 1]} : vector<2x512xf32> to vector<2x128xf32>
    %301 = arith.negf %300 : vector<2x128xf32>
    %302 = math.exp %301 : vector<2x128xf32>
    %cst_54 = arith.constant 1.000000e+00 : f32
    %303 = vector.broadcast %cst_54 : f32 to vector<2x128xf32>
    %304 = arith.addf %303, %302 : vector<2x128xf32>
    %305 = arith.divf %303, %304 : vector<2x128xf32>
    %306 = vector.extract_strided_slice %290 {offsets = [0, 256], sizes = [2, 128], strides = [1, 1]} : vector<2x512xf32> to vector<2x128xf32>
    %307 = math.tanh %306 : vector<2x128xf32>
    %308 = vector.extract_strided_slice %290 {offsets = [0, 384], sizes = [2, 128], strides = [1, 1]} : vector<2x512xf32> to vector<2x128xf32>
    %309 = arith.negf %308 : vector<2x128xf32>
    %310 = math.exp %309 : vector<2x128xf32>
    %cst_55 = arith.constant 1.000000e+00 : f32
    %311 = vector.broadcast %cst_55 : f32 to vector<2x128xf32>
    %312 = arith.addf %311, %310 : vector<2x128xf32>
    %313 = arith.divf %311, %312 : vector<2x128xf32>
    %314 = arith.mulf %305, %283 : vector<2x128xf32>
    %315 = arith.mulf %299, %307 : vector<2x128xf32>
    %316 = arith.addf %314, %315 : vector<2x128xf32>
    %317 = math.tanh %316 : vector<2x128xf32>
    %318 = arith.mulf %313, %317 : vector<2x128xf32>
    %319 = vector.extract_strided_slice %293 {offsets = [0, 0], sizes = [2, 128], strides = [1, 1]} : vector<2x512xf32> to vector<2x128xf32>
    %320 = arith.negf %319 : vector<2x128xf32>
    %321 = math.exp %320 : vector<2x128xf32>
    %cst_56 = arith.constant 1.000000e+00 : f32
    %322 = vector.broadcast %cst_56 : f32 to vector<2x128xf32>
    %323 = arith.addf %322, %321 : vector<2x128xf32>
    %324 = arith.divf %322, %323 : vector<2x128xf32>
    %325 = vector.extract_strided_slice %293 {offsets = [0, 128], sizes = [2, 128], strides = [1, 1]} : vector<2x512xf32> to vector<2x128xf32>
    %326 = arith.negf %325 : vector<2x128xf32>
    %327 = math.exp %326 : vector<2x128xf32>
    %cst_57 = arith.constant 1.000000e+00 : f32
    %328 = vector.broadcast %cst_57 : f32 to vector<2x128xf32>
    %329 = arith.addf %328, %327 : vector<2x128xf32>
    %330 = arith.divf %328, %329 : vector<2x128xf32>
    %331 = vector.extract_strided_slice %293 {offsets = [0, 256], sizes = [2, 128], strides = [1, 1]} : vector<2x512xf32> to vector<2x128xf32>
    %332 = math.tanh %331 : vector<2x128xf32>
    %333 = vector.extract_strided_slice %293 {offsets = [0, 384], sizes = [2, 128], strides = [1, 1]} : vector<2x512xf32> to vector<2x128xf32>
    %334 = arith.negf %333 : vector<2x128xf32>
    %335 = math.exp %334 : vector<2x128xf32>
    %cst_58 = arith.constant 1.000000e+00 : f32
    %336 = vector.broadcast %cst_58 : f32 to vector<2x128xf32>
    %337 = arith.addf %336, %335 : vector<2x128xf32>
    %338 = arith.divf %336, %337 : vector<2x128xf32>
    %339 = arith.mulf %330, %285 : vector<2x128xf32>
    %340 = arith.mulf %324, %332 : vector<2x128xf32>
    %341 = arith.addf %339, %340 : vector<2x128xf32>
    %342 = math.tanh %341 : vector<2x128xf32>
    %343 = arith.mulf %338, %342 : vector<2x128xf32>
    %c4_i32_59 = arith.constant 4 : i32
    %344 = vector.broadcast %c4_i32_59 : i32 to vector<2x128xi32>
    %345 = arith.cmpi sgt, %18, %344 : vector<2x128xi32>
    %c3_i32_60 = arith.constant 3 : i32
    %346 = vector.broadcast %c3_i32_60 : i32 to vector<2x128xi32>
    %347 = arith.cmpi sgt, %18, %346 : vector<2x128xi32>
    %348 = arith.select %345, %318, %282 : vector<2x128xi1>, vector<2x128xf32>
    %349 = arith.select %345, %316, %283 : vector<2x128xi1>, vector<2x128xf32>
    %350 = arith.select %347, %343, %284 : vector<2x128xi1>, vector<2x128xf32>
    %351 = arith.select %347, %341, %285 : vector<2x128xi1>, vector<2x128xf32>
    %352 = vector.extract_strided_slice %15 {offsets = [10, 0], sizes = [2, 512], strides = [1, 1]} : vector<16x1024xf32> to vector<2x512xf32>
    %353 = vector.extract_strided_slice %15 {offsets = [4, 512], sizes = [2, 512], strides = [1, 1]} : vector<16x1024xf32> to vector<2x512xf32>
    %354 = arith.truncf %348 : vector<2x128xf32> to vector<2x128xbf16>
    %cst_61 = arith.constant dense<0.000000e+00> : vector<2x512xf32>
    %355 = tpu.matmul %354, %19, %cst_61 {dimension_numbers = #tpu.dot_dimension_numbers<[1], [0], [0], [1], [0, 0, 1, 1], [], []>} : vector<2x128xbf16>, vector<128x512xbf16>, vector<2x512xf32> -> vector<2x512xf32>
    %356 = arith.addf %352, %355 : vector<2x512xf32>
    %357 = arith.truncf %350 : vector<2x128xf32> to vector<2x128xbf16>
    %cst_62 = arith.constant dense<0.000000e+00> : vector<2x512xf32>
    %358 = tpu.matmul %357, %20, %cst_62 {dimension_numbers = #tpu.dot_dimension_numbers<[1], [0], [0], [1], [0, 0, 1, 1], [], []>} : vector<2x128xbf16>, vector<128x512xbf16>, vector<2x512xf32> -> vector<2x512xf32>
    %359 = arith.addf %353, %358 : vector<2x512xf32>
    %360 = vector.extract_strided_slice %356 {offsets = [0, 0], sizes = [2, 128], strides = [1, 1]} : vector<2x512xf32> to vector<2x128xf32>
    %361 = arith.negf %360 : vector<2x128xf32>
    %362 = math.exp %361 : vector<2x128xf32>
    %cst_63 = arith.constant 1.000000e+00 : f32
    %363 = vector.broadcast %cst_63 : f32 to vector<2x128xf32>
    %364 = arith.addf %363, %362 : vector<2x128xf32>
    %365 = arith.divf %363, %364 : vector<2x128xf32>
    %366 = vector.extract_strided_slice %356 {offsets = [0, 128], sizes = [2, 128], strides = [1, 1]} : vector<2x512xf32> to vector<2x128xf32>
    %367 = arith.negf %366 : vector<2x128xf32>
    %368 = math.exp %367 : vector<2x128xf32>
    %cst_64 = arith.constant 1.000000e+00 : f32
    %369 = vector.broadcast %cst_64 : f32 to vector<2x128xf32>
    %370 = arith.addf %369, %368 : vector<2x128xf32>
    %371 = arith.divf %369, %370 : vector<2x128xf32>
    %372 = vector.extract_strided_slice %356 {offsets = [0, 256], sizes = [2, 128], strides = [1, 1]} : vector<2x512xf32> to vector<2x128xf32>
    %373 = math.tanh %372 : vector<2x128xf32>
    %374 = vector.extract_strided_slice %356 {offsets = [0, 384], sizes = [2, 128], strides = [1, 1]} : vector<2x512xf32> to vector<2x128xf32>
    %375 = arith.negf %374 : vector<2x128xf32>
    %376 = math.exp %375 : vector<2x128xf32>
    %cst_65 = arith.constant 1.000000e+00 : f32
    %377 = vector.broadcast %cst_65 : f32 to vector<2x128xf32>
    %378 = arith.addf %377, %376 : vector<2x128xf32>
    %379 = arith.divf %377, %378 : vector<2x128xf32>
    %380 = arith.mulf %371, %349 : vector<2x128xf32>
    %381 = arith.mulf %365, %373 : vector<2x128xf32>
    %382 = arith.addf %380, %381 : vector<2x128xf32>
    %383 = math.tanh %382 : vector<2x128xf32>
    %384 = arith.mulf %379, %383 : vector<2x128xf32>
    %385 = vector.extract_strided_slice %359 {offsets = [0, 0], sizes = [2, 128], strides = [1, 1]} : vector<2x512xf32> to vector<2x128xf32>
    %386 = arith.negf %385 : vector<2x128xf32>
    %387 = math.exp %386 : vector<2x128xf32>
    %cst_66 = arith.constant 1.000000e+00 : f32
    %388 = vector.broadcast %cst_66 : f32 to vector<2x128xf32>
    %389 = arith.addf %388, %387 : vector<2x128xf32>
    %390 = arith.divf %388, %389 : vector<2x128xf32>
    %391 = vector.extract_strided_slice %359 {offsets = [0, 128], sizes = [2, 128], strides = [1, 1]} : vector<2x512xf32> to vector<2x128xf32>
    %392 = arith.negf %391 : vector<2x128xf32>
    %393 = math.exp %392 : vector<2x128xf32>
    %cst_67 = arith.constant 1.000000e+00 : f32
    %394 = vector.broadcast %cst_67 : f32 to vector<2x128xf32>
    %395 = arith.addf %394, %393 : vector<2x128xf32>
    %396 = arith.divf %394, %395 : vector<2x128xf32>
    %397 = vector.extract_strided_slice %359 {offsets = [0, 256], sizes = [2, 128], strides = [1, 1]} : vector<2x512xf32> to vector<2x128xf32>
    %398 = math.tanh %397 : vector<2x128xf32>
    %399 = vector.extract_strided_slice %359 {offsets = [0, 384], sizes = [2, 128], strides = [1, 1]} : vector<2x512xf32> to vector<2x128xf32>
    %400 = arith.negf %399 : vector<2x128xf32>
    %401 = math.exp %400 : vector<2x128xf32>
    %cst_68 = arith.constant 1.000000e+00 : f32
    %402 = vector.broadcast %cst_68 : f32 to vector<2x128xf32>
    %403 = arith.addf %402, %401 : vector<2x128xf32>
    %404 = arith.divf %402, %403 : vector<2x128xf32>
    %405 = arith.mulf %396, %351 : vector<2x128xf32>
    %406 = arith.mulf %390, %398 : vector<2x128xf32>
    %407 = arith.addf %405, %406 : vector<2x128xf32>
    %408 = math.tanh %407 : vector<2x128xf32>
    %409 = arith.mulf %404, %408 : vector<2x128xf32>
    %c5_i32_69 = arith.constant 5 : i32
    %410 = vector.broadcast %c5_i32_69 : i32 to vector<2x128xi32>
    %411 = arith.cmpi sgt, %18, %410 : vector<2x128xi32>
    %c2_i32_70 = arith.constant 2 : i32
    %412 = vector.broadcast %c2_i32_70 : i32 to vector<2x128xi32>
    %413 = arith.cmpi sgt, %18, %412 : vector<2x128xi32>
    %414 = arith.select %411, %384, %348 : vector<2x128xi1>, vector<2x128xf32>
    %415 = arith.select %411, %382, %349 : vector<2x128xi1>, vector<2x128xf32>
    %416 = arith.select %413, %409, %350 : vector<2x128xi1>, vector<2x128xf32>
    %417 = arith.select %413, %407, %351 : vector<2x128xi1>, vector<2x128xf32>
    %418 = vector.extract_strided_slice %15 {offsets = [12, 0], sizes = [2, 512], strides = [1, 1]} : vector<16x1024xf32> to vector<2x512xf32>
    %419 = vector.extract_strided_slice %15 {offsets = [2, 512], sizes = [2, 512], strides = [1, 1]} : vector<16x1024xf32> to vector<2x512xf32>
    %420 = arith.truncf %414 : vector<2x128xf32> to vector<2x128xbf16>
    %cst_71 = arith.constant dense<0.000000e+00> : vector<2x512xf32>
    %421 = tpu.matmul %420, %19, %cst_71 {dimension_numbers = #tpu.dot_dimension_numbers<[1], [0], [0], [1], [0, 0, 1, 1], [], []>} : vector<2x128xbf16>, vector<128x512xbf16>, vector<2x512xf32> -> vector<2x512xf32>
    %422 = arith.addf %418, %421 : vector<2x512xf32>
    %423 = arith.truncf %416 : vector<2x128xf32> to vector<2x128xbf16>
    %cst_72 = arith.constant dense<0.000000e+00> : vector<2x512xf32>
    %424 = tpu.matmul %423, %20, %cst_72 {dimension_numbers = #tpu.dot_dimension_numbers<[1], [0], [0], [1], [0, 0, 1, 1], [], []>} : vector<2x128xbf16>, vector<128x512xbf16>, vector<2x512xf32> -> vector<2x512xf32>
    %425 = arith.addf %419, %424 : vector<2x512xf32>
    %426 = vector.extract_strided_slice %422 {offsets = [0, 0], sizes = [2, 128], strides = [1, 1]} : vector<2x512xf32> to vector<2x128xf32>
    %427 = arith.negf %426 : vector<2x128xf32>
    %428 = math.exp %427 : vector<2x128xf32>
    %cst_73 = arith.constant 1.000000e+00 : f32
    %429 = vector.broadcast %cst_73 : f32 to vector<2x128xf32>
    %430 = arith.addf %429, %428 : vector<2x128xf32>
    %431 = arith.divf %429, %430 : vector<2x128xf32>
    %432 = vector.extract_strided_slice %422 {offsets = [0, 128], sizes = [2, 128], strides = [1, 1]} : vector<2x512xf32> to vector<2x128xf32>
    %433 = arith.negf %432 : vector<2x128xf32>
    %434 = math.exp %433 : vector<2x128xf32>
    %cst_74 = arith.constant 1.000000e+00 : f32
    %435 = vector.broadcast %cst_74 : f32 to vector<2x128xf32>
    %436 = arith.addf %435, %434 : vector<2x128xf32>
    %437 = arith.divf %435, %436 : vector<2x128xf32>
    %438 = vector.extract_strided_slice %422 {offsets = [0, 256], sizes = [2, 128], strides = [1, 1]} : vector<2x512xf32> to vector<2x128xf32>
    %439 = math.tanh %438 : vector<2x128xf32>
    %440 = vector.extract_strided_slice %422 {offsets = [0, 384], sizes = [2, 128], strides = [1, 1]} : vector<2x512xf32> to vector<2x128xf32>
    %441 = arith.negf %440 : vector<2x128xf32>
    %442 = math.exp %441 : vector<2x128xf32>
    %cst_75 = arith.constant 1.000000e+00 : f32
    %443 = vector.broadcast %cst_75 : f32 to vector<2x128xf32>
    %444 = arith.addf %443, %442 : vector<2x128xf32>
    %445 = arith.divf %443, %444 : vector<2x128xf32>
    %446 = arith.mulf %437, %415 : vector<2x128xf32>
    %447 = arith.mulf %431, %439 : vector<2x128xf32>
    %448 = arith.addf %446, %447 : vector<2x128xf32>
    %449 = math.tanh %448 : vector<2x128xf32>
    %450 = arith.mulf %445, %449 : vector<2x128xf32>
    %451 = vector.extract_strided_slice %425 {offsets = [0, 0], sizes = [2, 128], strides = [1, 1]} : vector<2x512xf32> to vector<2x128xf32>
    %452 = arith.negf %451 : vector<2x128xf32>
    %453 = math.exp %452 : vector<2x128xf32>
    %cst_76 = arith.constant 1.000000e+00 : f32
    %454 = vector.broadcast %cst_76 : f32 to vector<2x128xf32>
    %455 = arith.addf %454, %453 : vector<2x128xf32>
    %456 = arith.divf %454, %455 : vector<2x128xf32>
    %457 = vector.extract_strided_slice %425 {offsets = [0, 128], sizes = [2, 128], strides = [1, 1]} : vector<2x512xf32> to vector<2x128xf32>
    %458 = arith.negf %457 : vector<2x128xf32>
    %459 = math.exp %458 : vector<2x128xf32>
    %cst_77 = arith.constant 1.000000e+00 : f32
    %460 = vector.broadcast %cst_77 : f32 to vector<2x128xf32>
    %461 = arith.addf %460, %459 : vector<2x128xf32>
    %462 = arith.divf %460, %461 : vector<2x128xf32>
    %463 = vector.extract_strided_slice %425 {offsets = [0, 256], sizes = [2, 128], strides = [1, 1]} : vector<2x512xf32> to vector<2x128xf32>
    %464 = math.tanh %463 : vector<2x128xf32>
    %465 = vector.extract_strided_slice %425 {offsets = [0, 384], sizes = [2, 128], strides = [1, 1]} : vector<2x512xf32> to vector<2x128xf32>
    %466 = arith.negf %465 : vector<2x128xf32>
    %467 = math.exp %466 : vector<2x128xf32>
    %cst_78 = arith.constant 1.000000e+00 : f32
    %468 = vector.broadcast %cst_78 : f32 to vector<2x128xf32>
    %469 = arith.addf %468, %467 : vector<2x128xf32>
    %470 = arith.divf %468, %469 : vector<2x128xf32>
    %471 = arith.mulf %462, %417 : vector<2x128xf32>
    %472 = arith.mulf %456, %464 : vector<2x128xf32>
    %473 = arith.addf %471, %472 : vector<2x128xf32>
    %474 = math.tanh %473 : vector<2x128xf32>
    %475 = arith.mulf %470, %474 : vector<2x128xf32>
    %c6_i32_79 = arith.constant 6 : i32
    %476 = vector.broadcast %c6_i32_79 : i32 to vector<2x128xi32>
    %477 = arith.cmpi sgt, %18, %476 : vector<2x128xi32>
    %c1_i32_80 = arith.constant 1 : i32
    %478 = vector.broadcast %c1_i32_80 : i32 to vector<2x128xi32>
    %479 = arith.cmpi sgt, %18, %478 : vector<2x128xi32>
    %480 = arith.select %477, %450, %414 : vector<2x128xi1>, vector<2x128xf32>
    %481 = arith.select %477, %448, %415 : vector<2x128xi1>, vector<2x128xf32>
    %482 = arith.select %479, %475, %416 : vector<2x128xi1>, vector<2x128xf32>
    %483 = arith.select %479, %473, %417 : vector<2x128xi1>, vector<2x128xf32>
    %484 = vector.extract_strided_slice %15 {offsets = [14, 0], sizes = [2, 512], strides = [1, 1]} : vector<16x1024xf32> to vector<2x512xf32>
    %485 = vector.extract_strided_slice %15 {offsets = [0, 512], sizes = [2, 512], strides = [1, 1]} : vector<16x1024xf32> to vector<2x512xf32>
    %486 = arith.truncf %480 : vector<2x128xf32> to vector<2x128xbf16>
    %cst_81 = arith.constant dense<0.000000e+00> : vector<2x512xf32>
    %487 = tpu.matmul %486, %19, %cst_81 {dimension_numbers = #tpu.dot_dimension_numbers<[1], [0], [0], [1], [0, 0, 1, 1], [], []>} : vector<2x128xbf16>, vector<128x512xbf16>, vector<2x512xf32> -> vector<2x512xf32>
    %488 = arith.addf %484, %487 : vector<2x512xf32>
    %489 = arith.truncf %482 : vector<2x128xf32> to vector<2x128xbf16>
    %cst_82 = arith.constant dense<0.000000e+00> : vector<2x512xf32>
    %490 = tpu.matmul %489, %20, %cst_82 {dimension_numbers = #tpu.dot_dimension_numbers<[1], [0], [0], [1], [0, 0, 1, 1], [], []>} : vector<2x128xbf16>, vector<128x512xbf16>, vector<2x512xf32> -> vector<2x512xf32>
    %491 = arith.addf %485, %490 : vector<2x512xf32>
    %492 = vector.extract_strided_slice %488 {offsets = [0, 0], sizes = [2, 128], strides = [1, 1]} : vector<2x512xf32> to vector<2x128xf32>
    %493 = arith.negf %492 : vector<2x128xf32>
    %494 = math.exp %493 : vector<2x128xf32>
    %cst_83 = arith.constant 1.000000e+00 : f32
    %495 = vector.broadcast %cst_83 : f32 to vector<2x128xf32>
    %496 = arith.addf %495, %494 : vector<2x128xf32>
    %497 = arith.divf %495, %496 : vector<2x128xf32>
    %498 = vector.extract_strided_slice %488 {offsets = [0, 128], sizes = [2, 128], strides = [1, 1]} : vector<2x512xf32> to vector<2x128xf32>
    %499 = arith.negf %498 : vector<2x128xf32>
    %500 = math.exp %499 : vector<2x128xf32>
    %cst_84 = arith.constant 1.000000e+00 : f32
    %501 = vector.broadcast %cst_84 : f32 to vector<2x128xf32>
    %502 = arith.addf %501, %500 : vector<2x128xf32>
    %503 = arith.divf %501, %502 : vector<2x128xf32>
    %504 = vector.extract_strided_slice %488 {offsets = [0, 256], sizes = [2, 128], strides = [1, 1]} : vector<2x512xf32> to vector<2x128xf32>
    %505 = math.tanh %504 : vector<2x128xf32>
    %506 = vector.extract_strided_slice %488 {offsets = [0, 384], sizes = [2, 128], strides = [1, 1]} : vector<2x512xf32> to vector<2x128xf32>
    %507 = arith.negf %506 : vector<2x128xf32>
    %508 = math.exp %507 : vector<2x128xf32>
    %cst_85 = arith.constant 1.000000e+00 : f32
    %509 = vector.broadcast %cst_85 : f32 to vector<2x128xf32>
    %510 = arith.addf %509, %508 : vector<2x128xf32>
    %511 = arith.divf %509, %510 : vector<2x128xf32>
    %512 = arith.mulf %503, %481 : vector<2x128xf32>
    %513 = arith.mulf %497, %505 : vector<2x128xf32>
    %514 = arith.addf %512, %513 : vector<2x128xf32>
    %515 = math.tanh %514 : vector<2x128xf32>
    %516 = arith.mulf %511, %515 : vector<2x128xf32>
    %517 = vector.extract_strided_slice %491 {offsets = [0, 0], sizes = [2, 128], strides = [1, 1]} : vector<2x512xf32> to vector<2x128xf32>
    %518 = arith.negf %517 : vector<2x128xf32>
    %519 = math.exp %518 : vector<2x128xf32>
    %cst_86 = arith.constant 1.000000e+00 : f32
    %520 = vector.broadcast %cst_86 : f32 to vector<2x128xf32>
    %521 = arith.addf %520, %519 : vector<2x128xf32>
    %522 = arith.divf %520, %521 : vector<2x128xf32>
    %523 = vector.extract_strided_slice %491 {offsets = [0, 128], sizes = [2, 128], strides = [1, 1]} : vector<2x512xf32> to vector<2x128xf32>
    %524 = arith.negf %523 : vector<2x128xf32>
    %525 = math.exp %524 : vector<2x128xf32>
    %cst_87 = arith.constant 1.000000e+00 : f32
    %526 = vector.broadcast %cst_87 : f32 to vector<2x128xf32>
    %527 = arith.addf %526, %525 : vector<2x128xf32>
    %528 = arith.divf %526, %527 : vector<2x128xf32>
    %529 = vector.extract_strided_slice %491 {offsets = [0, 256], sizes = [2, 128], strides = [1, 1]} : vector<2x512xf32> to vector<2x128xf32>
    %530 = math.tanh %529 : vector<2x128xf32>
    %531 = vector.extract_strided_slice %491 {offsets = [0, 384], sizes = [2, 128], strides = [1, 1]} : vector<2x512xf32> to vector<2x128xf32>
    %532 = arith.negf %531 : vector<2x128xf32>
    %533 = math.exp %532 : vector<2x128xf32>
    %cst_88 = arith.constant 1.000000e+00 : f32
    %534 = vector.broadcast %cst_88 : f32 to vector<2x128xf32>
    %535 = arith.addf %534, %533 : vector<2x128xf32>
    %536 = arith.divf %534, %535 : vector<2x128xf32>
    %537 = arith.mulf %528, %483 : vector<2x128xf32>
    %538 = arith.mulf %522, %530 : vector<2x128xf32>
    %539 = arith.addf %537, %538 : vector<2x128xf32>
    %540 = math.tanh %539 : vector<2x128xf32>
    %541 = arith.mulf %536, %540 : vector<2x128xf32>
    %c7_i32_89 = arith.constant 7 : i32
    %542 = vector.broadcast %c7_i32_89 : i32 to vector<2x128xi32>
    %543 = arith.cmpi sgt, %18, %542 : vector<2x128xi32>
    %c0_i32_90 = arith.constant 0 : i32
    %544 = vector.broadcast %c0_i32_90 : i32 to vector<2x128xi32>
    %545 = arith.cmpi sgt, %18, %544 : vector<2x128xi32>
    %546 = arith.select %543, %516, %480 : vector<2x128xi1>, vector<2x128xf32>
    %547 = arith.select %545, %541, %482 : vector<2x128xi1>, vector<2x128xf32>
    %548 = tpu.concatenate %546, %547 in 1 : vector<2x128xf32>, vector<2x128xf32> -> vector<2x256xf32>
    %549 = arith.truncf %548 : vector<2x256xf32> to vector<2x256xbf16>
    %c0_91 = arith.constant 0 : index
    %c0_92 = arith.constant 0 : index
    %550 = vector.load %arg8[%c0_91, %c0_92] : memref<256x128xbf16, #tpu.memory_space<vmem>>, vector<256x128xbf16>
    %cst_93 = arith.constant dense<0.000000e+00> : vector<2x128xf32>
    %551 = tpu.matmul %549, %550, %cst_93 {dimension_numbers = #tpu.dot_dimension_numbers<[1], [0], [0], [1], [0, 0, 1, 1], [], []>} : vector<2x256xbf16>, vector<256x128xbf16>, vector<2x128xf32> -> vector<2x128xf32>
    %552 = vector.broadcast %7 : vector<1x128xf32> to vector<2x128xf32>
    %553 = arith.addf %551, %552 : vector<2x128xf32>
    %cst_94 = arith.constant 0.000000e+00 : f32
    %554 = vector.broadcast %cst_94 : f32 to vector<2x128xf32>
    %555 = arith.maximumf %553, %554 : vector<2x128xf32>
    %c0_i32_95 = arith.constant 0 : i32
    %556 = tpu.memref_slice %arg17[%c0_i32_95] : memref<2x!tpu.dma_semaphore, #tpu.memory_space<semaphore_mem>> -> memref<1x!tpu.dma_semaphore, #tpu.memory_space<semaphore_mem>>
    %557 = tpu.memref_squeeze %556 : memref<1x!tpu.dma_semaphore, #tpu.memory_space<semaphore_mem>> -> memref<!tpu.dma_semaphore, #tpu.memory_space<semaphore_mem>>
    tpu.wait_dma2 semaphore(%557 : memref<!tpu.dma_semaphore, #tpu.memory_space<semaphore_mem>>) src(%arg6 : memref<768x512xbf16, #tpu.memory_space<any>>) dst(%arg15 : memref<768x512xbf16, #tpu.memory_space<vmem>>)
    %c1_i32_96 = arith.constant 1 : i32
    %558 = tpu.memref_slice %arg17[%c1_i32_96] : memref<2x!tpu.dma_semaphore, #tpu.memory_space<semaphore_mem>> -> memref<1x!tpu.dma_semaphore, #tpu.memory_space<semaphore_mem>>
    %559 = tpu.memref_squeeze %558 : memref<1x!tpu.dma_semaphore, #tpu.memory_space<semaphore_mem>> -> memref<!tpu.dma_semaphore, #tpu.memory_space<semaphore_mem>>
    tpu.wait_dma2 semaphore(%559 : memref<!tpu.dma_semaphore, #tpu.memory_space<semaphore_mem>>) src(%arg7 : memref<512x256xbf16, #tpu.memory_space<any>>) dst(%arg16 : memref<512x256xbf16, #tpu.memory_space<vmem>>)
    %c0_97 = arith.constant 0 : index
    %c0_98 = arith.constant 0 : index
    %560 = vector.load %arg2[%c0_97, %c0_98] : memref<10x768xbf16, #tpu.memory_space<vmem>>, vector<10x768xbf16>
    %c0_99 = arith.constant 0 : index
    %c0_100 = arith.constant 0 : index
    %561 = vector.load %arg15[%c0_99, %c0_100] : memref<768x512xbf16, #tpu.memory_space<vmem>>, vector<768x512xbf16>
    %cst_101 = arith.constant dense<0.000000e+00> : vector<10x512xf32>
    %562 = tpu.matmul %560, %561, %cst_101 {dimension_numbers = #tpu.dot_dimension_numbers<[1], [0], [0], [1], [0, 0, 1, 1], [], []>} : vector<10x768xbf16>, vector<768x512xbf16>, vector<10x512xf32> -> vector<10x512xf32>
    %563 = vector.broadcast %5 : vector<1x512xf32> to vector<10x512xf32>
    %564 = arith.addf %562, %563 : vector<10x512xf32>
    %cst_102 = arith.constant 0.000000e+00 : f32
    %565 = vector.broadcast %cst_102 : f32 to vector<10x512xf32>
    %566 = arith.maximumf %564, %565 : vector<10x512xf32>
    %567 = arith.truncf %566 : vector<10x512xf32> to vector<10x512xbf16>
    %c0_103 = arith.constant 0 : index
    %c0_104 = arith.constant 0 : index
    %568 = vector.load %arg16[%c0_103, %c0_104] : memref<512x256xbf16, #tpu.memory_space<vmem>>, vector<512x256xbf16>
    %cst_105 = arith.constant dense<0.000000e+00> : vector<10x256xf32>
    %569 = tpu.matmul %567, %568, %cst_105 {dimension_numbers = #tpu.dot_dimension_numbers<[1], [0], [0], [1], [0, 0, 1, 1], [], []>} : vector<10x512xbf16>, vector<512x256xbf16>, vector<10x256xf32> -> vector<10x256xf32>
    %570 = vector.broadcast %6 : vector<1x256xf32> to vector<10x256xf32>
    %571 = arith.addf %569, %570 : vector<10x256xf32>
    %cst_106 = arith.constant 0.000000e+00 : f32
    %572 = vector.broadcast %cst_106 : f32 to vector<10x256xf32>
    %573 = arith.maximumf %571, %572 : vector<10x256xf32>
    %574 = tpu.iota {dimensions = array<i32: 0>} : vector<2x10xi32>
    %575 = tpu.iota {dimensions = array<i32: 1>} : vector<2x10xi32>
    %c5_i32_107 = arith.constant 5 : i32
    %576 = vector.broadcast %c5_i32_107 : i32 to vector<2x10xi32>
    %577 = arith.muli %574, %576 : vector<2x10xi32>
    %578 = arith.cmpi sge, %575, %577 : vector<2x10xi32>
    %c1_i32_108 = arith.constant 1 : i32
    %579 = vector.broadcast %c1_i32_108 : i32 to vector<2x10xi32>
    %580 = arith.addi %574, %579 : vector<2x10xi32>
    %c5_i32_109 = arith.constant 5 : i32
    %581 = vector.broadcast %c5_i32_109 : i32 to vector<2x10xi32>
    %582 = arith.muli %580, %581 : vector<2x10xi32>
    %583 = arith.cmpi slt, %575, %582 : vector<2x10xi32>
    %584 = arith.andi %578, %583 : vector<2x10xi1>
    %cst_110 = arith.constant 1.000000e+00 : f32
    %cst_111 = arith.constant 0.000000e+00 : f32
    %585 = vector.broadcast %cst_110 : f32 to vector<2x10xf32>
    %586 = vector.broadcast %cst_111 : f32 to vector<2x10xf32>
    %587 = arith.select %584, %585, %586 : vector<2x10xi1>, vector<2x10xf32>
    %588 = arith.truncf %587 : vector<2x10xf32> to vector<2x10xbf16>
    %589 = arith.truncf %573 : vector<10x256xf32> to vector<10x256xbf16>
    %cst_112 = arith.constant dense<0.000000e+00> : vector<2x256xf32>
    %590 = tpu.matmul %588, %589, %cst_112 {dimension_numbers = #tpu.dot_dimension_numbers<[1], [0], [0], [1], [0, 0, 1, 1], [], []>} : vector<2x10xbf16>, vector<10x256xbf16>, vector<2x256xf32> -> vector<2x256xf32>
    %cst_113 = arith.constant 2.000000e-01 : f32
    %591 = vector.broadcast %cst_113 : f32 to vector<2x256xf32>
    %592 = arith.mulf %590, %591 : vector<2x256xf32>
    %593 = tpu.concatenate %555, %592 in 1 : vector<2x128xf32>, vector<2x256xf32> -> vector<2x384xf32>
    %594 = arith.truncf %593 : vector<2x384xf32> to vector<2x384xbf16>
    %c0_114 = arith.constant 0 : index
    %c0_115 = arith.constant 0 : index
    %595 = vector.load %arg9[%c0_114, %c0_115] : memref<384x124xbf16, #tpu.memory_space<vmem>>, vector<384x124xbf16>
    %cst_116 = arith.constant dense<0.000000e+00> : vector<2x124xf32>
    %596 = tpu.matmul %594, %595, %cst_116 {dimension_numbers = #tpu.dot_dimension_numbers<[1], [0], [0], [1], [0, 0, 1, 1], [], []>} : vector<2x384xbf16>, vector<384x124xbf16>, vector<2x124xf32> -> vector<2x124xf32>
    %597 = vector.broadcast %8 : vector<1x124xf32> to vector<2x124xf32>
    %598 = arith.addf %596, %597 : vector<2x124xf32>
    %cst_117 = arith.constant 0.000000e+00 : f32
    %599 = vector.broadcast %cst_117 : f32 to vector<2x124xf32>
    %600 = arith.maximumf %598, %599 : vector<2x124xf32>
    %601 = arith.truncf %600 : vector<2x124xf32> to vector<2x124xbf16>
    %c0_118 = arith.constant 0 : index
    %c0_119 = arith.constant 0 : index
    %602 = vector.load %arg10[%c0_118, %c0_119] : memref<124x128xbf16, #tpu.memory_space<vmem>>, vector<124x128xbf16>
    %cst_120 = arith.constant dense<0.000000e+00> : vector<2x128xf32>
    %603 = tpu.matmul %601, %602, %cst_120 {dimension_numbers = #tpu.dot_dimension_numbers<[1], [0], [0], [1], [0, 0, 1, 1], [], []>} : vector<2x124xbf16>, vector<124x128xbf16>, vector<2x128xf32> -> vector<2x128xf32>
    %c0_121 = arith.constant 0 : index
    %c0_122 = arith.constant 0 : index
    %604 = vector.load %arg3[%c0_121, %c0_122] : memref<2x4xbf16, #tpu.memory_space<vmem>>, vector<2x4xbf16>
    %c0_123 = arith.constant 0 : index
    %c0_124 = arith.constant 0 : index
    %605 = vector.load %arg11[%c0_123, %c0_124] : memref<4x128xbf16, #tpu.memory_space<vmem>>, vector<4x128xbf16>
    %cst_125 = arith.constant dense<0.000000e+00> : vector<2x128xf32>
    %606 = tpu.matmul %604, %605, %cst_125 {dimension_numbers = #tpu.dot_dimension_numbers<[1], [0], [0], [1], [0, 0, 1, 1], [], []>} : vector<2x4xbf16>, vector<4x128xbf16>, vector<2x128xf32> -> vector<2x128xf32>
    %607 = arith.addf %603, %606 : vector<2x128xf32>
    %608 = vector.broadcast %9 : vector<1x128xf32> to vector<2x128xf32>
    %609 = arith.addf %607, %608 : vector<2x128xf32>
    %cst_126 = arith.constant 0.000000e+00 : f32
    %610 = vector.broadcast %cst_126 : f32 to vector<2x128xf32>
    %611 = arith.maximumf %609, %610 : vector<2x128xf32>
    %612 = arith.truncf %611 : vector<2x128xf32> to vector<2x128xbf16>
    %c0_127 = arith.constant 0 : index
    %c0_128 = arith.constant 0 : index
    %613 = vector.load %arg12[%c0_127, %c0_128] : memref<128x2xbf16, #tpu.memory_space<vmem>>, vector<128x2xbf16>
    %cst_129 = arith.constant dense<0.000000e+00> : vector<2x2xf32>
    %614 = tpu.matmul %612, %613, %cst_129 {dimension_numbers = #tpu.dot_dimension_numbers<[1], [0], [0], [1], [0, 0, 1, 1], [], []>} : vector<2x128xbf16>, vector<128x2xbf16>, vector<2x2xf32> -> vector<2x2xf32>
    %615 = vector.broadcast %10 : vector<1x2xf32> to vector<2x2xf32>
    %616 = arith.addf %614, %615 : vector<2x2xf32>
    %cst_130 = arith.constant dense<0xFF800000> : vector<2xf32>
    %617 = vector.multi_reduction <maximumf>, %616, %cst_130 [1] : vector<2x2xf32> to vector<2xf32>
    %618 = vector.shape_cast %617 : vector<2xf32> to vector<2x1xf32>
    %619 = vector.broadcast %618 : vector<2x1xf32> to vector<2x2xf32>
    %620 = arith.subf %616, %619 : vector<2x2xf32>
    %621 = math.exp %620 : vector<2x2xf32>
    %cst_131 = arith.constant dense<0.000000e+00> : vector<2xf32>
    %622 = vector.multi_reduction <add>, %621, %cst_131 [1] : vector<2x2xf32> to vector<2xf32>
    %623 = vector.shape_cast %622 : vector<2xf32> to vector<2x1xf32>
    %624 = vector.broadcast %623 : vector<2x1xf32> to vector<2x2xf32>
    %625 = arith.divf %621, %624 : vector<2x2xf32>
    %c0_132 = arith.constant 0 : index
    %c0_133 = arith.constant 0 : index
    %626 = vector.load %arg14[%c0_132, %c0_133] : memref<2x2xf32, #tpu.memory_space<vmem>>, vector<2x2xf32>
    tpu.vector_store %arg14[%c0_132, %c0_133], %625 {strides = array<i32>} : memref<2x2xf32, #tpu.memory_space<vmem>>, vector<2x2xf32>,
    return
  }
}

</mosaic_0001>

<llo_original>
// kernel: multimodal_rumor_detector.1
$region0: #{multimodal_rumor_detector.1}
  #allocation0 [shape = 'u32[]', space=smem, size = 0x4, offset = 0x4, fixed_abs, tag = 'smem constant byte address 0x4 - core index']
  #allocation1 [shape = 'u32[144,128]{1,0:T(1,128)}', space=vmem, size = 0x12000, scoped, tag = 'internal scratch']
  #allocation2 [shape = 'bf16[768,512]{1,0:T(16,128)(2,1)}', space=vmem, size = 0xc0000, scoped, tag = 'scratch operand']
  #allocation3 [shape = 'bf16[512,256]{1,0:T(16,128)(2,1)}', space=vmem, size = 0x40000, scoped, tag = 'scratch operand']
  #allocation4 [shape = 's32[2]{0}', space=sflag, size = 0x8, scoped, tag = 'scratch operand']
  #allocation14 [shape = 's32[]', space=sflag, size = 0x4, offset = 0, fixed_abs, tag = 'sflag constant byte address 0x0 - dummy sync flag']
  #allocation16 [shape = 's32[]', space=sflag, size = 0x4, offset = 0, fixed_abs, tag = 'sflag constant byte address 0x0 - dummy sync flag']
  %s0 = inlined_call_operand.vmem [shape: bf16[16,64], index: 0, kind: input, shape index: {}]
  %s1 = inlined_call_operand.vmem [shape: s32[2,1], index: 1, kind: input, shape index: {}]
  %s2 = inlined_call_operand.vmem [shape: bf16[10,768], index: 2, kind: input, shape index: {}]
  %s3 = inlined_call_operand.vmem [shape: bf16[2,4], index: 3, kind: input, shape index: {}]
  %s4 = inlined_call_operand.vmem [shape: bf16[64,1024], index: 4, kind: input, shape index: {}]
  %s5 = inlined_call_operand.vmem [shape: bf16[128,1024], index: 5, kind: input, shape index: {}]
  %s6 = inlined_call_operand.hbm [shape: bf16[768,512], index: 6, kind: input, shape index: {}]
  %s7 = inlined_call_operand.vmem [shape: bf16[512,256], index: 7, kind: input, shape index: {}]
  %s8 = inlined_call_operand.hbm [shape: bf16[256,128], index: 8, kind: input, shape index: {}]
  %s9 = inlined_call_operand.hbm [shape: bf16[384,124], index: 9, kind: input, shape index: {}]
  %s10 = inlined_call_operand.hbm [shape: bf16[124,128], index: 10, kind: input, shape index: {}]
  %s11 = inlined_call_operand.vmem [shape: bf16[4,128], index: 11, kind: input, shape index: {}]
  %s12 = inlined_call_operand.vmem [shape: bf16[128,2], index: 12, kind: input, shape index: {}]
  %s13 = inlined_call_operand.hbm [shape: f32[1,2304], index: 13, kind: input, shape index: {}]
  %s14 = inlined_call_operand.hbm [shape: f32[2,2], index: 14, kind: output, shape index: {}]
  %s15 = sld [smem:[#allocation0]]
  $region111: #{multimodal_rumor_detector.1} parent=0
    _
  %s17 = ssub.s32 1, %s15
  %s18 = scalar_select 0, %s17, %s15
  $region1: #{multimodal_rumor_detector.1} parent=0
    #allocation5 [shape = 'u8[65536]{0}', space=vmem, size = 0x10000, scoped, tag = 'input window, operand 8, single buffered']
    #allocation6 [shape = 's32[1]{0}', space=sflag, size = 0x4, scoped, tag = 'scoped memory for multimodal_rumor_detector.1']
    #allocation7 [shape = 's32[1]{0}', space=sflag, size = 0x4, scoped, tag = 'scoped memory for multimodal_rumor_detector.1']
    #allocation8 [shape = 'u8[98304]{0}', space=vmem, size = 0x18000, scoped, tag = 'input window, operand 9, single buffered']
    #allocation9 [shape = 's32[1]{0}', space=sflag, size = 0x4, scoped, tag = 'scoped memory for multimodal_rumor_detector.1']
    #allocation10 [shape = 'u8[32768]{0}', space=vmem, size = 0x8000, scoped, tag = 'input window, operand 10, single buffered']
    #allocation11 [shape = 'u8[9216]{0}', space=vmem, size = 0x2400, scoped, tag = 'input window, operand 13, single buffered']
    #allocation12 [shape = 's32[1]{0}', space=sflag, size = 0x4, scoped, tag = 'scoped memory for multimodal_rumor_detector.1']
    #allocation13 [shape = 'u8[1024]{0}', space=vmem, size = 0x400, scoped, tag = 'output window, operand 0, single buffered']
    #allocation15 [shape = 'u32[9]{0}', space=smem, size = 0x24, scoped, tag = 'DMA stride descriptor']
    %19 = vsyncpa [#allocation6], 0
    %20 = vsyncpa [#allocation9], 0
    %21 = vsyncpa [#allocation12], 0
    %22 = vsyncpa [#allocation7], 0
    // Predicated region
    $region2: #{multimodal_rumor_detector.1} parent=1 // pred_check
      _
    $region3: #{multimodal_rumor_detector.1} parent=1 // pred_check_branch
      %24 = sbr.rel (0) target = $region5
    $region4: #{multimodal_rumor_detector.1} parent=1 // pred_region
      _
    $region5: #{multimodal_rumor_detector.1} parent=1 // pred_fallthru
      _
    // Predicated region
    $region6: #{multimodal_rumor_detector.1} parent=1 // pred_check
      _
    $region7: #{multimodal_rumor_detector.1} parent=1 // pred_check_branch
      %26 = sbr.rel (0) target = $region9
    $region8: #{multimodal_rumor_detector.1} parent=1 // pred_region
      _
    $region9: #{multimodal_rumor_detector.1} parent=1 // pred_fallthru
      _
    // Predicated region
    $region10: #{multimodal_rumor_detector.1} parent=1 // pred_check
      _
    $region11: #{multimodal_rumor_detector.1} parent=1 // pred_check_branch
      %28 = sbr.rel (0) target = $region13
    $region12: #{multimodal_rumor_detector.1} parent=1 // pred_region
      _
    $region13: #{multimodal_rumor_detector.1} parent=1 // pred_fallthru
      _
    // Predicated region
    $region14: #{multimodal_rumor_detector.1} parent=1 // pred_check
      _
    $region15: #{multimodal_rumor_detector.1} parent=1 // pred_check_branch
      %30 = sbr.rel (0) target = $region17
    $region16: #{multimodal_rumor_detector.1} parent=1 // pred_region
      _
    $region17: #{multimodal_rumor_detector.1} parent=1 // pred_fallthru
      _
    // Predicated region
    $region18: #{multimodal_rumor_detector.1} parent=1 // pred_check
      _
    $region19: #{multimodal_rumor_detector.1} parent=1 // pred_check_branch
      %32 = sbr.rel (0) target = $region21
    $region20: #{multimodal_rumor_detector.1} parent=1 // pred_region
      _
    $region21: #{multimodal_rumor_detector.1} parent=1 // pred_fallthru
      _
    // Predicated region
    $region22: #{multimodal_rumor_detector.1} parent=1 // pred_check
      _
    $region23: #{multimodal_rumor_detector.1} parent=1 // pred_check_branch
      %34 = sbr.rel (0) target = $region25
    $region24: #{multimodal_rumor_detector.1} parent=1 // pred_region
      _
    $region25: #{multimodal_rumor_detector.1} parent=1 // pred_fallthru
      _
    // Predicated region
    $region26: #{multimodal_rumor_detector.1} parent=1 // pred_check
      _
    $region27: #{multimodal_rumor_detector.1} parent=1 // pred_check_branch
      %36 = sbr.rel (0) target = $region29
    $region28: #{multimodal_rumor_detector.1} parent=1 // pred_region
      %s38 = ssub.s32 2048, 2048
      %39 = vsyncadd [#allocation6], %s38
      %s40 = sshll.u32 [#allocation5], 4
      %s41 = int_to_ptr.vmem [resolvable:$true] %s40
      %46 = dma.hbm_to_vmem [thread:$0]  %s8, 2048, %s41, [#allocation6], 64, 64, 4
    $region29: #{multimodal_rumor_detector.1} parent=1 // pred_fallthru
      _
    // Predicated region
    $region30: #{multimodal_rumor_detector.1} parent=1 // pred_check
      _
    $region31: #{multimodal_rumor_detector.1} parent=1 // pred_check_branch
      %48 = sbr.rel (0) target = $region33
    $region32: #{multimodal_rumor_detector.1} parent=1 // pred_region
      %s50 = ssub.s32 3072, 3072
      %51 = vsyncadd [#allocation9], %s50
      %s52 = sshll.u32 [#allocation8], 4
      %s53 = int_to_ptr.vmem [resolvable:$true] %s52
      %58 = dma.hbm_to_vmem [thread:$0]  %s9, 3072, %s53, [#allocation9], 64, 64, 4
    $region33: #{multimodal_rumor_detector.1} parent=1 // pred_fallthru
      _
    // Predicated region
    $region34: #{multimodal_rumor_detector.1} parent=1 // pred_check
      _
    $region35: #{multimodal_rumor_detector.1} parent=1 // pred_check_branch
      %60 = sbr.rel (0) target = $region37
    $region36: #{multimodal_rumor_detector.1} parent=1 // pred_region
      %s62 = ssub.s32 1024, 1024
      %63 = vsyncadd [#allocation9], %s62
      %s64 = sshll.u32 [#allocation10], 4
      %s65 = int_to_ptr.vmem [resolvable:$true] %s64
      %70 = dma.hbm_to_vmem [thread:$0]  %s10, 1024, %s65, [#allocation9], 64, 64, 4
    $region37: #{multimodal_rumor_detector.1} parent=1 // pred_fallthru
      _
    // Predicated region
    $region38: #{multimodal_rumor_detector.1} parent=1 // pred_check
      _
    $region39: #{multimodal_rumor_detector.1} parent=1 // pred_check_branch
      %72 = sbr.rel (0) target = $region41
    $region40: #{multimodal_rumor_detector.1} parent=1 // pred_region
      _
    $region41: #{multimodal_rumor_detector.1} parent=1 // pred_fallthru
      _
    // Predicated region
    $region42: #{multimodal_rumor_detector.1} parent=1 // pred_check
      _
    $region43: #{multimodal_rumor_detector.1} parent=1 // pred_check_branch
      %74 = sbr.rel (0) target = $region45
    $region44: #{multimodal_rumor_detector.1} parent=1 // pred_region
      _
    $region45: #{multimodal_rumor_detector.1} parent=1 // pred_fallthru
      _
    // Predicated region
    $region46: #{multimodal_rumor_detector.1} parent=1 // pred_check
      _
    $region47: #{multimodal_rumor_detector.1} parent=1 // pred_check_branch
      %76 = sbr.rel (0) target = $region49
    $region48: #{multimodal_rumor_detector.1} parent=1 // pred_region
      %s78 = ssub.s32 288, 288
      %79 = vsyncadd [#allocation12], %s78
      %s81 = sshll.u32 [#allocation11], 4
      %s82 = int_to_ptr.vmem [resolvable:$true] %s81
      %84 = dma.hbm_to_vmem [thread:$0]  %s13, 288, %s82, [#allocation12]
    $region49: #{multimodal_rumor_detector.1} parent=1 // pred_fallthru
      _
    // Predicated region
    $region50: #{multimodal_rumor_detector.1} parent=1 // pred_check
      _
    $region51: #{multimodal_rumor_detector.1} parent=1 // pred_check_branch
      %86 = sbr.rel (0) target = $region53
    $region52: #{multimodal_rumor_detector.1} parent=1 // pred_region
      %87 = dma.done [#allocation6], 2048
    $region53: #{multimodal_rumor_detector.1} parent=1 // pred_fallthru
      _
    // Predicated region
    $region54: #{multimodal_rumor_detector.1} parent=1 // pred_check
      _
    $region55: #{multimodal_rumor_detector.1} parent=1 // pred_check_branch
      %89 = sbr.rel (0) target = $region57
    $region56: #{multimodal_rumor_detector.1} parent=1 // pred_region
      %90 = dma.done [#allocation9], 3072
    $region57: #{multimodal_rumor_detector.1} parent=1 // pred_fallthru
      _
    // Predicated region
    $region58: #{multimodal_rumor_detector.1} parent=1 // pred_check
      _
    $region59: #{multimodal_rumor_detector.1} parent=1 // pred_check_branch
      %92 = sbr.rel (0) target = $region61
    $region60: #{multimodal_rumor_detector.1} parent=1 // pred_region
      %93 = dma.done [#allocation9], 1024
    $region61: #{multimodal_rumor_detector.1} parent=1 // pred_fallthru
      _
    // Predicated region
    $region62: #{multimodal_rumor_detector.1} parent=1 // pred_check
      _
    $region63: #{multimodal_rumor_detector.1} parent=1 // pred_check_branch
      %95 = sbr.rel (0) target = $region65
    $region64: #{multimodal_rumor_detector.1} parent=1 // pred_region
      %96 = dma.done [#allocation12], 288
    $region65: #{multimodal_rumor_detector.1} parent=1 // pred_fallthru
      _
    %s99 = sshll.u32 1, 14
    %s100 = sxor.u32 4294967295, %s99
    %s102 = sld [smem:[#allocation0]]
    %s103 = sadd.s32 2, %s102
    %s105 = sshll.u32 7, 26
    %s106 = sxor.u32 4294967295, %s105
    %s107 = sand.u32 0, %s106
    %s108 = sshll.u32 %s103, 26
    %s109 = sor.u32 %s107, %s108
    %s110 = sshll.u32 [#allocation2], 4
    %s111 = int_to_ptr.vmem [resolvable:$true] %s110
    %114 = sst [smem:[#allocation15]] 512
    %s115 = scalar_lea.smem [#allocation15], 1
    %116 = sst [smem:[%s115]] 512
    %s117 = scalar_lea.smem [#allocation15], 2
    %118 = sst [smem:[%s117]] 4
    %s119 = scalar_lea.smem [#allocation15], 3
    %120 = sst [smem:[%s119]] 64
    %s121 = scalar_lea.smem [#allocation15], 4
    %122 = sst [smem:[%s121]] 128
    %s123 = scalar_lea.smem [#allocation15], 5
    %124 = sst [smem:[%s123]] 2
    %s125 = scalar_lea.smem [#allocation15], 6
    %126 = sst [smem:[%s125]] 256
    %s127 = scalar_lea.smem [#allocation15], 7
    %128 = sst [smem:[%s127]] 64
    %s129 = scalar_lea.smem [#allocation15], 8
    %130 = sst [smem:[%s129]] 4
    %132 = dma.general %s6, 24576, %s111, [#allocation4], [#allocation14], [#allocation15], %s109, 0
    %s133 = scalar_lea.sflag [#allocation4], 1
    %p135 = scmp.lt.u32.totalorder 4, 8
    %p136 = pneg %p135
    // Predicated region
    $region66: #{multimodal_rumor_detector.1} parent=1 // pred_check
      _
    $region67: #{multimodal_rumor_detector.1} parent=1 // pred_check_branch
      %138 = sbr.rel (%p135) target = $region69
    $region68: #{multimodal_rumor_detector.1} parent=1 // pred_region
      %s407 = sand.u32 4, 7
      %p408 = scmp.eq.s32.totalorder %s407, 0
      %p409 = pneg %p408
      // Predicated region
      $region81: #{multimodal_rumor_detector.1} parent=68 // pred_check
        _
      $region82: #{multimodal_rumor_detector.1} parent=68 // pred_check_branch
        %411 = sbr.rel (%p408) target = $region84
      $region83: #{multimodal_rumor_detector.1} parent=68 // pred_region
        %s412 = sand.u32 4, 7
        %s413 = ssub.s32 4, %s412
        %s414 = scalar_lea.vmem %s7, %s413
        %s415 = ssub.s32 4, %s412
        %s416 = scalar_lea.vmem [#allocation3], %s415
        loop: start=0, step=1, limit=1
        $region85: #{multimodal_rumor_detector.1} parent=83 // loop_pre_header
          _
        $region86: #{multimodal_rumor_detector.1} parent=83 // loop_header
          %s418 = sphi 0, %s422
          %p419 = scmp.ge.s32.totalorder %s418, 1
          %s423 = sphi %s7, %s7
          %s424 = sphi [#allocation3], [#allocation3]
        $region87: #{multimodal_rumor_detector.1} parent=83 // loop_header_branch
          %421 = sbr.rel (%p419) target = $region91
        $region88: #{multimodal_rumor_detector.1} parent=83 // loop_body
          _
        $region89: #{multimodal_rumor_detector.1} parent=83 // loop_footer
          %s422 = sadd.s32 1, %s418
        $region90: #{multimodal_rumor_detector.1} parent=83 // loop_footer_branch
          %417 = sbr.rel target = $region86
        $region91: #{multimodal_rumor_detector.1} parent=83 // loop_exit
          _
        %s425 = sshllo.u32 0, %s412
        loop: start=0, step=1, limit=1
        $region92: #{multimodal_rumor_detector.1} parent=83 // loop_pre_header
          _
        $region93: #{multimodal_rumor_detector.1} parent=83 // loop_header
          %s427 = sphi 0, %s431
          %p428 = scmp.ge.s32.totalorder %s427, 1
          %s432 = sphi %s414, %s414
          %s433 = sphi %s416, %s416
        $region94: #{multimodal_rumor_detector.1} parent=83 // loop_header_branch
          %430 = sbr.rel (%p428) target = $region98
        $region95: #{multimodal_rumor_detector.1} parent=83 // loop_body
          %v434 = vld [vmem:[%s432] sm:%s425]
          %435 = vst [vmem:[%s433] sm:%s425] %v434
          %v436 = vld [vmem:[%s432 + $0x8] sm:%s425]
          %437 = vst [vmem:[%s433 + $0x4] sm:%s425] %v436
          %v438 = vld [vmem:[%s432 + $0x4] sm:%s425]
          %439 = vst [vmem:[%s433 + $0x8] sm:%s425] %v438
          %v440 = vld [vmem:[%s432 + $0xc] sm:%s425]
          %441 = vst [vmem:[%s433 + $0xc] sm:%s425] %v440
          %v442 = vld [vmem:[%s432 + $0x10] sm:%s425]
          %443 = vst [vmem:[%s433 + $0x10] sm:%s425] %v442
          %v444 = vld [vmem:[%s432 + $0x18] sm:%s425]
          %445 = vst [vmem:[%s433 + $0x14] sm:%s425] %v444
          %v446 = vld [vmem:[%s432 + $0x14] sm:%s425]
          %447 = vst [vmem:[%s433 + $0x18] sm:%s425] %v446
          %v448 = vld [vmem:[%s432 + $0x1c] sm:%s425]
          %449 = vst [vmem:[%s433 + $0x1c] sm:%s425] %v448
          %v450 = vld [vmem:[%s432 + $0x20] sm:%s425]
          %451 = vst [vmem:[%s433 + $0x20] sm:%s425] %v450
          %v452 = vld [vmem:[%s432 + $0x28] sm:%s425]
          %453 = vst [vmem:[%s433 + $0x24] sm:%s425] %v452
          %v454 = vld [vmem:[%s432 + $0x24] sm:%s425]
          %455 = vst [vmem:[%s433 + $0x28] sm:%s425] %v454
          %v456 = vld [vmem:[%s432 + $0x2c] sm:%s425]
          %457 = vst [vmem:[%s433 + $0x2c] sm:%s425] %v456
          %v458 = vld [vmem:[%s432 + $0x30] sm:%s425]
          %459 = vst [vmem:[%s433 + $0x30] sm:%s425] %v458
          %v460 = vld [vmem:[%s432 + $0x38] sm:%s425]
          %461 = vst [vmem:[%s433 + $0x34] sm:%s425] %v460
          %v462 = vld [vmem:[%s432 + $0x34] sm:%s425]
          %463 = vst [vmem:[%s433 + $0x38] sm:%s425] %v462
          %v464 = vld [vmem:[%s432 + $0x3c] sm:%s425]
          %465 = vst [vmem:[%s433 + $0x3c] sm:%s425] %v464
          %v466 = vld [vmem:[%s432 + $0x40] sm:%s425]
          %467 = vst [vmem:[%s433 + $0x40] sm:%s425] %v466
          %v468 = vld [vmem:[%s432 + $0x48] sm:%s425]
          %469 = vst [vmem:[%s433 + $0x44] sm:%s425] %v468
          %v470 = vld [vmem:[%s432 + $0x44] sm:%s425]
          %471 = vst [vmem:[%s433 + $0x48] sm:%s425] %v470
          %v472 = vld [vmem:[%s432 + $0x4c] sm:%s425]
          %473 = vst [vmem:[%s433 + $0x4c] sm:%s425] %v472
          %v474 = vld [vmem:[%s432 + $0x50] sm:%s425]
          %475 = vst [vmem:[%s433 + $0x50] sm:%s425] %v474
          %v476 = vld [vmem:[%s432 + $0x58] sm:%s425]
          %477 = vst [vmem:[%s433 + $0x54] sm:%s425] %v476
          %v478 = vld [vmem:[%s432 + $0x54] sm:%s425]
          %479 = vst [vmem:[%s433 + $0x58] sm:%s425] %v478
          %v480 = vld [vmem:[%s432 + $0x5c] sm:%s425]
          %481 = vst [vmem:[%s433 + $0x5c] sm:%s425] %v480
          %v482 = vld [vmem:[%s432 + $0x60] sm:%s425]
          %483 = vst [vmem:[%s433 + $0x60] sm:%s425] %v482
          %v484 = vld [vmem:[%s432 + $0x68] sm:%s425]
          %485 = vst [vmem:[%s433 + $0x64] sm:%s425] %v484
          %v486 = vld [vmem:[%s432 + $0x64] sm:%s425]
          %487 = vst [vmem:[%s433 + $0x68] sm:%s425] %v486
          %v488 = vld [vmem:[%s432 + $0x6c] sm:%s425]
          %489 = vst [vmem:[%s433 + $0x6c] sm:%s425] %v488
          %v490 = vld [vmem:[%s432 + $0x70] sm:%s425]
          %491 = vst [vmem:[%s433 + $0x70] sm:%s425] %v490
          %v492 = vld [vmem:[%s432 + $0x78] sm:%s425]
          %493 = vst [vmem:[%s433 + $0x74] sm:%s425] %v492
          %v494 = vld [vmem:[%s432 + $0x74] sm:%s425]
          %495 = vst [vmem:[%s433 + $0x78] sm:%s425] %v494
          %v496 = vld [vmem:[%s432 + $0x7c] sm:%s425]
          %497 = vst [vmem:[%s433 + $0x7c] sm:%s425] %v496
          %v498 = vld [vmem:[%s432 + $0x80] sm:%s425]
          %499 = vst [vmem:[%s433 + $0x80] sm:%s425] %v498
          %v500 = vld [vmem:[%s432 + $0x88] sm:%s425]
          %501 = vst [vmem:[%s433 + $0x84] sm:%s425] %v500
          %v502 = vld [vmem:[%s432 + $0x84] sm:%s425]
          %503 = vst [vmem:[%s433 + $0x88] sm:%s425] %v502
          %v504 = vld [vmem:[%s432 + $0x8c] sm:%s425]
          %505 = vst [vmem:[%s433 + $0x8c] sm:%s425] %v504
          %v506 = vld [vmem:[%s432 + $0x90] sm:%s425]
          %507 = vst [vmem:[%s433 + $0x90] sm:%s425] %v506
          %v508 = vld [vmem:[%s432 + $0x98] sm:%s425]
          %509 = vst [vmem:[%s433 + $0x94] sm:%s425] %v508
          %v510 = vld [vmem:[%s432 + $0x94] sm:%s425]
          %511 = vst [vmem:[%s433 + $0x98] sm:%s425] %v510
          %v512 = vld [vmem:[%s432 + $0x9c] sm:%s425]
          %513 = vst [vmem:[%s433 + $0x9c] sm:%s425] %v512
          %v514 = vld [vmem:[%s432 + $0xa0] sm:%s425]
          %515 = vst [vmem:[%s433 + $0xa0] sm:%s425] %v514
          %v516 = vld [vmem:[%s432 + $0xa8] sm:%s425]
          %517 = vst [vmem:[%s433 + $0xa4] sm:%s425] %v516
          %v518 = vld [vmem:[%s432 + $0xa4] sm:%s425]
          %519 = vst [vmem:[%s433 + $0xa8] sm:%s425] %v518
          %v520 = vld [vmem:[%s432 + $0xac] sm:%s425]
          %521 = vst [vmem:[%s433 + $0xac] sm:%s425] %v520
          %v522 = vld [vmem:[%s432 + $0xb0] sm:%s425]
          %523 = vst [vmem:[%s433 + $0xb0] sm:%s425] %v522
          %v524 = vld [vmem:[%s432 + $0xb8] sm:%s425]
          %525 = vst [vmem:[%s433 + $0xb4] sm:%s425] %v524
          %v526 = vld [vmem:[%s432 + $0xb4] sm:%s425]
          %527 = vst [vmem:[%s433 + $0xb8] sm:%s425] %v526
          %v528 = vld [vmem:[%s432 + $0xbc] sm:%s425]
          %529 = vst [vmem:[%s433 + $0xbc] sm:%s425] %v528
          %v530 = vld [vmem:[%s432 + $0xc0] sm:%s425]
          %531 = vst [vmem:[%s433 + $0xc0] sm:%s425] %v530
          %v532 = vld [vmem:[%s432 + $0xc8] sm:%s425]
          %533 = vst [vmem:[%s433 + $0xc4] sm:%s425] %v532
          %v534 = vld [vmem:[%s432 + $0xc4] sm:%s425]
          %535 = vst [vmem:[%s433 + $0xc8] sm:%s425] %v534
          %v536 = vld [vmem:[%s432 + $0xcc] sm:%s425]
          %537 = vst [vmem:[%s433 + $0xcc] sm:%s425] %v536
          %v538 = vld [vmem:[%s432 + $0xd0] sm:%s425]
          %539 = vst [vmem:[%s433 + $0xd0] sm:%s425] %v538
          %v540 = vld [vmem:[%s432 + $0xd8] sm:%s425]
          %541 = vst [vmem:[%s433 + $0xd4] sm:%s425] %v540
          %v542 = vld [vmem:[%s432 + $0xd4] sm:%s425]
          %543 = vst [vmem:[%s433 + $0xd8] sm:%s425] %v542
          %v544 = vld [vmem:[%s432 + $0xdc] sm:%s425]
          %545 = vst [vmem:[%s433 + $0xdc] sm:%s425] %v544
          %v546 = vld [vmem:[%s432 + $0xe0] sm:%s425]
          %547 = vst [vmem:[%s433 + $0xe0] sm:%s425] %v546
          %v548 = vld [vmem:[%s432 + $0xe8] sm:%s425]
          %549 = vst [vmem:[%s433 + $0xe4] sm:%s425] %v548
          %v550 = vld [vmem:[%s432 + $0xe4] sm:%s425]
          %551 = vst [vmem:[%s433 + $0xe8] sm:%s425] %v550
          %v552 = vld [vmem:[%s432 + $0xec] sm:%s425]
          %553 = vst [vmem:[%s433 + $0xec] sm:%s425] %v552
          %v554 = vld [vmem:[%s432 + $0xf0] sm:%s425]
          %555 = vst [vmem:[%s433 + $0xf0] sm:%s425] %v554
          %v556 = vld [vmem:[%s432 + $0xf8] sm:%s425]
          %557 = vst [vmem:[%s433 + $0xf4] sm:%s425] %v556
          %v558 = vld [vmem:[%s432 + $0xf4] sm:%s425]
          %559 = vst [vmem:[%s433 + $0xf8] sm:%s425] %v558
          %v560 = vld [vmem:[%s432 + $0xfc] sm:%s425]
          %561 = vst [vmem:[%s433 + $0xfc] sm:%s425] %v560
          %v562 = vld [vmem:[%s432 + $0x100] sm:%s425]
          %563 = vst [vmem:[%s433 + $0x100] sm:%s425] %v562
          %v564 = vld [vmem:[%s432 + $0x108] sm:%s425]
          %565 = vst [vmem:[%s433 + $0x104] sm:%s425] %v564
          %v566 = vld [vmem:[%s432 + $0x104] sm:%s425]
          %567 = vst [vmem:[%s433 + $0x108] sm:%s425] %v566
          %v568 = vld [vmem:[%s432 + $0x10c] sm:%s425]
          %569 = vst [vmem:[%s433 + $0x10c] sm:%s425] %v568
          %v570 = vld [vmem:[%s432 + $0x110] sm:%s425]
          %571 = vst [vmem:[%s433 + $0x110] sm:%s425] %v570
          %v572 = vld [vmem:[%s432 + $0x118] sm:%s425]
          %573 = vst [vmem:[%s433 + $0x114] sm:%s425] %v572
          %v574 = vld [vmem:[%s432 + $0x114] sm:%s425]
          %575 = vst [vmem:[%s433 + $0x118] sm:%s425] %v574
          %v576 = vld [vmem:[%s432 + $0x11c] sm:%s425]
          %577 = vst [vmem:[%s433 + $0x11c] sm:%s425] %v576
          %v578 = vld [vmem:[%s432 + $0x120] sm:%s425]
          %579 = vst [vmem:[%s433 + $0x120] sm:%s425] %v578
          %v580 = vld [vmem:[%s432 + $0x128] sm:%s425]
          %581 = vst [vmem:[%s433 + $0x124] sm:%s425] %v580
          %v582 = vld [vmem:[%s432 + $0x124] sm:%s425]
          %583 = vst [vmem:[%s433 + $0x128] sm:%s425] %v582
          %v584 = vld [vmem:[%s432 + $0x12c] sm:%s425]
          %585 = vst [vmem:[%s433 + $0x12c] sm:%s425] %v584
          %v586 = vld [vmem:[%s432 + $0x130] sm:%s425]
          %587 = vst [vmem:[%s433 + $0x130] sm:%s425] %v586
          %v588 = vld [vmem:[%s432 + $0x138] sm:%s425]
          %589 = vst [vmem:[%s433 + $0x134] sm:%s425] %v588
          %v590 = vld [vmem:[%s432 + $0x134] sm:%s425]
          %591 = vst [vmem:[%s433 + $0x138] sm:%s425] %v590
          %v592 = vld [vmem:[%s432 + $0x13c] sm:%s425]
          %593 = vst [vmem:[%s433 + $0x13c] sm:%s425] %v592
          %v594 = vld [vmem:[%s432 + $0x140] sm:%s425]
          %595 = vst [vmem:[%s433 + $0x140] sm:%s425] %v594
          %v596 = vld [vmem:[%s432 + $0x148] sm:%s425]
          %597 = vst [vmem:[%s433 + $0x144] sm:%s425] %v596
          %v598 = vld [vmem:[%s432 + $0x144] sm:%s425]
          %599 = vst [vmem:[%s433 + $0x148] sm:%s425] %v598
          %v600 = vld [vmem:[%s432 + $0x14c] sm:%s425]
          %601 = vst [vmem:[%s433 + $0x14c] sm:%s425] %v600
          %v602 = vld [vmem:[%s432 + $0x150] sm:%s425]
          %603 = vst [vmem:[%s433 + $0x150] sm:%s425] %v602
          %v604 = vld [vmem:[%s432 + $0x158] sm:%s425]
          %605 = vst [vmem:[%s433 + $0x154] sm:%s425] %v604
          %v606 = vld [vmem:[%s432 + $0x154] sm:%s425]
          %607 = vst [vmem:[%s433 + $0x158] sm:%s425] %v606
          %v608 = vld [vmem:[%s432 + $0x15c] sm:%s425]
          %609 = vst [vmem:[%s433 + $0x15c] sm:%s425] %v608
          %v610 = vld [vmem:[%s432 + $0x160] sm:%s425]
          %611 = vst [vmem:[%s433 + $0x160] sm:%s425] %v610
          %v612 = vld [vmem:[%s432 + $0x168] sm:%s425]
          %613 = vst [vmem:[%s433 + $0x164] sm:%s425] %v612
          %v614 = vld [vmem:[%s432 + $0x164] sm:%s425]
          %615 = vst [vmem:[%s433 + $0x168] sm:%s425] %v614
          %v616 = vld [vmem:[%s432 + $0x16c] sm:%s425]
          %617 = vst [vmem:[%s433 + $0x16c] sm:%s425] %v616
          %v618 = vld [vmem:[%s432 + $0x170] sm:%s425]
          %619 = vst [vmem:[%s433 + $0x170] sm:%s425] %v618
          %v620 = vld [vmem:[%s432 + $0x178] sm:%s425]
          %621 = vst [vmem:[%s433 + $0x174] sm:%s425] %v620
          %v622 = vld [vmem:[%s432 + $0x174] sm:%s425]
          %623 = vst [vmem:[%s433 + $0x178] sm:%s425] %v622
          %v624 = vld [vmem:[%s432 + $0x17c] sm:%s425]
          %625 = vst [vmem:[%s433 + $0x17c] sm:%s425] %v624
          %v626 = vld [vmem:[%s432 + $0x180] sm:%s425]
          %627 = vst [vmem:[%s433 + $0x180] sm:%s425] %v626
          %v628 = vld [vmem:[%s432 + $0x188] sm:%s425]
          %629 = vst [vmem:[%s433 + $0x184] sm:%s425] %v628
          %v630 = vld [vmem:[%s432 + $0x184] sm:%s425]
          %631 = vst [vmem:[%s433 + $0x188] sm:%s425] %v630
          %v632 = vld [vmem:[%s432 + $0x18c] sm:%s425]
          %633 = vst [vmem:[%s433 + $0x18c] sm:%s425] %v632
          %v634 = vld [vmem:[%s432 + $0x190] sm:%s425]
          %635 = vst [vmem:[%s433 + $0x190] sm:%s425] %v634
          %v636 = vld [vmem:[%s432 + $0x198] sm:%s425]
          %637 = vst [vmem:[%s433 + $0x194] sm:%s425] %v636
          %v638 = vld [vmem:[%s432 + $0x194] sm:%s425]
          %639 = vst [vmem:[%s433 + $0x198] sm:%s425] %v638
          %v640 = vld [vmem:[%s432 + $0x19c] sm:%s425]
          %641 = vst [vmem:[%s433 + $0x19c] sm:%s425] %v640
          %v642 = vld [vmem:[%s432 + $0x1a0] sm:%s425]
          %643 = vst [vmem:[%s433 + $0x1a0] sm:%s425] %v642
          %v644 = vld [vmem:[%s432 + $0x1a8] sm:%s425]
          %645 = vst [vmem:[%s433 + $0x1a4] sm:%s425] %v644
          %v646 = vld [vmem:[%s432 + $0x1a4] sm:%s425]
          %647 = vst [vmem:[%s433 + $0x1a8] sm:%s425] %v646
          %v648 = vld [vmem:[%s432 + $0x1ac] sm:%s425]
          %649 = vst [vmem:[%s433 + $0x1ac] sm:%s425] %v648
          %v650 = vld [vmem:[%s432 + $0x1b0] sm:%s425]
          %651 = vst [vmem:[%s433 + $0x1b0] sm:%s425] %v650
          %v652 = vld [vmem:[%s432 + $0x1b8] sm:%s425]
          %653 = vst [vmem:[%s433 + $0x1b4] sm:%s425] %v652
          %v654 = vld [vmem:[%s432 + $0x1b4] sm:%s425]
          %655 = vst [vmem:[%s433 + $0x1b8] sm:%s425] %v654
          %v656 = vld [vmem:[%s432 + $0x1bc] sm:%s425]
          %657 = vst [vmem:[%s433 + $0x1bc] sm:%s425] %v656
          %v658 = vld [vmem:[%s432 + $0x1c0] sm:%s425]
          %659 = vst [vmem:[%s433 + $0x1c0] sm:%s425] %v658
          %v660 = vld [vmem:[%s432 + $0x1c8] sm:%s425]
          %661 = vst [vmem:[%s433 + $0x1c4] sm:%s425] %v660
          %v662 = vld [vmem:[%s432 + $0x1c4] sm:%s425]
          %663 = vst [vmem:[%s433 + $0x1c8] sm:%s425] %v662
          %v664 = vld [vmem:[%s432 + $0x1cc] sm:%s425]
          %665 = vst [vmem:[%s433 + $0x1cc] sm:%s425] %v664
          %v666 = vld [vmem:[%s432 + $0x1d0] sm:%s425]
          %667 = vst [vmem:[%s433 + $0x1d0] sm:%s425] %v666
          %v668 = vld [vmem:[%s432 + $0x1d8] sm:%s425]
          %669 = vst [vmem:[%s433 + $0x1d4] sm:%s425] %v668
          %v670 = vld [vmem:[%s432 + $0x1d4] sm:%s425]
          %671 = vst [vmem:[%s433 + $0x1d8] sm:%s425] %v670
          %v672 = vld [vmem:[%s432 + $0x1dc] sm:%s425]
          %673 = vst [vmem:[%s433 + $0x1dc] sm:%s425] %v672
          %v674 = vld [vmem:[%s432 + $0x1e0] sm:%s425]
          %675 = vst [vmem:[%s433 + $0x1e0] sm:%s425] %v674
          %v676 = vld [vmem:[%s432 + $0x1e8] sm:%s425]
          %677 = vst [vmem:[%s433 + $0x1e4] sm:%s425] %v676
          %v678 = vld [vmem:[%s432 + $0x1e4] sm:%s425]
          %679 = vst [vmem:[%s433 + $0x1e8] sm:%s425] %v678
          %v680 = vld [vmem:[%s432 + $0x1ec] sm:%s425]
          %681 = vst [vmem:[%s433 + $0x1ec] sm:%s425] %v680
          %v682 = vld [vmem:[%s432 + $0x1f0] sm:%s425]
          %683 = vst [vmem:[%s433 + $0x1f0] sm:%s425] %v682
          %v684 = vld [vmem:[%s432 + $0x1f8] sm:%s425]
          %685 = vst [vmem:[%s433 + $0x1f4] sm:%s425] %v684
          %v686 = vld [vmem:[%s432 + $0x1f4] sm:%s425]
          %687 = vst [vmem:[%s433 + $0x1f8] sm:%s425] %v686
          %v688 = vld [vmem:[%s432 + $0x1fc] sm:%s425]
          %689 = vst [vmem:[%s433 + $0x1fc] sm:%s425] %v688
        $region96: #{multimodal_rumor_detector.1} parent=83 // loop_footer
          %s431 = sadd.s32 1, %s427
        $region97: #{multimodal_rumor_detector.1} parent=83 // loop_footer_branch
          %426 = sbr.rel target = $region93
        $region98: #{multimodal_rumor_detector.1} parent=83 // loop_exit
          _
      $region84: #{multimodal_rumor_detector.1} parent=68 // pred_fallthru
        _
    $region69: #{multimodal_rumor_detector.1} parent=1 // pred_fallthru
      _
    // Predicated region
    $region70: #{multimodal_rumor_detector.1} parent=1 // pred_check
      %p139 = pneg %p135
    $region71: #{multimodal_rumor_detector.1} parent=1 // pred_check_branch
      %141 = sbr.rel (%p139) target = $region73
    $region72: #{multimodal_rumor_detector.1} parent=1 // pred_region
      %s142 = sshllo.u32 0, 4
      loop: start=0, step=1, limit=1
      $region74: #{multimodal_rumor_detector.1} parent=72 // loop_pre_header
        _
      $region75: #{multimodal_rumor_detector.1} parent=72 // loop_header
        %s144 = sphi 0, %s148
        %p145 = scmp.ge.s32.totalorder %s144, 1
        %s149 = sphi %s7, %s7
        %s150 = sphi [#allocation3], [#allocation3]
      $region76: #{multimodal_rumor_detector.1} parent=72 // loop_header_branch
        %147 = sbr.rel (%p145) target = $region80
      $region77: #{multimodal_rumor_detector.1} parent=72 // loop_body
        %v151 = vld [vmem:[%s149] sm:%s142]
        %152 = vst [vmem:[%s150] sm:%s142] %v151
        %v153 = vld [vmem:[%s149 + $0x8] sm:%s142]
        %154 = vst [vmem:[%s150 + $0x4] sm:%s142] %v153
        %v155 = vld [vmem:[%s149 + $0x4] sm:%s142]
        %156 = vst [vmem:[%s150 + $0x8] sm:%s142] %v155
        %v157 = vld [vmem:[%s149 + $0xc] sm:%s142]
        %158 = vst [vmem:[%s150 + $0xc] sm:%s142] %v157
        %v159 = vld [vmem:[%s149 + $0x10] sm:%s142]
        %160 = vst [vmem:[%s150 + $0x10] sm:%s142] %v159
        %v161 = vld [vmem:[%s149 + $0x18] sm:%s142]
        %162 = vst [vmem:[%s150 + $0x14] sm:%s142] %v161
        %v163 = vld [vmem:[%s149 + $0x14] sm:%s142]
        %164 = vst [vmem:[%s150 + $0x18] sm:%s142] %v163
        %v165 = vld [vmem:[%s149 + $0x1c] sm:%s142]
        %166 = vst [vmem:[%s150 + $0x1c] sm:%s142] %v165
        %v167 = vld [vmem:[%s149 + $0x20] sm:%s142]
        %168 = vst [vmem:[%s150 + $0x20] sm:%s142] %v167
        %v169 = vld [vmem:[%s149 + $0x28] sm:%s142]
        %170 = vst [vmem:[%s150 + $0x24] sm:%s142] %v169
        %v171 = vld [vmem:[%s149 + $0x24] sm:%s142]
        %172 = vst [vmem:[%s150 + $0x28] sm:%s142] %v171
        %v173 = vld [vmem:[%s149 + $0x2c] sm:%s142]
        %174 = vst [vmem:[%s150 + $0x2c] sm:%s142] %v173
        %v175 = vld [vmem:[%s149 + $0x30] sm:%s142]
        %176 = vst [vmem:[%s150 + $0x30] sm:%s142] %v175
        %v177 = vld [vmem:[%s149 + $0x38] sm:%s142]
        %178 = vst [vmem:[%s150 + $0x34] sm:%s142] %v177
        %v179 = vld [vmem:[%s149 + $0x34] sm:%s142]
        %180 = vst [vmem:[%s150 + $0x38] sm:%s142] %v179
        %v181 = vld [vmem:[%s149 + $0x3c] sm:%s142]
        %182 = vst [vmem:[%s150 + $0x3c] sm:%s142] %v181
        %v183 = vld [vmem:[%s149 + $0x40] sm:%s142]
        %184 = vst [vmem:[%s150 + $0x40] sm:%s142] %v183
        %v185 = vld [vmem:[%s149 + $0x48] sm:%s142]
        %186 = vst [vmem:[%s150 + $0x44] sm:%s142] %v185
        %v187 = vld [vmem:[%s149 + $0x44] sm:%s142]
        %188 = vst [vmem:[%s150 + $0x48] sm:%s142] %v187
        %v189 = vld [vmem:[%s149 + $0x4c] sm:%s142]
        %190 = vst [vmem:[%s150 + $0x4c] sm:%s142] %v189
        %v191 = vld [vmem:[%s149 + $0x50] sm:%s142]
        %192 = vst [vmem:[%s150 + $0x50] sm:%s142] %v191
        %v193 = vld [vmem:[%s149 + $0x58] sm:%s142]
        %194 = vst [vmem:[%s150 + $0x54] sm:%s142] %v193
        %v195 = vld [vmem:[%s149 + $0x54] sm:%s142]
        %196 = vst [vmem:[%s150 + $0x58] sm:%s142] %v195
        %v197 = vld [vmem:[%s149 + $0x5c] sm:%s142]
        %198 = vst [vmem:[%s150 + $0x5c] sm:%s142] %v197
        %v199 = vld [vmem:[%s149 + $0x60] sm:%s142]
        %200 = vst [vmem:[%s150 + $0x60] sm:%s142] %v199
        %v201 = vld [vmem:[%s149 + $0x68] sm:%s142]
        %202 = vst [vmem:[%s150 + $0x64] sm:%s142] %v201
        %v203 = vld [vmem:[%s149 + $0x64] sm:%s142]
        %204 = vst [vmem:[%s150 + $0x68] sm:%s142] %v203
        %v205 = vld [vmem:[%s149 + $0x6c] sm:%s142]
        %206 = vst [vmem:[%s150 + $0x6c] sm:%s142] %v205
        %v207 = vld [vmem:[%s149 + $0x70] sm:%s142]
        %208 = vst [vmem:[%s150 + $0x70] sm:%s142] %v207
        %v209 = vld [vmem:[%s149 + $0x78] sm:%s142]
        %210 = vst [vmem:[%s150 + $0x74] sm:%s142] %v209
        %v211 = vld [vmem:[%s149 + $0x74] sm:%s142]
        %212 = vst [vmem:[%s150 + $0x78] sm:%s142] %v211
        %v213 = vld [vmem:[%s149 + $0x7c] sm:%s142]
        %214 = vst [vmem:[%s150 + $0x7c] sm:%s142] %v213
        %v215 = vld [vmem:[%s149 + $0x80] sm:%s142]
        %216 = vst [vmem:[%s150 + $0x80] sm:%s142] %v215
        %v217 = vld [vmem:[%s149 + $0x88] sm:%s142]
        %218 = vst [vmem:[%s150 + $0x84] sm:%s142] %v217
        %v219 = vld [vmem:[%s149 + $0x84] sm:%s142]
        %220 = vst [vmem:[%s150 + $0x88] sm:%s142] %v219
        %v221 = vld [vmem:[%s149 + $0x8c] sm:%s142]
        %222 = vst [vmem:[%s150 + $0x8c] sm:%s142] %v221
        %v223 = vld [vmem:[%s149 + $0x90] sm:%s142]
        %224 = vst [vmem:[%s150 + $0x90] sm:%s142] %v223
        %v225 = vld [vmem:[%s149 + $0x98] sm:%s142]
        %226 = vst [vmem:[%s150 + $0x94] sm:%s142] %v225
        %v227 = vld [vmem:[%s149 + $0x94] sm:%s142]
        %228 = vst [vmem:[%s150 + $0x98] sm:%s142] %v227
        %v229 = vld [vmem:[%s149 + $0x9c] sm:%s142]
        %230 = vst [vmem:[%s150 + $0x9c] sm:%s142] %v229
        %v231 = vld [vmem:[%s149 + $0xa0] sm:%s142]
        %232 = vst [vmem:[%s150 + $0xa0] sm:%s142] %v231
        %v233 = vld [vmem:[%s149 + $0xa8] sm:%s142]
        %234 = vst [vmem:[%s150 + $0xa4] sm:%s142] %v233
        %v235 = vld [vmem:[%s149 + $0xa4] sm:%s142]
        %236 = vst [vmem:[%s150 + $0xa8] sm:%s142] %v235
        %v237 = vld [vmem:[%s149 + $0xac] sm:%s142]
        %238 = vst [vmem:[%s150 + $0xac] sm:%s142] %v237
        %v239 = vld [vmem:[%s149 + $0xb0] sm:%s142]
        %240 = vst [vmem:[%s150 + $0xb0] sm:%s142] %v239
        %v241 = vld [vmem:[%s149 + $0xb8] sm:%s142]
        %242 = vst [vmem:[%s150 + $0xb4] sm:%s142] %v241
        %v243 = vld [vmem:[%s149 + $0xb4] sm:%s142]
        %244 = vst [vmem:[%s150 + $0xb8] sm:%s142] %v243
        %v245 = vld [vmem:[%s149 + $0xbc] sm:%s142]
        %246 = vst [vmem:[%s150 + $0xbc] sm:%s142] %v245
        %v247 = vld [vmem:[%s149 + $0xc0] sm:%s142]
        %248 = vst [vmem:[%s150 + $0xc0] sm:%s142] %v247
        %v249 = vld [vmem:[%s149 + $0xc8] sm:%s142]
        %250 = vst [vmem:[%s150 + $0xc4] sm:%s142] %v249
        %v251 = vld [vmem:[%s149 + $0xc4] sm:%s142]
        %252 = vst [vmem:[%s150 + $0xc8] sm:%s142] %v251
        %v253 = vld [vmem:[%s149 + $0xcc] sm:%s142]
        %254 = vst [vmem:[%s150 + $0xcc] sm:%s142] %v253
        %v255 = vld [vmem:[%s149 + $0xd0] sm:%s142]
        %256 = vst [vmem:[%s150 + $0xd0] sm:%s142] %v255
        %v257 = vld [vmem:[%s149 + $0xd8] sm:%s142]
        %258 = vst [vmem:[%s150 + $0xd4] sm:%s142] %v257
        %v259 = vld [vmem:[%s149 + $0xd4] sm:%s142]
        %260 = vst [vmem:[%s150 + $0xd8] sm:%s142] %v259
        %v261 = vld [vmem:[%s149 + $0xdc] sm:%s142]
        %262 = vst [vmem:[%s150 + $0xdc] sm:%s142] %v261
        %v263 = vld [vmem:[%s149 + $0xe0] sm:%s142]
        %264 = vst [vmem:[%s150 + $0xe0] sm:%s142] %v263
        %v265 = vld [vmem:[%s149 + $0xe8] sm:%s142]
        %266 = vst [vmem:[%s150 + $0xe4] sm:%s142] %v265
        %v267 = vld [vmem:[%s149 + $0xe4] sm:%s142]
        %268 = vst [vmem:[%s150 + $0xe8] sm:%s142] %v267
        %v269 = vld [vmem:[%s149 + $0xec] sm:%s142]
        %270 = vst [vmem:[%s150 + $0xec] sm:%s142] %v269
        %v271 = vld [vmem:[%s149 + $0xf0] sm:%s142]
        %272 = vst [vmem:[%s150 + $0xf0] sm:%s142] %v271
        %v273 = vld [vmem:[%s149 + $0xf8] sm:%s142]
        %274 = vst [vmem:[%s150 + $0xf4] sm:%s142] %v273
        %v275 = vld [vmem:[%s149 + $0xf4] sm:%s142]
        %276 = vst [vmem:[%s150 + $0xf8] sm:%s142] %v275
        %v277 = vld [vmem:[%s149 + $0xfc] sm:%s142]
        %278 = vst [vmem:[%s150 + $0xfc] sm:%s142] %v277
        %v279 = vld [vmem:[%s149 + $0x100] sm:%s142]
        %280 = vst [vmem:[%s150 + $0x100] sm:%s142] %v279
        %v281 = vld [vmem:[%s149 + $0x108] sm:%s142]
        %282 = vst [vmem:[%s150 + $0x104] sm:%s142] %v281
        %v283 = vld [vmem:[%s149 + $0x104] sm:%s142]
        %284 = vst [vmem:[%s150 + $0x108] sm:%s142] %v283
        %v285 = vld [vmem:[%s149 + $0x10c] sm:%s142]
        %286 = vst [vmem:[%s150 + $0x10c] sm:%s142] %v285
        %v287 = vld [vmem:[%s149 + $0x110] sm:%s142]
        %288 = vst [vmem:[%s150 + $0x110] sm:%s142] %v287
        %v289 = vld [vmem:[%s149 + $0x118] sm:%s142]
        %290 = vst [vmem:[%s150 + $0x114] sm:%s142] %v289
        %v291 = vld [vmem:[%s149 + $0x114] sm:%s142]
        %292 = vst [vmem:[%s150 + $0x118] sm:%s142] %v291
        %v293 = vld [vmem:[%s149 + $0x11c] sm:%s142]
        %294 = vst [vmem:[%s150 + $0x11c] sm:%s142] %v293
        %v295 = vld [vmem:[%s149 + $0x120] sm:%s142]
        %296 = vst [vmem:[%s150 + $0x120] sm:%s142] %v295
        %v297 = vld [vmem:[%s149 + $0x128] sm:%s142]
        %298 = vst [vmem:[%s150 + $0x124] sm:%s142] %v297
        %v299 = vld [vmem:[%s149 + $0x124] sm:%s142]
        %300 = vst [vmem:[%s150 + $0x128] sm:%s142] %v299
        %v301 = vld [vmem:[%s149 + $0x12c] sm:%s142]
        %302 = vst [vmem:[%s150 + $0x12c] sm:%s142] %v301
        %v303 = vld [vmem:[%s149 + $0x130] sm:%s142]
        %304 = vst [vmem:[%s150 + $0x130] sm:%s142] %v303
        %v305 = vld [vmem:[%s149 + $0x138] sm:%s142]
        %306 = vst [vmem:[%s150 + $0x134] sm:%s142] %v305
        %v307 = vld [vmem:[%s149 + $0x134] sm:%s142]
        %308 = vst [vmem:[%s150 + $0x138] sm:%s142] %v307
        %v309 = vld [vmem:[%s149 + $0x13c] sm:%s142]
        %310 = vst [vmem:[%s150 + $0x13c] sm:%s142] %v309
        %v311 = vld [vmem:[%s149 + $0x140] sm:%s142]
        %312 = vst [vmem:[%s150 + $0x140] sm:%s142] %v311
        %v313 = vld [vmem:[%s149 + $0x148] sm:%s142]
        %314 = vst [vmem:[%s150 + $0x144] sm:%s142] %v313
        %v315 = vld [vmem:[%s149 + $0x144] sm:%s142]
        %316 = vst [vmem:[%s150 + $0x148] sm:%s142] %v315
        %v317 = vld [vmem:[%s149 + $0x14c] sm:%s142]
        %318 = vst [vmem:[%s150 + $0x14c] sm:%s142] %v317
        %v319 = vld [vmem:[%s149 + $0x150] sm:%s142]
        %320 = vst [vmem:[%s150 + $0x150] sm:%s142] %v319
        %v321 = vld [vmem:[%s149 + $0x158] sm:%s142]
        %322 = vst [vmem:[%s150 + $0x154] sm:%s142] %v321
        %v323 = vld [vmem:[%s149 + $0x154] sm:%s142]
        %324 = vst [vmem:[%s150 + $0x158] sm:%s142] %v323
        %v325 = vld [vmem:[%s149 + $0x15c] sm:%s142]
        %326 = vst [vmem:[%s150 + $0x15c] sm:%s142] %v325
        %v327 = vld [vmem:[%s149 + $0x160] sm:%s142]
        %328 = vst [vmem:[%s150 + $0x160] sm:%s142] %v327
        %v329 = vld [vmem:[%s149 + $0x168] sm:%s142]
        %330 = vst [vmem:[%s150 + $0x164] sm:%s142] %v329
        %v331 = vld [vmem:[%s149 + $0x164] sm:%s142]
        %332 = vst [vmem:[%s150 + $0x168] sm:%s142] %v331
        %v333 = vld [vmem:[%s149 + $0x16c] sm:%s142]
        %334 = vst [vmem:[%s150 + $0x16c] sm:%s142] %v333
        %v335 = vld [vmem:[%s149 + $0x170] sm:%s142]
        %336 = vst [vmem:[%s150 + $0x170] sm:%s142] %v335
        %v337 = vld [vmem:[%s149 + $0x178] sm:%s142]
        %338 = vst [vmem:[%s150 + $0x174] sm:%s142] %v337
        %v339 = vld [vmem:[%s149 + $0x174] sm:%s142]
        %340 = vst [vmem:[%s150 + $0x178] sm:%s142] %v339
        %v341 = vld [vmem:[%s149 + $0x17c] sm:%s142]
        %342 = vst [vmem:[%s150 + $0x17c] sm:%s142] %v341
        %v343 = vld [vmem:[%s149 + $0x180] sm:%s142]
        %344 = vst [vmem:[%s150 + $0x180] sm:%s142] %v343
        %v345 = vld [vmem:[%s149 + $0x188] sm:%s142]
        %346 = vst [vmem:[%s150 + $0x184] sm:%s142] %v345
        %v347 = vld [vmem:[%s149 + $0x184] sm:%s142]
        %348 = vst [vmem:[%s150 + $0x188] sm:%s142] %v347
        %v349 = vld [vmem:[%s149 + $0x18c] sm:%s142]
        %350 = vst [vmem:[%s150 + $0x18c] sm:%s142] %v349
        %v351 = vld [vmem:[%s149 + $0x190] sm:%s142]
        %352 = vst [vmem:[%s150 + $0x190] sm:%s142] %v351
        %v353 = vld [vmem:[%s149 + $0x198] sm:%s142]
        %354 = vst [vmem:[%s150 + $0x194] sm:%s142] %v353
        %v355 = vld [vmem:[%s149 + $0x194] sm:%s142]
        %356 = vst [vmem:[%s150 + $0x198] sm:%s142] %v355
        %v357 = vld [vmem:[%s149 + $0x19c] sm:%s142]
        %358 = vst [vmem:[%s150 + $0x19c] sm:%s142] %v357
        %v359 = vld [vmem:[%s149 + $0x1a0] sm:%s142]
        %360 = vst [vmem:[%s150 + $0x1a0] sm:%s142] %v359
        %v361 = vld [vmem:[%s149 + $0x1a8] sm:%s142]
        %362 = vst [vmem:[%s150 + $0x1a4] sm:%s142] %v361
        %v363 = vld [vmem:[%s149 + $0x1a4] sm:%s142]
        %364 = vst [vmem:[%s150 + $0x1a8] sm:%s142] %v363
        %v365 = vld [vmem:[%s149 + $0x1ac] sm:%s142]
        %366 = vst [vmem:[%s150 + $0x1ac] sm:%s142] %v365
        %v367 = vld [vmem:[%s149 + $0x1b0] sm:%s142]
        %368 = vst [vmem:[%s150 + $0x1b0] sm:%s142] %v367
        %v369 = vld [vmem:[%s149 + $0x1b8] sm:%s142]
        %370 = vst [vmem:[%s150 + $0x1b4] sm:%s142] %v369
        %v371 = vld [vmem:[%s149 + $0x1b4] sm:%s142]
        %372 = vst [vmem:[%s150 + $0x1b8] sm:%s142] %v371
        %v373 = vld [vmem:[%s149 + $0x1bc] sm:%s142]
        %374 = vst [vmem:[%s150 + $0x1bc] sm:%s142] %v373
        %v375 = vld [vmem:[%s149 + $0x1c0] sm:%s142]
        %376 = vst [vmem:[%s150 + $0x1c0] sm:%s142] %v375
        %v377 = vld [vmem:[%s149 + $0x1c8] sm:%s142]
        %378 = vst [vmem:[%s150 + $0x1c4] sm:%s142] %v377
        %v379 = vld [vmem:[%s149 + $0x1c4] sm:%s142]
        %380 = vst [vmem:[%s150 + $0x1c8] sm:%s142] %v379
        %v381 = vld [vmem:[%s149 + $0x1cc] sm:%s142]
        %382 = vst [vmem:[%s150 + $0x1cc] sm:%s142] %v381
        %v383 = vld [vmem:[%s149 + $0x1d0] sm:%s142]
        %384 = vst [vmem:[%s150 + $0x1d0] sm:%s142] %v383
        %v385 = vld [vmem:[%s149 + $0x1d8] sm:%s142]
        %386 = vst [vmem:[%s150 + $0x1d4] sm:%s142] %v385
        %v387 = vld [vmem:[%s149 + $0x1d4] sm:%s142]
        %388 = vst [vmem:[%s150 + $0x1d8] sm:%s142] %v387
        %v389 = vld [vmem:[%s149 + $0x1dc] sm:%s142]
        %390 = vst [vmem:[%s150 + $0x1dc] sm:%s142] %v389
        %v391 = vld [vmem:[%s149 + $0x1e0] sm:%s142]
        %392 = vst [vmem:[%s150 + $0x1e0] sm:%s142] %v391
        %v393 = vld [vmem:[%s149 + $0x1e8] sm:%s142]
        %394 = vst [vmem:[%s150 + $0x1e4] sm:%s142] %v393
        %v395 = vld [vmem:[%s149 + $0x1e4] sm:%s142]
        %396 = vst [vmem:[%s150 + $0x1e8] sm:%s142] %v395
        %v397 = vld [vmem:[%s149 + $0x1ec] sm:%s142]
        %398 = vst [vmem:[%s150 + $0x1ec] sm:%s142] %v397
        %v399 = vld [vmem:[%s149 + $0x1f0] sm:%s142]
        %400 = vst [vmem:[%s150 + $0x1f0] sm:%s142] %v399
        %v401 = vld [vmem:[%s149 + $0x1f8] sm:%s142]
        %402 = vst [vmem:[%s150 + $0x1f4] sm:%s142] %v401
        %v403 = vld [vmem:[%s149 + $0x1f4] sm:%s142]
        %404 = vst [vmem:[%s150 + $0x1f8] sm:%s142] %v403
        %v405 = vld [vmem:[%s149 + $0x1fc] sm:%s142]
        %406 = vst [vmem:[%s150 + $0x1fc] sm:%s142] %v405
      $region78: #{multimodal_rumor_detector.1} parent=72 // loop_footer
        %s148 = sadd.s32 1, %s144
      $region79: #{multimodal_rumor_detector.1} parent=72 // loop_footer_branch
        %143 = sbr.rel target = $region75
      $region80: #{multimodal_rumor_detector.1} parent=72 // loop_exit
        _
    $region73: #{multimodal_rumor_detector.1} parent=1 // pred_fallthru
      _
    // Predicated region
    $region99: #{multimodal_rumor_detector.1} parent=1 // pred_check
      _
    $region100: #{multimodal_rumor_detector.1} parent=1 // pred_check_branch
      %692 = sbr.rel (0) target = $region102
    $region101: #{multimodal_rumor_detector.1} parent=1 // pred_region
      %693 = vsyncadd %s133, 8192
    $region102: #{multimodal_rumor_detector.1} parent=1 // pred_fallthru
      _
    %v694 = vld [vmem:[#allocation11] sm:$0xff]
    %v695 = vld [vmem:[#allocation11 + $0x8] sm:$0xf]
    %v696 = vld [vmem:[#allocation11 + $0xc] sm:$0x3]
    %v697 = vld [vmem:[#allocation11 + $0xe] sm:$0x1]
    %v698 = vld [vmem:[#allocation11 + $0xf] sm:$0x1]
    %v699 = vld [vmem:[#allocation11 + $0x10] sm:$0x1]
    %v700 = vld [vmem:[#allocation11 + $0x11] sm:$0x1]
    %v701 = vld [vmem:[%s0] sm:$0xf]
    %v702 = vld [vmem:[%s0 + $0x4] sm:$0xf]
    %v703 = vld [vmem:[%s4] sm:$0xff]
    %v704 = vld [vmem:[%s4 + $0x8] sm:$0xff]
    %v705 = vld [vmem:[%s4 + $0x10] sm:$0xff]
    %v706 = vld [vmem:[%s4 + $0x18] sm:$0xff]
    %v707 = vld [vmem:[%s4 + $0x20] sm:$0xff]
    %v708 = vld [vmem:[%s4 + $0x28] sm:$0xff]
    %v709 = vld [vmem:[%s4 + $0x30] sm:$0xff]
    %v710 = vld [vmem:[%s4 + $0x38] sm:$0xff]
    %v711 = vld [vmem:[%s4 + $0x40] sm:$0xff]
    %v712 = vld [vmem:[%s4 + $0x48] sm:$0xff]
    %v713 = vld [vmem:[%s4 + $0x50] sm:$0xff]
    %v714 = vld [vmem:[%s4 + $0x58] sm:$0xff]
    %v715 = vld [vmem:[%s4 + $0x60] sm:$0xff]
    %v716 = vld [vmem:[%s4 + $0x68] sm:$0xff]
    %v717 = vld [vmem:[%s4 + $0x70] sm:$0xff]
    %v718 = vld [vmem:[%s4 + $0x78] sm:$0xff]
    %v719 = vld [vmem:[%s4 + $0x80] sm:$0xff]
    %v720 = vld [vmem:[%s4 + $0x88] sm:$0xff]
    %v721 = vld [vmem:[%s4 + $0x90] sm:$0xff]
    %v722 = vld [vmem:[%s4 + $0x98] sm:$0xff]
    %v723 = vld [vmem:[%s4 + $0xa0] sm:$0xff]
    %v724 = vld [vmem:[%s4 + $0xa8] sm:$0xff]
    %v725 = vld [vmem:[%s4 + $0xb0] sm:$0xff]
    %v726 = vld [vmem:[%s4 + $0xb8] sm:$0xff]
    %v727 = vld [vmem:[%s4 + $0xc0] sm:$0xff]
    %v728 = vld [vmem:[%s4 + $0xc8] sm:$0xff]
    %v729 = vld [vmem:[%s4 + $0xd0] sm:$0xff]
    %v730 = vld [vmem:[%s4 + $0xd8] sm:$0xff]
    %v731 = vld [vmem:[%s4 + $0xe0] sm:$0xff]
    %v732 = vld [vmem:[%s4 + $0xe8] sm:$0xff]
    %v733 = vld [vmem:[%s4 + $0xf0] sm:$0xff]
    %v734 = vld [vmem:[%s4 + $0xf8] sm:$0xff]
    %v736 = vlaneseq
    %v737 = vshrl.u32 %v736, 7
    %v738 = vsub.s32 0, %v737
    %v739 = vrot.slane %v694, %v738
    %v740 = vlaneseq
    %v741 = vshrl.u32 %v740, 7
    %v742 = vsub.s32 1, %v741
    %v743 = vrot.slane %v694, %v742
    %v744 = vlaneseq
    %v745 = vshrl.u32 %v744, 7
    %v746 = vsub.s32 2, %v745
    %v747 = vrot.slane %v694, %v746
    %v748 = vlaneseq
    %v749 = vshrl.u32 %v748, 7
    %v750 = vsub.s32 3, %v749
    %v751 = vrot.slane %v694, %v750
    %v752 = vlaneseq
    %v753 = vshrl.u32 %v752, 7
    %v754 = vsub.s32 4, %v753
    %v755 = vrot.slane %v694, %v754
    %v756 = vlaneseq
    %v757 = vshrl.u32 %v756, 7
    %v758 = vsub.s32 5, %v757
    %v759 = vrot.slane %v694, %v758
    %v760 = vlaneseq
    %v761 = vshrl.u32 %v760, 7
    %v762 = vsub.s32 6, %v761
    %v763 = vrot.slane %v694, %v762
    %v764 = vlaneseq
    %v765 = vshrl.u32 %v764, 7
    %v766 = vsub.s32 7, %v765
    %v767 = vrot.slane %v694, %v766
    %v778 = vunpack.c.l.b16 %v701
    %v779 = vunpack.c.l.b16 %v702
    %v780 = vpack.c.b16 %v779, %v778
    %v813 = vunpack.c.l.b16 %v703
    %v814 = vunpack.c.h.b16 %v703
    %v815 = vunpack.c.l.b16 %v704
    %v816 = vunpack.c.h.b16 %v704
    %v817 = vunpack.c.l.b16 %v705
    %v818 = vunpack.c.h.b16 %v705
    %v819 = vunpack.c.l.b16 %v706
    %v820 = vunpack.c.h.b16 %v706
    %v821 = vunpack.c.l.b16 %v707
    %v822 = vunpack.c.h.b16 %v707
    %v823 = vunpack.c.l.b16 %v708
    %v824 = vunpack.c.h.b16 %v708
    %v825 = vunpack.c.l.b16 %v709
    %v826 = vunpack.c.h.b16 %v709
    %v827 = vunpack.c.l.b16 %v710
    %v828 = vunpack.c.h.b16 %v710
    %v829 = vunpack.c.l.b16 %v711
    %v830 = vunpack.c.h.b16 %v711
    %v831 = vunpack.c.l.b16 %v712
    %v832 = vunpack.c.h.b16 %v712
    %v833 = vunpack.c.l.b16 %v713
    %v834 = vunpack.c.h.b16 %v713
    %v835 = vunpack.c.l.b16 %v714
    %v836 = vunpack.c.h.b16 %v714
    %v837 = vunpack.c.l.b16 %v715
    %v838 = vunpack.c.h.b16 %v715
    %v839 = vunpack.c.l.b16 %v716
    %v840 = vunpack.c.h.b16 %v716
    %v841 = vunpack.c.l.b16 %v717
    %v842 = vunpack.c.h.b16 %v717
    %v843 = vunpack.c.l.b16 %v718
    %v844 = vunpack.c.h.b16 %v718
    %v845 = vunpack.c.l.b16 %v719
    %v846 = vunpack.c.h.b16 %v719
    %v847 = vunpack.c.l.b16 %v720
    %v848 = vunpack.c.h.b16 %v720
    %v849 = vunpack.c.l.b16 %v721
    %v850 = vunpack.c.h.b16 %v721
    %v851 = vunpack.c.l.b16 %v722
    %v852 = vunpack.c.h.b16 %v722
    %v853 = vunpack.c.l.b16 %v723
    %v854 = vunpack.c.h.b16 %v723
    %v855 = vunpack.c.l.b16 %v724
    %v856 = vunpack.c.h.b16 %v724
    %v857 = vunpack.c.l.b16 %v725
    %v858 = vunpack.c.h.b16 %v725
    %v859 = vunpack.c.l.b16 %v726
    %v860 = vunpack.c.h.b16 %v726
    %v861 = vunpack.c.l.b16 %v727
    %v862 = vunpack.c.h.b16 %v727
    %v863 = vunpack.c.l.b16 %v728
    %v864 = vunpack.c.h.b16 %v728
    %v865 = vunpack.c.l.b16 %v729
    %v866 = vunpack.c.h.b16 %v729
    %v867 = vunpack.c.l.b16 %v730
    %v868 = vunpack.c.h.b16 %v730
    %v869 = vunpack.c.l.b16 %v731
    %v870 = vunpack.c.h.b16 %v731
    %v871 = vunpack.c.l.b16 %v732
    %v872 = vunpack.c.h.b16 %v732
    %v873 = vunpack.c.l.b16 %v733
    %v874 = vunpack.c.h.b16 %v733
    %v875 = vunpack.c.l.b16 %v734
    %v876 = vunpack.c.h.b16 %v734
    %v877 = vpack.c.b16 %v821, %v813
    %v878 = vpack.c.b16 %v822, %v814
    %v879 = vpack.c.b16 %v823, %v815
    %v880 = vpack.c.b16 %v824, %v816
    %v881 = vpack.c.b16 %v825, %v817
    %v882 = vpack.c.b16 %v826, %v818
    %v883 = vpack.c.b16 %v827, %v819
    %v884 = vpack.c.b16 %v828, %v820
    %v885 = vpack.c.b16 %v837, %v829
    %v886 = vpack.c.b16 %v838, %v830
    %v887 = vpack.c.b16 %v839, %v831
    %v888 = vpack.c.b16 %v840, %v832
    %v889 = vpack.c.b16 %v841, %v833
    %v890 = vpack.c.b16 %v842, %v834
    %v891 = vpack.c.b16 %v843, %v835
    %v892 = vpack.c.b16 %v844, %v836
    %v893 = vpack.c.b16 %v853, %v845
    %v894 = vpack.c.b16 %v854, %v846
    %v895 = vpack.c.b16 %v855, %v847
    %v896 = vpack.c.b16 %v856, %v848
    %v897 = vpack.c.b16 %v857, %v849
    %v898 = vpack.c.b16 %v858, %v850
    %v899 = vpack.c.b16 %v859, %v851
    %v900 = vpack.c.b16 %v860, %v852
    %v901 = vpack.c.b16 %v869, %v861
    %v902 = vpack.c.b16 %v870, %v862
    %v903 = vpack.c.b16 %v871, %v863
    %v904 = vpack.c.b16 %v872, %v864
    %v905 = vpack.c.b16 %v873, %v865
    %v906 = vpack.c.b16 %v874, %v866
    %v907 = vpack.c.b16 %v875, %v867
    %v908 = vpack.c.b16 %v876, %v868
    %vm941 = vcmask 523264
    %v943 = vsel %vm941, %v780, 0
    %945 = vmatprep.subr.bf16.mxu0 %v878
    %946 = vmatpush1.bf16.msra.mxu0 %v877
    %947 = vmatprep.subr.bf16.mxu0 %v886
    %948 = vmatpush1.bf16.msra.mxu0 %v885
    %949 = vmatprep.subr.bf16.mxu0 %v894
    %950 = vmatpush1.bf16.msra.mxu0 %v893
    %951 = vmatprep.subr.bf16.mxu0 %v902
    %952 = vmatpush1.bf16.msra.mxu0 %v901
    %953 = vmatprep.subr.bf16.mxu0 0
    %954 = vmatpush1.bf16.msra.mxu0 0
    %955 = vmatprep.subr.bf16.mxu0 0
    %956 = vmatpush1.bf16.msra.mxu0 0
    %957 = vmatprep.subr.bf16.mxu0 0
    %958 = vmatpush1.bf16.msra.mxu0 0
    %959 = vmatprep.subr.bf16.mxu0 0
    %960 = vmatpush1.bf16.msra.mxu0 0
    %961 = vmatprep.subr.bf16.mxu0 0
    %962 = vmatpush1.bf16.msra.mxu0 0
    %963 = vmatprep.subr.bf16.mxu0 0
    %964 = vmatpush1.bf16.msra.mxu0 0
    %965 = vmatprep.subr.bf16.mxu0 0
    %966 = vmatpush1.bf16.msra.mxu0 0
    %967 = vmatprep.subr.bf16.mxu0 0
    %968 = vmatpush1.bf16.msra.mxu0 0
    %969 = vmatprep.subr.bf16.mxu0 0
    %970 = vmatpush1.bf16.msra.mxu0 0
    %971 = vmatprep.subr.bf16.mxu0 0
    %972 = vmatpush1.bf16.msra.mxu0 0
    %973 = vmatprep.subr.bf16.mxu0 0
    %974 = vmatpush1.bf16.msra.mxu0 0
    %975 = vmatprep.subr.bf16.mxu0 0
    %976 = vmatpush1.bf16.msra.mxu0 0
    %977 = vmatprep.mubr.bf16.mxu0 0
    %978 = vmatmul.mubr.bf16.gmra.mrb[0].mxu0 %v943
    %v979 = vpop.f32.mrb[0].mxu0
    %v980 = vadd.f32 %v739, %v979
    %v981 = vpop.f32.mrb[0].mxu0
    %v982 = vadd.f32 %v743, %v981
    %v983 = vpop.f32.mrb[0].mxu0
    %v984 = vadd.f32 %v739, %v983
    %v985 = vpop.f32.mrb[0].mxu0
    %v986 = vadd.f32 %v743, %v985
    %987 = vdwg.mxu0
    %988 = vmatprep.subr.bf16.mxu0 %v880
    %989 = vmatpush1.bf16.msra.mxu0 %v879
    %990 = vmatprep.subr.bf16.mxu0 %v888
    %991 = vmatpush1.bf16.msra.mxu0 %v887
    %992 = vmatprep.subr.bf16.mxu0 %v896
    %993 = vmatpush1.bf16.msra.mxu0 %v895
    %994 = vmatprep.subr.bf16.mxu0 %v904
    %995 = vmatpush1.bf16.msra.mxu0 %v903
    %996 = vmatprep.subr.bf16.mxu0 0
    %997 = vmatpush1.bf16.msra.mxu0 0
    %998 = vmatprep.subr.bf16.mxu0 0
    %999 = vmatpush1.bf16.msra.mxu0 0
    %1000 = vmatprep.subr.bf16.mxu0 0
    %1001 = vmatpush1.bf16.msra.mxu0 0
    %1002 = vmatprep.subr.bf16.mxu0 0
    %1003 = vmatpush1.bf16.msra.mxu0 0
    %1004 = vmatprep.subr.bf16.mxu0 0
    %1005 = vmatpush1.bf16.msra.mxu0 0
    %1006 = vmatprep.subr.bf16.mxu0 0
    %1007 = vmatpush1.bf16.msra.mxu0 0
    %1008 = vmatprep.subr.bf16.mxu0 0
    %1009 = vmatpush1.bf16.msra.mxu0 0
    %1010 = vmatprep.subr.bf16.mxu0 0
    %1011 = vmatpush1.bf16.msra.mxu0 0
    %1012 = vmatprep.subr.bf16.mxu0 0
    %1013 = vmatpush1.bf16.msra.mxu0 0
    %1014 = vmatprep.subr.bf16.mxu0 0
    %1015 = vmatpush1.bf16.msra.mxu0 0
    %1016 = vmatprep.subr.bf16.mxu0 0
    %1017 = vmatpush1.bf16.msra.mxu0 0
    %1018 = vmatprep.subr.bf16.mxu0 0
    %1019 = vmatpush1.bf16.msra.mxu0 0
    %1020 = vmatprep.mubr.bf16.mxu0 0
    %1021 = vmatmul.mubr.bf16.gmra.mrb[0].mxu0 %v943
    %v1022 = vpop.f32.mrb[0].mxu0
    %v1023 = vadd.f32 %v747, %v1022
    %v1024 = vpop.f32.mrb[0].mxu0
    %v1025 = vadd.f32 %v751, %v1024
    %v1026 = vpop.f32.mrb[0].mxu0
    %v1027 = vadd.f32 %v747, %v1026
    %v1028 = vpop.f32.mrb[0].mxu0
    %v1029 = vadd.f32 %v751, %v1028
    %1030 = vdwg.mxu0
    %1031 = vmatprep.subr.bf16.mxu0 %v882
    %1032 = vmatpush1.bf16.msra.mxu0 %v881
    %1033 = vmatprep.subr.bf16.mxu0 %v890
    %1034 = vmatpush1.bf16.msra.mxu0 %v889
    %1035 = vmatprep.subr.bf16.mxu0 %v898
    %1036 = vmatpush1.bf16.msra.mxu0 %v897
    %1037 = vmatprep.subr.bf16.mxu0 %v906
    %1038 = vmatpush1.bf16.msra.mxu0 %v905
    %1039 = vmatprep.subr.bf16.mxu0 0
    %1040 = vmatpush1.bf16.msra.mxu0 0
    %1041 = vmatprep.subr.bf16.mxu0 0
    %1042 = vmatpush1.bf16.msra.mxu0 0
    %1043 = vmatprep.subr.bf16.mxu0 0
    %1044 = vmatpush1.bf16.msra.mxu0 0
    %1045 = vmatprep.subr.bf16.mxu0 0
    %1046 = vmatpush1.bf16.msra.mxu0 0
    %1047 = vmatprep.subr.bf16.mxu0 0
    %1048 = vmatpush1.bf16.msra.mxu0 0
    %1049 = vmatprep.subr.bf16.mxu0 0
    %1050 = vmatpush1.bf16.msra.mxu0 0
    %1051 = vmatprep.subr.bf16.mxu0 0
    %1052 = vmatpush1.bf16.msra.mxu0 0
    %1053 = vmatprep.subr.bf16.mxu0 0
    %1054 = vmatpush1.bf16.msra.mxu0 0
    %1055 = vmatprep.subr.bf16.mxu0 0
    %1056 = vmatpush1.bf16.msra.mxu0 0
    %1057 = vmatprep.subr.bf16.mxu0 0
    %1058 = vmatpush1.bf16.msra.mxu0 0
    %1059 = vmatprep.subr.bf16.mxu0 0
    %1060 = vmatpush1.bf16.msra.mxu0 0
    %1061 = vmatprep.subr.bf16.mxu0 0
    %1062 = vmatpush1.bf16.msra.mxu0 0
    %1063 = vmatprep.mubr.bf16.mxu0 0
    %1064 = vmatmul.mubr.bf16.gmra.mrb[0].mxu0 %v943
    %v1065 = vpop.f32.mrb[0].mxu0
    %v1066 = vadd.f32 %v755, %v1065
    %v1067 = vpop.f32.mrb[0].mxu0
    %v1068 = vadd.f32 %v759, %v1067
    %v1069 = vpop.f32.mrb[0].mxu0
    %v1070 = vadd.f32 %v755, %v1069
    %v1071 = vpop.f32.mrb[0].mxu0
    %v1072 = vadd.f32 %v759, %v1071
    %1073 = vdwg.mxu0
    %1074 = vmatprep.subr.bf16.mxu0 %v884
    %1075 = vmatpush1.bf16.msra.mxu0 %v883
    %1076 = vmatprep.subr.bf16.mxu0 %v892
    %1077 = vmatpush1.bf16.msra.mxu0 %v891
    %1078 = vmatprep.subr.bf16.mxu0 %v900
    %1079 = vmatpush1.bf16.msra.mxu0 %v899
    %1080 = vmatprep.subr.bf16.mxu0 %v908
    %1081 = vmatpush1.bf16.msra.mxu0 %v907
    %1082 = vmatprep.subr.bf16.mxu0 0
    %1083 = vmatpush1.bf16.msra.mxu0 0
    %1084 = vmatprep.subr.bf16.mxu0 0
    %1085 = vmatpush1.bf16.msra.mxu0 0
    %1086 = vmatprep.subr.bf16.mxu0 0
    %1087 = vmatpush1.bf16.msra.mxu0 0
    %1088 = vmatprep.subr.bf16.mxu0 0
    %1089 = vmatpush1.bf16.msra.mxu0 0
    %1090 = vmatprep.subr.bf16.mxu0 0
    %1091 = vmatpush1.bf16.msra.mxu0 0
    %1092 = vmatprep.subr.bf16.mxu0 0
    %1093 = vmatpush1.bf16.msra.mxu0 0
    %1094 = vmatprep.subr.bf16.mxu0 0
    %1095 = vmatpush1.bf16.msra.mxu0 0
    %1096 = vmatprep.subr.bf16.mxu0 0
    %1097 = vmatpush1.bf16.msra.mxu0 0
    %1098 = vmatprep.subr.bf16.mxu0 0
    %1099 = vmatpush1.bf16.msra.mxu0 0
    %1100 = vmatprep.subr.bf16.mxu0 0
    %1101 = vmatpush1.bf16.msra.mxu0 0
    %1102 = vmatprep.subr.bf16.mxu0 0
    %1103 = vmatpush1.bf16.msra.mxu0 0
    %1104 = vmatprep.subr.bf16.mxu0 0
    %1105 = vmatpush1.bf16.msra.mxu0 0
    %1106 = vmatprep.mubr.bf16.mxu0 0
    %1107 = vmatmul.mubr.bf16.gmra.mrb[0].mxu0 %v943
    %v1108 = vpop.f32.mrb[0].mxu0
    %v1109 = vadd.f32 %v763, %v1108
    %v1110 = vpop.f32.mrb[0].mxu0
    %v1111 = vadd.f32 %v767, %v1110
    %v1112 = vpop.f32.mrb[0].mxu0
    %v1113 = vadd.f32 %v763, %v1112
    %v1114 = vpop.f32.mrb[0].mxu0
    %v1115 = vadd.f32 %v767, %v1114
    %1116 = vdwg.mxu0
    %v1117 = vld [vmem:[%s1] sm:$0x3]
    %1118 = vset.pattern.permute.xlu0 0
    %1119 = vperm.xlu0 %1118, %v1117
    %v1120 = vpop.permute.xlu0 %1119
    %v1121 = vld [vmem:[%s5] sm:$0xff]
    %v1122 = vld [vmem:[%s5 + $0x8] sm:$0xff]
    %v1123 = vld [vmem:[%s5 + $0x20] sm:$0xff]
    %v1124 = vld [vmem:[%s5 + $0x28] sm:$0xff]
    %v1125 = vld [vmem:[%s5 + $0x40] sm:$0xff]
    %v1126 = vld [vmem:[%s5 + $0x48] sm:$0xff]
    %v1127 = vld [vmem:[%s5 + $0x60] sm:$0xff]
    %v1128 = vld [vmem:[%s5 + $0x68] sm:$0xff]
    %v1129 = vld [vmem:[%s5 + $0x80] sm:$0xff]
    %v1130 = vld [vmem:[%s5 + $0x88] sm:$0xff]
    %v1131 = vld [vmem:[%s5 + $0xa0] sm:$0xff]
    %v1132 = vld [vmem:[%s5 + $0xa8] sm:$0xff]
    %v1133 = vld [vmem:[%s5 + $0xc0] sm:$0xff]
    %v1134 = vld [vmem:[%s5 + $0xc8] sm:$0xff]
    %v1135 = vld [vmem:[%s5 + $0xe0] sm:$0xff]
    %v1136 = vld [vmem:[%s5 + $0xe8] sm:$0xff]
    %v1137 = vld [vmem:[%s5 + $0x100] sm:$0xff]
    %v1138 = vld [vmem:[%s5 + $0x108] sm:$0xff]
    %v1139 = vld [vmem:[%s5 + $0x120] sm:$0xff]
    %v1140 = vld [vmem:[%s5 + $0x128] sm:$0xff]
    %v1141 = vld [vmem:[%s5 + $0x140] sm:$0xff]
    %v1142 = vld [vmem:[%s5 + $0x148] sm:$0xff]
    %v1143 = vld [vmem:[%s5 + $0x160] sm:$0xff]
    %v1144 = vld [vmem:[%s5 + $0x168] sm:$0xff]
    %v1145 = vld [vmem:[%s5 + $0x180] sm:$0xff]
    %v1146 = vld [vmem:[%s5 + $0x188] sm:$0xff]
    %v1147 = vld [vmem:[%s5 + $0x1a0] sm:$0xff]
    %v1148 = vld [vmem:[%s5 + $0x1a8] sm:$0xff]
    %v1149 = vld [vmem:[%s5 + $0x1c0] sm:$0xff]
    %v1150 = vld [vmem:[%s5 + $0x1c8] sm:$0xff]
    %v1151 = vld [vmem:[%s5 + $0x1e0] sm:$0xff]
    %v1152 = vld [vmem:[%s5 + $0x1e8] sm:$0xff]
    %v1153 = vld [vmem:[%s5 + $0x10] sm:$0xff]
    %v1154 = vld [vmem:[%s5 + $0x18] sm:$0xff]
    %v1155 = vld [vmem:[%s5 + $0x30] sm:$0xff]
    %v1156 = vld [vmem:[%s5 + $0x38] sm:$0xff]
    %v1157 = vld [vmem:[%s5 + $0x50] sm:$0xff]
    %v1158 = vld [vmem:[%s5 + $0x58] sm:$0xff]
    %v1159 = vld [vmem:[%s5 + $0x70] sm:$0xff]
    %v1160 = vld [vmem:[%s5 + $0x78] sm:$0xff]
    %v1161 = vld [vmem:[%s5 + $0x90] sm:$0xff]
    %v1162 = vld [vmem:[%s5 + $0x98] sm:$0xff]
    %v1163 = vld [vmem:[%s5 + $0xb0] sm:$0xff]
    %v1164 = vld [vmem:[%s5 + $0xb8] sm:$0xff]
    %v1165 = vld [vmem:[%s5 + $0xd0] sm:$0xff]
    %v1166 = vld [vmem:[%s5 + $0xd8] sm:$0xff]
    %v1167 = vld [vmem:[%s5 + $0xf0] sm:$0xff]
    %v1168 = vld [vmem:[%s5 + $0xf8] sm:$0xff]
    %v1169 = vld [vmem:[%s5 + $0x110] sm:$0xff]
    %v1170 = vld [vmem:[%s5 + $0x118] sm:$0xff]
    %v1171 = vld [vmem:[%s5 + $0x130] sm:$0xff]
    %v1172 = vld [vmem:[%s5 + $0x138] sm:$0xff]
    %v1173 = vld [vmem:[%s5 + $0x150] sm:$0xff]
    %v1174 = vld [vmem:[%s5 + $0x158] sm:$0xff]
    %v1175 = vld [vmem:[%s5 + $0x170] sm:$0xff]
    %v1176 = vld [vmem:[%s5 + $0x178] sm:$0xff]
    %v1177 = vld [vmem:[%s5 + $0x190] sm:$0xff]
    %v1178 = vld [vmem:[%s5 + $0x198] sm:$0xff]
    %v1179 = vld [vmem:[%s5 + $0x1b0] sm:$0xff]
    %v1180 = vld [vmem:[%s5 + $0x1b8] sm:$0xff]
    %v1181 = vld [vmem:[%s5 + $0x1d0] sm:$0xff]
    %v1182 = vld [vmem:[%s5 + $0x1d8] sm:$0xff]
    %v1183 = vld [vmem:[%s5 + $0x1f0] sm:$0xff]
    %v1184 = vld [vmem:[%s5 + $0x1f8] sm:$0xff]
    %v1217 = vunpack.c.l.b16 %v1121
    %v1218 = vunpack.c.h.b16 %v1121
    %v1219 = vunpack.c.l.b16 %v1122
    %v1220 = vunpack.c.h.b16 %v1122
    %v1221 = vunpack.c.l.b16 %v1123
    %v1222 = vunpack.c.h.b16 %v1123
    %v1223 = vunpack.c.l.b16 %v1124
    %v1224 = vunpack.c.h.b16 %v1124
    %v1225 = vunpack.c.l.b16 %v1125
    %v1226 = vunpack.c.h.b16 %v1125
    %v1227 = vunpack.c.l.b16 %v1126
    %v1228 = vunpack.c.h.b16 %v1126
    %v1229 = vunpack.c.l.b16 %v1127
    %v1230 = vunpack.c.h.b16 %v1127
    %v1231 = vunpack.c.l.b16 %v1128
    %v1232 = vunpack.c.h.b16 %v1128
    %v1233 = vunpack.c.l.b16 %v1129
    %v1234 = vunpack.c.h.b16 %v1129
    %v1235 = vunpack.c.l.b16 %v1130
    %v1236 = vunpack.c.h.b16 %v1130
    %v1237 = vunpack.c.l.b16 %v1131
    %v1238 = vunpack.c.h.b16 %v1131
    %v1239 = vunpack.c.l.b16 %v1132
    %v1240 = vunpack.c.h.b16 %v1132
    %v1241 = vunpack.c.l.b16 %v1133
    %v1242 = vunpack.c.h.b16 %v1133
    %v1243 = vunpack.c.l.b16 %v1134
    %v1244 = vunpack.c.h.b16 %v1134
    %v1245 = vunpack.c.l.b16 %v1135
    %v1246 = vunpack.c.h.b16 %v1135
    %v1247 = vunpack.c.l.b16 %v1136
    %v1248 = vunpack.c.h.b16 %v1136
    %v1249 = vunpack.c.l.b16 %v1137
    %v1250 = vunpack.c.h.b16 %v1137
    %v1251 = vunpack.c.l.b16 %v1138
    %v1252 = vunpack.c.h.b16 %v1138
    %v1253 = vunpack.c.l.b16 %v1139
    %v1254 = vunpack.c.h.b16 %v1139
    %v1255 = vunpack.c.l.b16 %v1140
    %v1256 = vunpack.c.h.b16 %v1140
    %v1257 = vunpack.c.l.b16 %v1141
    %v1258 = vunpack.c.h.b16 %v1141
    %v1259 = vunpack.c.l.b16 %v1142
    %v1260 = vunpack.c.h.b16 %v1142
    %v1261 = vunpack.c.l.b16 %v1143
    %v1262 = vunpack.c.h.b16 %v1143
    %v1263 = vunpack.c.l.b16 %v1144
    %v1264 = vunpack.c.h.b16 %v1144
    %v1265 = vunpack.c.l.b16 %v1145
    %v1266 = vunpack.c.h.b16 %v1145
    %v1267 = vunpack.c.l.b16 %v1146
    %v1268 = vunpack.c.h.b16 %v1146
    %v1269 = vunpack.c.l.b16 %v1147
    %v1270 = vunpack.c.h.b16 %v1147
    %v1271 = vunpack.c.l.b16 %v1148
    %v1272 = vunpack.c.h.b16 %v1148
    %v1273 = vunpack.c.l.b16 %v1149
    %v1274 = vunpack.c.h.b16 %v1149
    %v1275 = vunpack.c.l.b16 %v1150
    %v1276 = vunpack.c.h.b16 %v1150
    %v1277 = vunpack.c.l.b16 %v1151
    %v1278 = vunpack.c.h.b16 %v1151
    %v1279 = vunpack.c.l.b16 %v1152
    %v1280 = vunpack.c.h.b16 %v1152
    %v1281 = vpack.c.b16 %v1221, %v1217
    %v1282 = vpack.c.b16 %v1222, %v1218
    %v1283 = vpack.c.b16 %v1223, %v1219
    %v1284 = vpack.c.b16 %v1224, %v1220
    %v1285 = vpack.c.b16 %v1229, %v1225
    %v1286 = vpack.c.b16 %v1230, %v1226
    %v1287 = vpack.c.b16 %v1231, %v1227
    %v1288 = vpack.c.b16 %v1232, %v1228
    %v1289 = vpack.c.b16 %v1237, %v1233
    %v1290 = vpack.c.b16 %v1238, %v1234
    %v1291 = vpack.c.b16 %v1239, %v1235
    %v1292 = vpack.c.b16 %v1240, %v1236
    %v1293 = vpack.c.b16 %v1245, %v1241
    %v1294 = vpack.c.b16 %v1246, %v1242
    %v1295 = vpack.c.b16 %v1247, %v1243
    %v1296 = vpack.c.b16 %v1248, %v1244
    %v1297 = vpack.c.b16 %v1253, %v1249
    %v1298 = vpack.c.b16 %v1254, %v1250
    %v1299 = vpack.c.b16 %v1255, %v1251
    %v1300 = vpack.c.b16 %v1256, %v1252
    %v1301 = vpack.c.b16 %v1261, %v1257
    %v1302 = vpack.c.b16 %v1262, %v1258
    %v1303 = vpack.c.b16 %v1263, %v1259
    %v1304 = vpack.c.b16 %v1264, %v1260
    %v1305 = vpack.c.b16 %v1269, %v1265
    %v1306 = vpack.c.b16 %v1270, %v1266
    %v1307 = vpack.c.b16 %v1271, %v1267
    %v1308 = vpack.c.b16 %v1272, %v1268
    %v1309 = vpack.c.b16 %v1277, %v1273
    %v1310 = vpack.c.b16 %v1278, %v1274
    %v1311 = vpack.c.b16 %v1279, %v1275
    %v1312 = vpack.c.b16 %v1280, %v1276
    %1345 = vmatprep.subr.bf16.mxu0 %v1282
    %1346 = vmatpush1.bf16.msra.mxu0 %v1281
    %1347 = vmatprep.subr.bf16.mxu0 %v1286
    %1348 = vmatpush1.bf16.msra.mxu0 %v1285
    %1349 = vmatprep.subr.bf16.mxu0 %v1290
    %1350 = vmatpush1.bf16.msra.mxu0 %v1289
    %1351 = vmatprep.subr.bf16.mxu0 %v1294
    %1352 = vmatpush1.bf16.msra.mxu0 %v1293
    %1353 = vmatprep.subr.bf16.mxu0 %v1298
    %1354 = vmatpush1.bf16.msra.mxu0 %v1297
    %1355 = vmatprep.subr.bf16.mxu0 %v1302
    %1356 = vmatpush1.bf16.msra.mxu0 %v1301
    %1357 = vmatprep.subr.bf16.mxu0 %v1306
    %1358 = vmatpush1.bf16.msra.mxu0 %v1305
    %1359 = vmatprep.subr.bf16.mxu0 %v1310
    %1360 = vmatpush1.bf16.msra.mxu0 %v1309
    %1361 = vmatprep.subr.bf16.mxu0 0
    %1362 = vmatpush1.bf16.msra.mxu0 0
    %1363 = vmatprep.subr.bf16.mxu0 0
    %1364 = vmatpush1.bf16.msra.mxu0 0
    %1365 = vmatprep.subr.bf16.mxu0 0
    %1366 = vmatpush1.bf16.msra.mxu0 0
    %1367 = vmatprep.subr.bf16.mxu0 0
    %1368 = vmatpush1.bf16.msra.mxu0 0
    %1369 = vmatprep.subr.bf16.mxu0 0
    %1370 = vmatpush1.bf16.msra.mxu0 0
    %1371 = vmatprep.subr.bf16.mxu0 0
    %1372 = vmatpush1.bf16.msra.mxu0 0
    %1373 = vmatprep.subr.bf16.mxu0 0
    %1374 = vmatpush1.bf16.msra.mxu0 0
    %1375 = vmatprep.subr.bf16.mxu0 0
    %1376 = vmatpush1.bf16.msra.mxu0 0
    %1377 = vmatprep.mubr.bf16.mxu0 0
    %1378 = vmatmul.mubr.bf16.gmra.mrb[0].mxu0 0
    %v1379 = vpop.f32.mrb[0].mxu0
    %v1380 = vadd.f32 0.0, %v1379
    %v1381 = vpop.f32.mrb[0].mxu0
    %v1382 = vadd.f32 0.0, %v1381
    %v1383 = vpop.f32.mrb[0].mxu0
    %v1384 = vpop.f32.mrb[0].mxu0
    %1385 = vdwg.mxu0
    %1386 = vmatprep.subr.bf16.mxu0 %v1284
    %1387 = vmatpush1.bf16.msra.mxu0 %v1283
    %1388 = vmatprep.subr.bf16.mxu0 %v1288
    %1389 = vmatpush1.bf16.msra.mxu0 %v1287
    %1390 = vmatprep.subr.bf16.mxu0 %v1292
    %1391 = vmatpush1.bf16.msra.mxu0 %v1291
    %1392 = vmatprep.subr.bf16.mxu0 %v1296
    %1393 = vmatpush1.bf16.msra.mxu0 %v1295
    %1394 = vmatprep.subr.bf16.mxu0 %v1300
    %1395 = vmatpush1.bf16.msra.mxu0 %v1299
    %1396 = vmatprep.subr.bf16.mxu0 %v1304
    %1397 = vmatpush1.bf16.msra.mxu0 %v1303
    %1398 = vmatprep.subr.bf16.mxu0 %v1308
    %1399 = vmatpush1.bf16.msra.mxu0 %v1307
    %1400 = vmatprep.subr.bf16.mxu0 %v1312
    %1401 = vmatpush1.bf16.msra.mxu0 %v1311
    %1402 = vmatprep.subr.bf16.mxu0 0
    %1403 = vmatpush1.bf16.msra.mxu0 0
    %1404 = vmatprep.subr.bf16.mxu0 0
    %1405 = vmatpush1.bf16.msra.mxu0 0
    %1406 = vmatprep.subr.bf16.mxu0 0
    %1407 = vmatpush1.bf16.msra.mxu0 0
    %1408 = vmatprep.subr.bf16.mxu0 0
    %1409 = vmatpush1.bf16.msra.mxu0 0
    %1410 = vmatprep.subr.bf16.mxu0 0
    %1411 = vmatpush1.bf16.msra.mxu0 0
    %1412 = vmatprep.subr.bf16.mxu0 0
    %1413 = vmatpush1.bf16.msra.mxu0 0
    %1414 = vmatprep.subr.bf16.mxu0 0
    %1415 = vmatpush1.bf16.msra.mxu0 0
    %1416 = vmatprep.subr.bf16.mxu0 0
    %1417 = vmatpush1.bf16.msra.mxu0 0
    %1418 = vmatprep.mubr.bf16.mxu0 0
    %1419 = vmatmul.mubr.bf16.gmra.mrb[0].mxu0 0
    %v1420 = vpop.f32.mrb[0].mxu0
    %v1421 = vadd.f32 0.0, %v1420
    %v1422 = vpop.f32.mrb[0].mxu0
    %v1423 = vadd.f32 0.0, %v1422
    %v1424 = vpop.f32.mrb[0].mxu0
    %v1425 = vpop.f32.mrb[0].mxu0
    %1426 = vdwg.mxu0
    %v1427 = vadd.f32 %v980, %v1380
    %v1428 = vadd.f32 %v982, %v1382
    %v1429 = vadd.f32 %v1023, %v1421
    %v1430 = vadd.f32 %v1025, %v1423
    %v1463 = vunpack.c.l.b16 %v1153
    %v1464 = vunpack.c.h.b16 %v1153
    %v1465 = vunpack.c.l.b16 %v1154
    %v1466 = vunpack.c.h.b16 %v1154
    %v1467 = vunpack.c.l.b16 %v1155
    %v1468 = vunpack.c.h.b16 %v1155
    %v1469 = vunpack.c.l.b16 %v1156
    %v1470 = vunpack.c.h.b16 %v1156
    %v1471 = vunpack.c.l.b16 %v1157
    %v1472 = vunpack.c.h.b16 %v1157
    %v1473 = vunpack.c.l.b16 %v1158
    %v1474 = vunpack.c.h.b16 %v1158
    %v1475 = vunpack.c.l.b16 %v1159
    %v1476 = vunpack.c.h.b16 %v1159
    %v1477 = vunpack.c.l.b16 %v1160
    %v1478 = vunpack.c.h.b16 %v1160
    %v1479 = vunpack.c.l.b16 %v1161
    %v1480 = vunpack.c.h.b16 %v1161
    %v1481 = vunpack.c.l.b16 %v1162
    %v1482 = vunpack.c.h.b16 %v1162
    %v1483 = vunpack.c.l.b16 %v1163
    %v1484 = vunpack.c.h.b16 %v1163
    %v1485 = vunpack.c.l.b16 %v1164
    %v1486 = vunpack.c.h.b16 %v1164
    %v1487 = vunpack.c.l.b16 %v1165
    %v1488 = vunpack.c.h.b16 %v1165
    %v1489 = vunpack.c.l.b16 %v1166
    %v1490 = vunpack.c.h.b16 %v1166
    %v1491 = vunpack.c.l.b16 %v1167
    %v1492 = vunpack.c.h.b16 %v1167
    %v1493 = vunpack.c.l.b16 %v1168
    %v1494 = vunpack.c.h.b16 %v1168
    %v1495 = vunpack.c.l.b16 %v1169
    %v1496 = vunpack.c.h.b16 %v1169
    %v1497 = vunpack.c.l.b16 %v1170
    %v1498 = vunpack.c.h.b16 %v1170
    %v1499 = vunpack.c.l.b16 %v1171
    %v1500 = vunpack.c.h.b16 %v1171
    %v1501 = vunpack.c.l.b16 %v1172
    %v1502 = vunpack.c.h.b16 %v1172
    %v1503 = vunpack.c.l.b16 %v1173
    %v1504 = vunpack.c.h.b16 %v1173
    %v1505 = vunpack.c.l.b16 %v1174
    %v1506 = vunpack.c.h.b16 %v1174
    %v1507 = vunpack.c.l.b16 %v1175
    %v1508 = vunpack.c.h.b16 %v1175
    %v1509 = vunpack.c.l.b16 %v1176
    %v1510 = vunpack.c.h.b16 %v1176
    %v1511 = vunpack.c.l.b16 %v1177
    %v1512 = vunpack.c.h.b16 %v1177
    %v1513 = vunpack.c.l.b16 %v1178
    %v1514 = vunpack.c.h.b16 %v1178
    %v1515 = vunpack.c.l.b16 %v1179
    %v1516 = vunpack.c.h.b16 %v1179
    %v1517 = vunpack.c.l.b16 %v1180
    %v1518 = vunpack.c.h.b16 %v1180
    %v1519 = vunpack.c.l.b16 %v1181
    %v1520 = vunpack.c.h.b16 %v1181
    %v1521 = vunpack.c.l.b16 %v1182
    %v1522 = vunpack.c.h.b16 %v1182
    %v1523 = vunpack.c.l.b16 %v1183
    %v1524 = vunpack.c.h.b16 %v1183
    %v1525 = vunpack.c.l.b16 %v1184
    %v1526 = vunpack.c.h.b16 %v1184
    %v1527 = vpack.c.b16 %v1467, %v1463
    %v1528 = vpack.c.b16 %v1468, %v1464
    %v1529 = vpack.c.b16 %v1469, %v1465
    %v1530 = vpack.c.b16 %v1470, %v1466
    %v1531 = vpack.c.b16 %v1475, %v1471
    %v1532 = vpack.c.b16 %v1476, %v1472
    %v1533 = vpack.c.b16 %v1477, %v1473
    %v1534 = vpack.c.b16 %v1478, %v1474
    %v1535 = vpack.c.b16 %v1483, %v1479
    %v1536 = vpack.c.b16 %v1484, %v1480
    %v1537 = vpack.c.b16 %v1485, %v1481
    %v1538 = vpack.c.b16 %v1486, %v1482
    %v1539 = vpack.c.b16 %v1491, %v1487
    %v1540 = vpack.c.b16 %v1492, %v1488
    %v1541 = vpack.c.b16 %v1493, %v1489
    %v1542 = vpack.c.b16 %v1494, %v1490
    %v1543 = vpack.c.b16 %v1499, %v1495
    %v1544 = vpack.c.b16 %v1500, %v1496
    %v1545 = vpack.c.b16 %v1501, %v1497
    %v1546 = vpack.c.b16 %v1502, %v1498
    %v1547 = vpack.c.b16 %v1507, %v1503
    %v1548 = vpack.c.b16 %v1508, %v1504
    %v1549 = vpack.c.b16 %v1509, %v1505
    %v1550 = vpack.c.b16 %v1510, %v1506
    %v1551 = vpack.c.b16 %v1515, %v1511
    %v1552 = vpack.c.b16 %v1516, %v1512
    %v1553 = vpack.c.b16 %v1517, %v1513
    %v1554 = vpack.c.b16 %v1518, %v1514
    %v1555 = vpack.c.b16 %v1523, %v1519
    %v1556 = vpack.c.b16 %v1524, %v1520
    %v1557 = vpack.c.b16 %v1525, %v1521
    %v1558 = vpack.c.b16 %v1526, %v1522
    %1591 = vmatprep.subr.bf16.mxu0 %v1528
    %1592 = vmatpush1.bf16.msra.mxu0 %v1527
    %1593 = vmatprep.subr.bf16.mxu0 %v1532
    %1594 = vmatpush1.bf16.msra.mxu0 %v1531
    %1595 = vmatprep.subr.bf16.mxu0 %v1536
    %1596 = vmatpush1.bf16.msra.mxu0 %v1535
    %1597 = vmatprep.subr.bf16.mxu0 %v1540
    %1598 = vmatpush1.bf16.msra.mxu0 %v1539
    %1599 = vmatprep.subr.bf16.mxu0 %v1544
    %1600 = vmatpush1.bf16.msra.mxu0 %v1543
    %1601 = vmatprep.subr.bf16.mxu0 %v1548
    %1602 = vmatpush1.bf16.msra.mxu0 %v1547
    %1603 = vmatprep.subr.bf16.mxu0 %v1552
    %1604 = vmatpush1.bf16.msra.mxu0 %v1551
    %1605 = vmatprep.subr.bf16.mxu0 %v1556
    %1606 = vmatpush1.bf16.msra.mxu0 %v1555
    %1607 = vmatprep.subr.bf16.mxu0 0
    %1608 = vmatpush1.bf16.msra.mxu0 0
    %1609 = vmatprep.subr.bf16.mxu0 0
    %1610 = vmatpush1.bf16.msra.mxu0 0
    %1611 = vmatprep.subr.bf16.mxu0 0
    %1612 = vmatpush1.bf16.msra.mxu0 0
    %1613 = vmatprep.subr.bf16.mxu0 0
    %1614 = vmatpush1.bf16.msra.mxu0 0
    %1615 = vmatprep.subr.bf16.mxu0 0
    %1616 = vmatpush1.bf16.msra.mxu0 0
    %1617 = vmatprep.subr.bf16.mxu0 0
    %1618 = vmatpush1.bf16.msra.mxu0 0
    %1619 = vmatprep.subr.bf16.mxu0 0
    %1620 = vmatpush1.bf16.msra.mxu0 0
    %1621 = vmatprep.subr.bf16.mxu0 0
    %1622 = vmatpush1.bf16.msra.mxu0 0
    %1623 = vmatprep.mubr.bf16.mxu0 0
    %1624 = vmatmul.mubr.bf16.gmra.mrb[0].mxu0 0
    %v1625 = vpop.f32.mrb[0].mxu0
    %v1626 = vadd.f32 0.0, %v1625
    %v1627 = vpop.f32.mrb[0].mxu0
    %v1628 = vadd.f32 0.0, %v1627
    %v1629 = vpop.f32.mrb[0].mxu0
    %v1630 = vpop.f32.mrb[0].mxu0
    %1631 = vdwg.mxu0
    %1632 = vmatprep.subr.bf16.mxu0 %v1530
    %1633 = vmatpush1.bf16.msra.mxu0 %v1529
    %1634 = vmatprep.subr.bf16.mxu0 %v1534
    %1635 = vmatpush1.bf16.msra.mxu0 %v1533
    %1636 = vmatprep.subr.bf16.mxu0 %v1538
    %1637 = vmatpush1.bf16.msra.mxu0 %v1537
    %1638 = vmatprep.subr.bf16.mxu0 %v1542
    %1639 = vmatpush1.bf16.msra.mxu0 %v1541
    %1640 = vmatprep.subr.bf16.mxu0 %v1546
    %1641 = vmatpush1.bf16.msra.mxu0 %v1545
    %1642 = vmatprep.subr.bf16.mxu0 %v1550
    %1643 = vmatpush1.bf16.msra.mxu0 %v1549
    %1644 = vmatprep.subr.bf16.mxu0 %v1554
    %1645 = vmatpush1.bf16.msra.mxu0 %v1553
    %1646 = vmatprep.subr.bf16.mxu0 %v1558
    %1647 = vmatpush1.bf16.msra.mxu0 %v1557
    %1648 = vmatprep.subr.bf16.mxu0 0
    %1649 = vmatpush1.bf16.msra.mxu0 0
    %1650 = vmatprep.subr.bf16.mxu0 0
    %1651 = vmatpush1.bf16.msra.mxu0 0
    %1652 = vmatprep.subr.bf16.mxu0 0
    %1653 = vmatpush1.bf16.msra.mxu0 0
    %1654 = vmatprep.subr.bf16.mxu0 0
    %1655 = vmatpush1.bf16.msra.mxu0 0
    %1656 = vmatprep.subr.bf16.mxu0 0
    %1657 = vmatpush1.bf16.msra.mxu0 0
    %1658 = vmatprep.subr.bf16.mxu0 0
    %1659 = vmatpush1.bf16.msra.mxu0 0
    %1660 = vmatprep.subr.bf16.mxu0 0
    %1661 = vmatpush1.bf16.msra.mxu0 0
    %1662 = vmatprep.subr.bf16.mxu0 0
    %1663 = vmatpush1.bf16.msra.mxu0 0
    %1664 = vmatprep.mubr.bf16.mxu0 0
    %1665 = vmatmul.mubr.bf16.gmra.mrb[0].mxu0 0
    %v1666 = vpop.f32.mrb[0].mxu0
    %v1667 = vadd.f32 0.0, %v1666
    %v1668 = vpop.f32.mrb[0].mxu0
    %v1669 = vadd.f32 0.0, %v1668
    %v1670 = vpop.f32.mrb[0].mxu0
    %v1671 = vpop.f32.mrb[0].mxu0
    %1672 = vdwg.mxu0
    %v1677 = vrot.slane %v1626, 2
    %v1678 = vrot.slane %v1628, 2
    %v1679 = vrot.slane %v1667, 2
    %v1680 = vrot.slane %v1669, 2
    %v1685 = vadd.f32 %v1070, %v1677
    %v1686 = vadd.f32 %v1072, %v1678
    %v1687 = vadd.f32 %v1113, %v1679
    %v1688 = vadd.f32 %v1115, %v1680
    %v1689 = vxor.u32 %v1427, 2147483648
    %v1690 = vmul.f32 %v1689, 1.442695
    %v1691 = vpow.pop %v1690
    %v1692 = vadd.f32 %v1691, 1.0
    %v1693 = vrcp.pop %v1692
    %v1694 = vmul.f32 1.0, %v1693
    %v1695 = vxor.u32 %v1428, 2147483648
    %v1696 = vmul.f32 %v1695, 1.442695
    %v1697 = vpow.pop %v1696
    %v1698 = vadd.f32 %v1697, 1.0
    %v1699 = vrcp.pop %v1698
    %v1700 = vmul.f32 1.0, %v1699
    %v1701 = vtanh.pop %v1429
    %v1702 = vxor.u32 %v1430, 2147483648
    %v1703 = vmul.f32 %v1702, 1.442695
    %v1704 = vpow.pop %v1703
    %v1705 = vadd.f32 %v1704, 1.0
    %v1706 = vrcp.pop %v1705
    %v1707 = vmul.f32 1.0, %v1706
    %v1708 = vmul.f32 %v1700, 0.0
    %v1709 = vmul.f32 %v1694, %v1701
    %v1710 = vadd.f32 %v1708, %v1709
    %v1711 = vtanh.pop %v1710
    %v1712 = vmul.f32 %v1707, %v1711
    %v1713 = vxor.u32 %v1685, 2147483648
    %v1714 = vmul.f32 %v1713, 1.442695
    %v1715 = vpow.pop %v1714
    %v1716 = vadd.f32 %v1715, 1.0
    %v1717 = vrcp.pop %v1716
    %v1718 = vmul.f32 1.0, %v1717
    %v1719 = vxor.u32 %v1686, 2147483648
    %v1720 = vmul.f32 %v1719, 1.442695
    %v1721 = vpow.pop %v1720
    %v1722 = vadd.f32 %v1721, 1.0
    %v1723 = vrcp.pop %v1722
    %v1724 = vmul.f32 1.0, %v1723
    %v1725 = vtanh.pop %v1687
    %v1726 = vxor.u32 %v1688, 2147483648
    %v1727 = vmul.f32 %v1726, 1.442695
    %v1728 = vpow.pop %v1727
    %v1729 = vadd.f32 %v1728, 1.0
    %v1730 = vrcp.pop %v1729
    %v1731 = vmul.f32 1.0, %v1730
    %v1732 = vmul.f32 %v1724, 0.0
    %v1733 = vmul.f32 %v1718, %v1725
    %v1734 = vadd.f32 %v1732, %v1733
    %v1735 = vtanh.pop %v1734
    %v1736 = vmul.f32 %v1731, %v1735
    %vm1737 = vcmp.gt.s32.totalorder %v1120, 0
    %vm1738 = vcmp.gt.s32.totalorder %v1120, 7
    %v1739 = vsel %vm1737, %v1712, 0.0
    %v1740 = vsel %vm1737, %v1710, 0.0
    %v1742 = vrot.slane %v1736, 6
    %v1744 = vsel %vm1738, %v1742, 0.0
    %v1746 = vrot.slane %v1734, 6
    %v1748 = vsel %vm1738, %v1746, 0.0
    %v1749 = vpack.c.bf16 %v1739, %v1739
    %1750 = vmatprep.subr.bf16.mxu0 %v1282
    %1751 = vmatpush1.bf16.msra.mxu0 %v1281
    %1752 = vmatprep.subr.bf16.mxu0 %v1286
    %1753 = vmatpush1.bf16.msra.mxu0 %v1285
    %1754 = vmatprep.subr.bf16.mxu0 %v1290
    %1755 = vmatpush1.bf16.msra.mxu0 %v1289
    %1756 = vmatprep.subr.bf16.mxu0 %v1294
    %1757 = vmatpush1.bf16.msra.mxu0 %v1293
    %1758 = vmatprep.subr.bf16.mxu0 %v1298
    %1759 = vmatpush1.bf16.msra.mxu0 %v1297
    %1760 = vmatprep.subr.bf16.mxu0 %v1302
    %1761 = vmatpush1.bf16.msra.mxu0 %v1301
    %1762 = vmatprep.subr.bf16.mxu0 %v1306
    %1763 = vmatpush1.bf16.msra.mxu0 %v1305
    %1764 = vmatprep.subr.bf16.mxu0 %v1310
    %1765 = vmatpush1.bf16.msra.mxu0 %v1309
    %1766 = vmatprep.subr.bf16.mxu0 0
    %1767 = vmatpush1.bf16.msra.mxu0 0
    %1768 = vmatprep.subr.bf16.mxu0 0
    %1769 = vmatpush1.bf16.msra.mxu0 0
    %1770 = vmatprep.subr.bf16.mxu0 0
    %1771 = vmatpush1.bf16.msra.mxu0 0
    %1772 = vmatprep.subr.bf16.mxu0 0
    %1773 = vmatpush1.bf16.msra.mxu0 0
    %1774 = vmatprep.subr.bf16.mxu0 0
    %1775 = vmatpush1.bf16.msra.mxu0 0
    %1776 = vmatprep.subr.bf16.mxu0 0
    %1777 = vmatpush1.bf16.msra.mxu0 0
    %1778 = vmatprep.subr.bf16.mxu0 0
    %1779 = vmatpush1.bf16.msra.mxu0 0
    %1780 = vmatprep.subr.bf16.mxu0 0
    %1781 = vmatpush1.bf16.msra.mxu0 0
    %1782 = vmatprep.mubr.bf16.mxu0 0
    %1783 = vmatmul.mubr.bf16.gmra.mrb[0].mxu0 %v1749
    %v1784 = vpop.f32.mrb[0].mxu0
    %v1785 = vadd.f32 0.0, %v1784
    %v1786 = vpop.f32.mrb[0].mxu0
    %v1787 = vadd.f32 0.0, %v1786
    %v1788 = vpop.f32.mrb[0].mxu0
    %v1789 = vpop.f32.mrb[0].mxu0
    %1790 = vdwg.mxu0
    %1791 = vmatprep.subr.bf16.mxu0 %v1284
    %1792 = vmatpush1.bf16.msra.mxu0 %v1283
    %1793 = vmatprep.subr.bf16.mxu0 %v1288
    %1794 = vmatpush1.bf16.msra.mxu0 %v1287
    %1795 = vmatprep.subr.bf16.mxu0 %v1292
    %1796 = vmatpush1.bf16.msra.mxu0 %v1291
    %1797 = vmatprep.subr.bf16.mxu0 %v1296
    %1798 = vmatpush1.bf16.msra.mxu0 %v1295
    %1799 = vmatprep.subr.bf16.mxu0 %v1300
    %1800 = vmatpush1.bf16.msra.mxu0 %v1299
    %1801 = vmatprep.subr.bf16.mxu0 %v1304
    %1802 = vmatpush1.bf16.msra.mxu0 %v1303
    %1803 = vmatprep.subr.bf16.mxu0 %v1308
    %1804 = vmatpush1.bf16.msra.mxu0 %v1307
    %1805 = vmatprep.subr.bf16.mxu0 %v1312
    %1806 = vmatpush1.bf16.msra.mxu0 %v1311
    %1807 = vmatprep.subr.bf16.mxu0 0
    %1808 = vmatpush1.bf16.msra.mxu0 0
    %1809 = vmatprep.subr.bf16.mxu0 0
    %1810 = vmatpush1.bf16.msra.mxu0 0
    %1811 = vmatprep.subr.bf16.mxu0 0
    %1812 = vmatpush1.bf16.msra.mxu0 0
    %1813 = vmatprep.subr.bf16.mxu0 0
    %1814 = vmatpush1.bf16.msra.mxu0 0
    %1815 = vmatprep.subr.bf16.mxu0 0
    %1816 = vmatpush1.bf16.msra.mxu0 0
    %1817 = vmatprep.subr.bf16.mxu0 0
    %1818 = vmatpush1.bf16.msra.mxu0 0
    %1819 = vmatprep.subr.bf16.mxu0 0
    %1820 = vmatpush1.bf16.msra.mxu0 0
    %1821 = vmatprep.subr.bf16.mxu0 0
    %1822 = vmatpush1.bf16.msra.mxu0 0
    %1823 = vmatprep.mubr.bf16.mxu0 0
    %1824 = vmatmul.mubr.bf16.gmra.mrb[0].mxu0 %v1749
    %v1825 = vpop.f32.mrb[0].mxu0
    %v1826 = vadd.f32 0.0, %v1825
    %v1827 = vpop.f32.mrb[0].mxu0
    %v1828 = vadd.f32 0.0, %v1827
    %v1829 = vpop.f32.mrb[0].mxu0
    %v1830 = vpop.f32.mrb[0].mxu0
    %1831 = vdwg.mxu0
    %v1836 = vrot.slane %v1785, 6
    %v1837 = vrot.slane %v1787, 6
    %v1838 = vrot.slane %v1826, 6
    %v1839 = vrot.slane %v1828, 6
    %v1844 = vadd.f32 %v980, %v1836
    %v1845 = vadd.f32 %v982, %v1837
    %v1846 = vadd.f32 %v1023, %v1838
    %v1847 = vadd.f32 %v1025, %v1839
    %v1848 = vpack.c.bf16 %v1744, %v1744
    %1849 = vmatprep.subr.bf16.mxu0 %v1528
    %1850 = vmatpush1.bf16.msra.mxu0 %v1527
    %1851 = vmatprep.subr.bf16.mxu0 %v1532
    %1852 = vmatpush1.bf16.msra.mxu0 %v1531
    %1853 = vmatprep.subr.bf16.mxu0 %v1536
    %1854 = vmatpush1.bf16.msra.mxu0 %v1535
    %1855 = vmatprep.subr.bf16.mxu0 %v1540
    %1856 = vmatpush1.bf16.msra.mxu0 %v1539
    %1857 = vmatprep.subr.bf16.mxu0 %v1544
    %1858 = vmatpush1.bf16.msra.mxu0 %v1543
    %1859 = vmatprep.subr.bf16.mxu0 %v1548
    %1860 = vmatpush1.bf16.msra.mxu0 %v1547
    %1861 = vmatprep.subr.bf16.mxu0 %v1552
    %1862 = vmatpush1.bf16.msra.mxu0 %v1551
    %1863 = vmatprep.subr.bf16.mxu0 %v1556
    %1864 = vmatpush1.bf16.msra.mxu0 %v1555
    %1865 = vmatprep.subr.bf16.mxu0 0
    %1866 = vmatpush1.bf16.msra.mxu0 0
    %1867 = vmatprep.subr.bf16.mxu0 0
    %1868 = vmatpush1.bf16.msra.mxu0 0
    %1869 = vmatprep.subr.bf16.mxu0 0
    %1870 = vmatpush1.bf16.msra.mxu0 0
    %1871 = vmatprep.subr.bf16.mxu0 0
    %1872 = vmatpush1.bf16.msra.mxu0 0
    %1873 = vmatprep.subr.bf16.mxu0 0
    %1874 = vmatpush1.bf16.msra.mxu0 0
    %1875 = vmatprep.subr.bf16.mxu0 0
    %1876 = vmatpush1.bf16.msra.mxu0 0
    %1877 = vmatprep.subr.bf16.mxu0 0
    %1878 = vmatpush1.bf16.msra.mxu0 0
    %1879 = vmatprep.subr.bf16.mxu0 0
    %1880 = vmatpush1.bf16.msra.mxu0 0
    %1881 = vmatprep.mubr.bf16.mxu0 0
    %1882 = vmatmul.mubr.bf16.gmra.mrb[0].mxu0 %v1848
    %v1883 = vpop.f32.mrb[0].mxu0
    %v1884 = vadd.f32 0.0, %v1883
    %v1885 = vpop.f32.mrb[0].mxu0
    %v1886 = vadd.f32 0.0, %v1885
    %v1887 = vpop.f32.mrb[0].mxu0
    %v1888 = vpop.f32.mrb[0].mxu0
    %1889 = vdwg.mxu0
    %1890 = vmatprep.subr.bf16.mxu0 %v1530
    %1891 = vmatpush1.bf16.msra.mxu0 %v1529
    %1892 = vmatprep.subr.bf16.mxu0 %v1534
    %1893 = vmatpush1.bf16.msra.mxu0 %v1533
    %1894 = vmatprep.subr.bf16.mxu0 %v1538
    %1895 = vmatpush1.bf16.msra.mxu0 %v1537
    %1896 = vmatprep.subr.bf16.mxu0 %v1542
    %1897 = vmatpush1.bf16.msra.mxu0 %v1541
    %1898 = vmatprep.subr.bf16.mxu0 %v1546
    %1899 = vmatpush1.bf16.msra.mxu0 %v1545
    %1900 = vmatprep.subr.bf16.mxu0 %v1550
    %1901 = vmatpush1.bf16.msra.mxu0 %v1549
    %1902 = vmatprep.subr.bf16.mxu0 %v1554
    %1903 = vmatpush1.bf16.msra.mxu0 %v1553
    %1904 = vmatprep.subr.bf16.mxu0 %v1558
    %1905 = vmatpush1.bf16.msra.mxu0 %v1557
    %1906 = vmatprep.subr.bf16.mxu0 0
    %1907 = vmatpush1.bf16.msra.mxu0 0
    %1908 = vmatprep.subr.bf16.mxu0 0
    %1909 = vmatpush1.bf16.msra.mxu0 0
    %1910 = vmatprep.subr.bf16.mxu0 0
    %1911 = vmatpush1.bf16.msra.mxu0 0
    %1912 = vmatprep.subr.bf16.mxu0 0
    %1913 = vmatpush1.bf16.msra.mxu0 0
    %1914 = vmatprep.subr.bf16.mxu0 0
    %1915 = vmatpush1.bf16.msra.mxu0 0
    %1916 = vmatprep.subr.bf16.mxu0 0
    %1917 = vmatpush1.bf16.msra.mxu0 0
    %1918 = vmatprep.subr.bf16.mxu0 0
    %1919 = vmatpush1.bf16.msra.mxu0 0
    %1920 = vmatprep.subr.bf16.mxu0 0
    %1921 = vmatpush1.bf16.msra.mxu0 0
    %1922 = vmatprep.mubr.bf16.mxu0 0
    %1923 = vmatmul.mubr.bf16.gmra.mrb[0].mxu0 %v1848
    %v1924 = vpop.f32.mrb[0].mxu0
    %v1925 = vadd.f32 0.0, %v1924
    %v1926 = vpop.f32.mrb[0].mxu0
    %v1927 = vadd.f32 0.0, %v1926
    %v1928 = vpop.f32.mrb[0].mxu0
    %v1929 = vpop.f32.mrb[0].mxu0
    %1930 = vdwg.mxu0
    %v1935 = vrot.slane %v1884, 4
    %v1936 = vrot.slane %v1886, 4
    %v1937 = vrot.slane %v1925, 4
    %v1938 = vrot.slane %v1927, 4
    %v1943 = vadd.f32 %v1070, %v1935
    %v1944 = vadd.f32 %v1072, %v1936
    %v1945 = vadd.f32 %v1113, %v1937
    %v1946 = vadd.f32 %v1115, %v1938
    %v1947 = vxor.u32 %v1844, 2147483648
    %v1948 = vmul.f32 %v1947, 1.442695
    %v1949 = vpow.pop %v1948
    %v1950 = vadd.f32 %v1949, 1.0
    %v1951 = vrcp.pop %v1950
    %v1952 = vmul.f32 1.0, %v1951
    %v1953 = vxor.u32 %v1845, 2147483648
    %v1954 = vmul.f32 %v1953, 1.442695
    %v1955 = vpow.pop %v1954
    %v1956 = vadd.f32 %v1955, 1.0
    %v1957 = vrcp.pop %v1956
    %v1958 = vmul.f32 1.0, %v1957
    %v1959 = vtanh.pop %v1846
    %v1960 = vxor.u32 %v1847, 2147483648
    %v1961 = vmul.f32 %v1960, 1.442695
    %v1962 = vpow.pop %v1961
    %v1963 = vadd.f32 %v1962, 1.0
    %v1964 = vrcp.pop %v1963
    %v1965 = vmul.f32 1.0, %v1964
    %v1967 = vrot.slane %v1740, 6
    %v1969 = vmul.f32 %v1958, %v1967
    %v1970 = vmul.f32 %v1952, %v1959
    %v1971 = vadd.f32 %v1969, %v1970
    %v1972 = vtanh.pop %v1971
    %v1973 = vmul.f32 %v1965, %v1972
    %v1974 = vxor.u32 %v1943, 2147483648
    %v1975 = vmul.f32 %v1974, 1.442695
    %v1976 = vpow.pop %v1975
    %v1977 = vadd.f32 %v1976, 1.0
    %v1978 = vrcp.pop %v1977
    %v1979 = vmul.f32 1.0, %v1978
    %v1980 = vxor.u32 %v1944, 2147483648
    %v1981 = vmul.f32 %v1980, 1.442695
    %v1982 = vpow.pop %v1981
    %v1983 = vadd.f32 %v1982, 1.0
    %v1984 = vrcp.pop %v1983
    %v1985 = vmul.f32 1.0, %v1984
    %v1986 = vtanh.pop %v1945
    %v1987 = vxor.u32 %v1946, 2147483648
    %v1988 = vmul.f32 %v1987, 1.442695
    %v1989 = vpow.pop %v1988
    %v1990 = vadd.f32 %v1989, 1.0
    %v1991 = vrcp.pop %v1990
    %v1992 = vmul.f32 1.0, %v1991
    %v1994 = vrot.slane %v1748, 4
    %v1996 = vmul.f32 %v1985, %v1994
    %v1997 = vmul.f32 %v1979, %v1986
    %v1998 = vadd.f32 %v1996, %v1997
    %v1999 = vtanh.pop %v1998
    %v2000 = vmul.f32 %v1992, %v1999
    %vm2001 = vcmp.gt.s32.totalorder %v1120, 1
    %vm2002 = vcmp.gt.s32.totalorder %v1120, 6
    %v2004 = vrot.slane %v1973, 2
    %v2006 = vsel %vm2001, %v2004, %v1739
    %v2008 = vrot.slane %v1971, 2
    %v2010 = vsel %vm2001, %v2008, %v1740
    %v2012 = vrot.slane %v2000, 4
    %v2014 = vsel %vm2002, %v2012, %v1744
    %v2016 = vrot.slane %v1998, 4
    %v2018 = vsel %vm2002, %v2016, %v1748
    %v2019 = vpack.c.bf16 %v2006, %v2006
    %2020 = vmatprep.subr.bf16.mxu0 %v1282
    %2021 = vmatpush1.bf16.msra.mxu0 %v1281
    %2022 = vmatprep.subr.bf16.mxu0 %v1286
    %2023 = vmatpush1.bf16.msra.mxu0 %v1285
    %2024 = vmatprep.subr.bf16.mxu0 %v1290
    %2025 = vmatpush1.bf16.msra.mxu0 %v1289
    %2026 = vmatprep.subr.bf16.mxu0 %v1294
    %2027 = vmatpush1.bf16.msra.mxu0 %v1293
    %2028 = vmatprep.subr.bf16.mxu0 %v1298
    %2029 = vmatpush1.bf16.msra.mxu0 %v1297
    %2030 = vmatprep.subr.bf16.mxu0 %v1302
    %2031 = vmatpush1.bf16.msra.mxu0 %v1301
    %2032 = vmatprep.subr.bf16.mxu0 %v1306
    %2033 = vmatpush1.bf16.msra.mxu0 %v1305
    %2034 = vmatprep.subr.bf16.mxu0 %v1310
    %2035 = vmatpush1.bf16.msra.mxu0 %v1309
    %2036 = vmatprep.subr.bf16.mxu0 0
    %2037 = vmatpush1.bf16.msra.mxu0 0
    %2038 = vmatprep.subr.bf16.mxu0 0
    %2039 = vmatpush1.bf16.msra.mxu0 0
    %2040 = vmatprep.subr.bf16.mxu0 0
    %2041 = vmatpush1.bf16.msra.mxu0 0
    %2042 = vmatprep.subr.bf16.mxu0 0
    %2043 = vmatpush1.bf16.msra.mxu0 0
    %2044 = vmatprep.subr.bf16.mxu0 0
    %2045 = vmatpush1.bf16.msra.mxu0 0
    %2046 = vmatprep.subr.bf16.mxu0 0
    %2047 = vmatpush1.bf16.msra.mxu0 0
    %2048 = vmatprep.subr.bf16.mxu0 0
    %2049 = vmatpush1.bf16.msra.mxu0 0
    %2050 = vmatprep.subr.bf16.mxu0 0
    %2051 = vmatpush1.bf16.msra.mxu0 0
    %2052 = vmatprep.mubr.bf16.mxu0 0
    %2053 = vmatmul.mubr.bf16.gmra.mrb[0].mxu0 %v2019
    %v2054 = vpop.f32.mrb[0].mxu0
    %v2055 = vadd.f32 0.0, %v2054
    %v2056 = vpop.f32.mrb[0].mxu0
    %v2057 = vadd.f32 0.0, %v2056
    %v2058 = vpop.f32.mrb[0].mxu0
    %v2059 = vpop.f32.mrb[0].mxu0
    %2060 = vdwg.mxu0
    %2061 = vmatprep.subr.bf16.mxu0 %v1284
    %2062 = vmatpush1.bf16.msra.mxu0 %v1283
    %2063 = vmatprep.subr.bf16.mxu0 %v1288
    %2064 = vmatpush1.bf16.msra.mxu0 %v1287
    %2065 = vmatprep.subr.bf16.mxu0 %v1292
    %2066 = vmatpush1.bf16.msra.mxu0 %v1291
    %2067 = vmatprep.subr.bf16.mxu0 %v1296
    %2068 = vmatpush1.bf16.msra.mxu0 %v1295
    %2069 = vmatprep.subr.bf16.mxu0 %v1300
    %2070 = vmatpush1.bf16.msra.mxu0 %v1299
    %2071 = vmatprep.subr.bf16.mxu0 %v1304
    %2072 = vmatpush1.bf16.msra.mxu0 %v1303
    %2073 = vmatprep.subr.bf16.mxu0 %v1308
    %2074 = vmatpush1.bf16.msra.mxu0 %v1307
    %2075 = vmatprep.subr.bf16.mxu0 %v1312
    %2076 = vmatpush1.bf16.msra.mxu0 %v1311
    %2077 = vmatprep.subr.bf16.mxu0 0
    %2078 = vmatpush1.bf16.msra.mxu0 0
    %2079 = vmatprep.subr.bf16.mxu0 0
    %2080 = vmatpush1.bf16.msra.mxu0 0
    %2081 = vmatprep.subr.bf16.mxu0 0
    %2082 = vmatpush1.bf16.msra.mxu0 0
    %2083 = vmatprep.subr.bf16.mxu0 0
    %2084 = vmatpush1.bf16.msra.mxu0 0
    %2085 = vmatprep.subr.bf16.mxu0 0
    %2086 = vmatpush1.bf16.msra.mxu0 0
    %2087 = vmatprep.subr.bf16.mxu0 0
    %2088 = vmatpush1.bf16.msra.mxu0 0
    %2089 = vmatprep.subr.bf16.mxu0 0
    %2090 = vmatpush1.bf16.msra.mxu0 0
    %2091 = vmatprep.subr.bf16.mxu0 0
    %2092 = vmatpush1.bf16.msra.mxu0 0
    %2093 = vmatprep.mubr.bf16.mxu0 0
    %2094 = vmatmul.mubr.bf16.gmra.mrb[0].mxu0 %v2019
    %v2095 = vpop.f32.mrb[0].mxu0
    %v2096 = vadd.f32 0.0, %v2095
    %v2097 = vpop.f32.mrb[0].mxu0
    %v2098 = vadd.f32 0.0, %v2097
    %v2099 = vpop.f32.mrb[0].mxu0
    %v2100 = vpop.f32.mrb[0].mxu0
    %2101 = vdwg.mxu0
    %v2106 = vrot.slane %v2055, 4
    %v2107 = vrot.slane %v2057, 4
    %v2108 = vrot.slane %v2096, 4
    %v2109 = vrot.slane %v2098, 4
    %v2114 = vadd.f32 %v980, %v2106
    %v2115 = vadd.f32 %v982, %v2107
    %v2116 = vadd.f32 %v1023, %v2108
    %v2117 = vadd.f32 %v1025, %v2109
    %v2118 = vpack.c.bf16 %v2014, %v2014
    %2119 = vmatprep.subr.bf16.mxu0 %v1528
    %2120 = vmatpush1.bf16.msra.mxu0 %v1527
    %2121 = vmatprep.subr.bf16.mxu0 %v1532
    %2122 = vmatpush1.bf16.msra.mxu0 %v1531
    %2123 = vmatprep.subr.bf16.mxu0 %v1536
    %2124 = vmatpush1.bf16.msra.mxu0 %v1535
    %2125 = vmatprep.subr.bf16.mxu0 %v1540
    %2126 = vmatpush1.bf16.msra.mxu0 %v1539
    %2127 = vmatprep.subr.bf16.mxu0 %v1544
    %2128 = vmatpush1.bf16.msra.mxu0 %v1543
    %2129 = vmatprep.subr.bf16.mxu0 %v1548
    %2130 = vmatpush1.bf16.msra.mxu0 %v1547
    %2131 = vmatprep.subr.bf16.mxu0 %v1552
    %2132 = vmatpush1.bf16.msra.mxu0 %v1551
    %2133 = vmatprep.subr.bf16.mxu0 %v1556
    %2134 = vmatpush1.bf16.msra.mxu0 %v1555
    %2135 = vmatprep.subr.bf16.mxu0 0
    %2136 = vmatpush1.bf16.msra.mxu0 0
    %2137 = vmatprep.subr.bf16.mxu0 0
    %2138 = vmatpush1.bf16.msra.mxu0 0
    %2139 = vmatprep.subr.bf16.mxu0 0
    %2140 = vmatpush1.bf16.msra.mxu0 0
    %2141 = vmatprep.subr.bf16.mxu0 0
    %2142 = vmatpush1.bf16.msra.mxu0 0
    %2143 = vmatprep.subr.bf16.mxu0 0
    %2144 = vmatpush1.bf16.msra.mxu0 0
    %2145 = vmatprep.subr.bf16.mxu0 0
    %2146 = vmatpush1.bf16.msra.mxu0 0
    %2147 = vmatprep.subr.bf16.mxu0 0
    %2148 = vmatpush1.bf16.msra.mxu0 0
    %2149 = vmatprep.subr.bf16.mxu0 0
    %2150 = vmatpush1.bf16.msra.mxu0 0
    %2151 = vmatprep.mubr.bf16.mxu0 0
    %2152 = vmatmul.mubr.bf16.gmra.mrb[0].mxu0 %v2118
    %v2153 = vpop.f32.mrb[0].mxu0
    %v2154 = vadd.f32 0.0, %v2153
    %v2155 = vpop.f32.mrb[0].mxu0
    %v2156 = vadd.f32 0.0, %v2155
    %v2157 = vpop.f32.mrb[0].mxu0
    %v2158 = vpop.f32.mrb[0].mxu0
    %2159 = vdwg.mxu0
    %2160 = vmatprep.subr.bf16.mxu0 %v1530
    %2161 = vmatpush1.bf16.msra.mxu0 %v1529
    %2162 = vmatprep.subr.bf16.mxu0 %v1534
    %2163 = vmatpush1.bf16.msra.mxu0 %v1533
    %2164 = vmatprep.subr.bf16.mxu0 %v1538
    %2165 = vmatpush1.bf16.msra.mxu0 %v1537
    %2166 = vmatprep.subr.bf16.mxu0 %v1542
    %2167 = vmatpush1.bf16.msra.mxu0 %v1541
    %2168 = vmatprep.subr.bf16.mxu0 %v1546
    %2169 = vmatpush1.bf16.msra.mxu0 %v1545
    %2170 = vmatprep.subr.bf16.mxu0 %v1550
    %2171 = vmatpush1.bf16.msra.mxu0 %v1549
    %2172 = vmatprep.subr.bf16.mxu0 %v1554
    %2173 = vmatpush1.bf16.msra.mxu0 %v1553
    %2174 = vmatprep.subr.bf16.mxu0 %v1558
    %2175 = vmatpush1.bf16.msra.mxu0 %v1557
    %2176 = vmatprep.subr.bf16.mxu0 0
    %2177 = vmatpush1.bf16.msra.mxu0 0
    %2178 = vmatprep.subr.bf16.mxu0 0
    %2179 = vmatpush1.bf16.msra.mxu0 0
    %2180 = vmatprep.subr.bf16.mxu0 0
    %2181 = vmatpush1.bf16.msra.mxu0 0
    %2182 = vmatprep.subr.bf16.mxu0 0
    %2183 = vmatpush1.bf16.msra.mxu0 0
    %2184 = vmatprep.subr.bf16.mxu0 0
    %2185 = vmatpush1.bf16.msra.mxu0 0
    %2186 = vmatprep.subr.bf16.mxu0 0
    %2187 = vmatpush1.bf16.msra.mxu0 0
    %2188 = vmatprep.subr.bf16.mxu0 0
    %2189 = vmatpush1.bf16.msra.mxu0 0
    %2190 = vmatprep.subr.bf16.mxu0 0
    %2191 = vmatpush1.bf16.msra.mxu0 0
    %2192 = vmatprep.mubr.bf16.mxu0 0
    %2193 = vmatmul.mubr.bf16.gmra.mrb[0].mxu0 %v2118
    %v2194 = vpop.f32.mrb[0].mxu0
    %v2195 = vadd.f32 0.0, %v2194
    %v2196 = vpop.f32.mrb[0].mxu0
    %v2197 = vadd.f32 0.0, %v2196
    %v2198 = vpop.f32.mrb[0].mxu0
    %v2199 = vpop.f32.mrb[0].mxu0
    %2200 = vdwg.mxu0
    %v2205 = vrot.slane %v2154, 6
    %v2206 = vrot.slane %v2156, 6
    %v2207 = vrot.slane %v2195, 6
    %v2208 = vrot.slane %v2197, 6
    %v2213 = vadd.f32 %v1070, %v2205
    %v2214 = vadd.f32 %v1072, %v2206
    %v2215 = vadd.f32 %v1113, %v2207
    %v2216 = vadd.f32 %v1115, %v2208
    %v2217 = vxor.u32 %v2114, 2147483648
    %v2218 = vmul.f32 %v2217, 1.442695
    %v2219 = vpow.pop %v2218
    %v2220 = vadd.f32 %v2219, 1.0
    %v2221 = vrcp.pop %v2220
    %v2222 = vmul.f32 1.0, %v2221
    %v2223 = vxor.u32 %v2115, 2147483648
    %v2224 = vmul.f32 %v2223, 1.442695
    %v2225 = vpow.pop %v2224
    %v2226 = vadd.f32 %v2225, 1.0
    %v2227 = vrcp.pop %v2226
    %v2228 = vmul.f32 1.0, %v2227
    %v2229 = vtanh.pop %v2116
    %v2230 = vxor.u32 %v2117, 2147483648
    %v2231 = vmul.f32 %v2230, 1.442695
    %v2232 = vpow.pop %v2231
    %v2233 = vadd.f32 %v2232, 1.0
    %v2234 = vrcp.pop %v2233
    %v2235 = vmul.f32 1.0, %v2234
    %v2237 = vrot.slane %v2010, 4
    %v2239 = vmul.f32 %v2228, %v2237
    %v2240 = vmul.f32 %v2222, %v2229
    %v2241 = vadd.f32 %v2239, %v2240
    %v2242 = vtanh.pop %v2241
    %v2243 = vmul.f32 %v2235, %v2242
    %v2244 = vxor.u32 %v2213, 2147483648
    %v2245 = vmul.f32 %v2244, 1.442695
    %v2246 = vpow.pop %v2245
    %v2247 = vadd.f32 %v2246, 1.0
    %v2248 = vrcp.pop %v2247
    %v2249 = vmul.f32 1.0, %v2248
    %v2250 = vxor.u32 %v2214, 2147483648
    %v2251 = vmul.f32 %v2250, 1.442695
    %v2252 = vpow.pop %v2251
    %v2253 = vadd.f32 %v2252, 1.0
    %v2254 = vrcp.pop %v2253
    %v2255 = vmul.f32 1.0, %v2254
    %v2256 = vtanh.pop %v2215
    %v2257 = vxor.u32 %v2216, 2147483648
    %v2258 = vmul.f32 %v2257, 1.442695
    %v2259 = vpow.pop %v2258
    %v2260 = vadd.f32 %v2259, 1.0
    %v2261 = vrcp.pop %v2260
    %v2262 = vmul.f32 1.0, %v2261
    %v2264 = vrot.slane %v2018, 6
    %v2266 = vmul.f32 %v2255, %v2264
    %v2267 = vmul.f32 %v2249, %v2256
    %v2268 = vadd.f32 %v2266, %v2267
    %v2269 = vtanh.pop %v2268
    %v2270 = vmul.f32 %v2262, %v2269
    %vm2271 = vcmp.gt.s32.totalorder %v1120, 2
    %vm2272 = vcmp.gt.s32.totalorder %v1120, 5
    %v2274 = vrot.slane %v2243, 4
    %v2276 = vsel %vm2271, %v2274, %v2006
    %v2278 = vrot.slane %v2241, 4
    %v2280 = vsel %vm2271, %v2278, %v2010
    %v2282 = vrot.slane %v2270, 2
    %v2284 = vsel %vm2272, %v2282, %v2014
    %v2286 = vrot.slane %v2268, 2
    %v2288 = vsel %vm2272, %v2286, %v2018
    %v2289 = vpack.c.bf16 %v2276, %v2276
    %2290 = vmatprep.subr.bf16.mxu0 %v1282
    %2291 = vmatpush1.bf16.msra.mxu0 %v1281
    %2292 = vmatprep.subr.bf16.mxu0 %v1286
    %2293 = vmatpush1.bf16.msra.mxu0 %v1285
    %2294 = vmatprep.subr.bf16.mxu0 %v1290
    %2295 = vmatpush1.bf16.msra.mxu0 %v1289
    %2296 = vmatprep.subr.bf16.mxu0 %v1294
    %2297 = vmatpush1.bf16.msra.mxu0 %v1293
    %2298 = vmatprep.subr.bf16.mxu0 %v1298
    %2299 = vmatpush1.bf16.msra.mxu0 %v1297
    %2300 = vmatprep.subr.bf16.mxu0 %v1302
    %2301 = vmatpush1.bf16.msra.mxu0 %v1301
    %2302 = vmatprep.subr.bf16.mxu0 %v1306
    %2303 = vmatpush1.bf16.msra.mxu0 %v1305
    %2304 = vmatprep.subr.bf16.mxu0 %v1310
    %2305 = vmatpush1.bf16.msra.mxu0 %v1309
    %2306 = vmatprep.subr.bf16.mxu0 0
    %2307 = vmatpush1.bf16.msra.mxu0 0
    %2308 = vmatprep.subr.bf16.mxu0 0
    %2309 = vmatpush1.bf16.msra.mxu0 0
    %2310 = vmatprep.subr.bf16.mxu0 0
    %2311 = vmatpush1.bf16.msra.mxu0 0
    %2312 = vmatprep.subr.bf16.mxu0 0
    %2313 = vmatpush1.bf16.msra.mxu0 0
    %2314 = vmatprep.subr.bf16.mxu0 0
    %2315 = vmatpush1.bf16.msra.mxu0 0
    %2316 = vmatprep.subr.bf16.mxu0 0
    %2317 = vmatpush1.bf16.msra.mxu0 0
    %2318 = vmatprep.subr.bf16.mxu0 0
    %2319 = vmatpush1.bf16.msra.mxu0 0
    %2320 = vmatprep.subr.bf16.mxu0 0
    %2321 = vmatpush1.bf16.msra.mxu0 0
    %2322 = vmatprep.mubr.bf16.mxu0 0
    %2323 = vmatmul.mubr.bf16.gmra.mrb[0].mxu0 %v2289
    %v2324 = vpop.f32.mrb[0].mxu0
    %v2325 = vadd.f32 0.0, %v2324
    %v2326 = vpop.f32.mrb[0].mxu0
    %v2327 = vadd.f32 0.0, %v2326
    %v2328 = vpop.f32.mrb[0].mxu0
    %v2329 = vpop.f32.mrb[0].mxu0
    %2330 = vdwg.mxu0
    %2331 = vmatprep.subr.bf16.mxu0 %v1284
    %2332 = vmatpush1.bf16.msra.mxu0 %v1283
    %2333 = vmatprep.subr.bf16.mxu0 %v1288
    %2334 = vmatpush1.bf16.msra.mxu0 %v1287
    %2335 = vmatprep.subr.bf16.mxu0 %v1292
    %2336 = vmatpush1.bf16.msra.mxu0 %v1291
    %2337 = vmatprep.subr.bf16.mxu0 %v1296
    %2338 = vmatpush1.bf16.msra.mxu0 %v1295
    %2339 = vmatprep.subr.bf16.mxu0 %v1300
    %2340 = vmatpush1.bf16.msra.mxu0 %v1299
    %2341 = vmatprep.subr.bf16.mxu0 %v1304
    %2342 = vmatpush1.bf16.msra.mxu0 %v1303
    %2343 = vmatprep.subr.bf16.mxu0 %v1308
    %2344 = vmatpush1.bf16.msra.mxu0 %v1307
    %2345 = vmatprep.subr.bf16.mxu0 %v1312
    %2346 = vmatpush1.bf16.msra.mxu0 %v1311
    %2347 = vmatprep.subr.bf16.mxu0 0
    %2348 = vmatpush1.bf16.msra.mxu0 0
    %2349 = vmatprep.subr.bf16.mxu0 0
    %2350 = vmatpush1.bf16.msra.mxu0 0
    %2351 = vmatprep.subr.bf16.mxu0 0
    %2352 = vmatpush1.bf16.msra.mxu0 0
    %2353 = vmatprep.subr.bf16.mxu0 0
    %2354 = vmatpush1.bf16.msra.mxu0 0
    %2355 = vmatprep.subr.bf16.mxu0 0
    %2356 = vmatpush1.bf16.msra.mxu0 0
    %2357 = vmatprep.subr.bf16.mxu0 0
    %2358 = vmatpush1.bf16.msra.mxu0 0
    %2359 = vmatprep.subr.bf16.mxu0 0
    %2360 = vmatpush1.bf16.msra.mxu0 0
    %2361 = vmatprep.subr.bf16.mxu0 0
    %2362 = vmatpush1.bf16.msra.mxu0 0
    %2363 = vmatprep.mubr.bf16.mxu0 0
    %2364 = vmatmul.mubr.bf16.gmra.mrb[0].mxu0 %v2289
    %v2365 = vpop.f32.mrb[0].mxu0
    %v2366 = vadd.f32 0.0, %v2365
    %v2367 = vpop.f32.mrb[0].mxu0
    %v2368 = vadd.f32 0.0, %v2367
    %v2369 = vpop.f32.mrb[0].mxu0
    %v2370 = vpop.f32.mrb[0].mxu0
    %2371 = vdwg.mxu0
    %v2376 = vrot.slane %v2325, 2
    %v2377 = vrot.slane %v2327, 2
    %v2378 = vrot.slane %v2366, 2
    %v2379 = vrot.slane %v2368, 2
    %v2384 = vadd.f32 %v980, %v2376
    %v2385 = vadd.f32 %v982, %v2377
    %v2386 = vadd.f32 %v1023, %v2378
    %v2387 = vadd.f32 %v1025, %v2379
    %v2388 = vpack.c.bf16 %v2284, %v2284
    %2389 = vmatprep.subr.bf16.mxu0 %v1528
    %2390 = vmatpush1.bf16.msra.mxu0 %v1527
    %2391 = vmatprep.subr.bf16.mxu0 %v1532
    %2392 = vmatpush1.bf16.msra.mxu0 %v1531
    %2393 = vmatprep.subr.bf16.mxu0 %v1536
    %2394 = vmatpush1.bf16.msra.mxu0 %v1535
    %2395 = vmatprep.subr.bf16.mxu0 %v1540
    %2396 = vmatpush1.bf16.msra.mxu0 %v1539
    %2397 = vmatprep.subr.bf16.mxu0 %v1544
    %2398 = vmatpush1.bf16.msra.mxu0 %v1543
    %2399 = vmatprep.subr.bf16.mxu0 %v1548
    %2400 = vmatpush1.bf16.msra.mxu0 %v1547
    %2401 = vmatprep.subr.bf16.mxu0 %v1552
    %2402 = vmatpush1.bf16.msra.mxu0 %v1551
    %2403 = vmatprep.subr.bf16.mxu0 %v1556
    %2404 = vmatpush1.bf16.msra.mxu0 %v1555
    %2405 = vmatprep.subr.bf16.mxu0 0
    %2406 = vmatpush1.bf16.msra.mxu0 0
    %2407 = vmatprep.subr.bf16.mxu0 0
    %2408 = vmatpush1.bf16.msra.mxu0 0
    %2409 = vmatprep.subr.bf16.mxu0 0
    %2410 = vmatpush1.bf16.msra.mxu0 0
    %2411 = vmatprep.subr.bf16.mxu0 0
    %2412 = vmatpush1.bf16.msra.mxu0 0
    %2413 = vmatprep.subr.bf16.mxu0 0
    %2414 = vmatpush1.bf16.msra.mxu0 0
    %2415 = vmatprep.subr.bf16.mxu0 0
    %2416 = vmatpush1.bf16.msra.mxu0 0
    %2417 = vmatprep.subr.bf16.mxu0 0
    %2418 = vmatpush1.bf16.msra.mxu0 0
    %2419 = vmatprep.subr.bf16.mxu0 0
    %2420 = vmatpush1.bf16.msra.mxu0 0
    %2421 = vmatprep.mubr.bf16.mxu0 0
    %2422 = vmatmul.mubr.bf16.gmra.mrb[0].mxu0 %v2388
    %v2423 = vpop.f32.mrb[0].mxu0
    %v2424 = vadd.f32 0.0, %v2423
    %v2425 = vpop.f32.mrb[0].mxu0
    %v2426 = vadd.f32 0.0, %v2425
    %v2427 = vpop.f32.mrb[0].mxu0
    %v2428 = vpop.f32.mrb[0].mxu0
    %2429 = vdwg.mxu0
    %2430 = vmatprep.subr.bf16.mxu0 %v1530
    %2431 = vmatpush1.bf16.msra.mxu0 %v1529
    %2432 = vmatprep.subr.bf16.mxu0 %v1534
    %2433 = vmatpush1.bf16.msra.mxu0 %v1533
    %2434 = vmatprep.subr.bf16.mxu0 %v1538
    %2435 = vmatpush1.bf16.msra.mxu0 %v1537
    %2436 = vmatprep.subr.bf16.mxu0 %v1542
    %2437 = vmatpush1.bf16.msra.mxu0 %v1541
    %2438 = vmatprep.subr.bf16.mxu0 %v1546
    %2439 = vmatpush1.bf16.msra.mxu0 %v1545
    %2440 = vmatprep.subr.bf16.mxu0 %v1550
    %2441 = vmatpush1.bf16.msra.mxu0 %v1549
    %2442 = vmatprep.subr.bf16.mxu0 %v1554
    %2443 = vmatpush1.bf16.msra.mxu0 %v1553
    %2444 = vmatprep.subr.bf16.mxu0 %v1558
    %2445 = vmatpush1.bf16.msra.mxu0 %v1557
    %2446 = vmatprep.subr.bf16.mxu0 0
    %2447 = vmatpush1.bf16.msra.mxu0 0
    %2448 = vmatprep.subr.bf16.mxu0 0
    %2449 = vmatpush1.bf16.msra.mxu0 0
    %2450 = vmatprep.subr.bf16.mxu0 0
    %2451 = vmatpush1.bf16.msra.mxu0 0
    %2452 = vmatprep.subr.bf16.mxu0 0
    %2453 = vmatpush1.bf16.msra.mxu0 0
    %2454 = vmatprep.subr.bf16.mxu0 0
    %2455 = vmatpush1.bf16.msra.mxu0 0
    %2456 = vmatprep.subr.bf16.mxu0 0
    %2457 = vmatpush1.bf16.msra.mxu0 0
    %2458 = vmatprep.subr.bf16.mxu0 0
    %2459 = vmatpush1.bf16.msra.mxu0 0
    %2460 = vmatprep.subr.bf16.mxu0 0
    %2461 = vmatpush1.bf16.msra.mxu0 0
    %2462 = vmatprep.mubr.bf16.mxu0 0
    %2463 = vmatmul.mubr.bf16.gmra.mrb[0].mxu0 %v2388
    %v2464 = vpop.f32.mrb[0].mxu0
    %v2465 = vadd.f32 0.0, %v2464
    %v2466 = vpop.f32.mrb[0].mxu0
    %v2467 = vadd.f32 0.0, %v2466
    %v2468 = vpop.f32.mrb[0].mxu0
    %v2469 = vpop.f32.mrb[0].mxu0
    %2470 = vdwg.mxu0
    %v2471 = vadd.f32 %v1070, %v2424
    %v2472 = vadd.f32 %v1072, %v2426
    %v2473 = vadd.f32 %v1113, %v2465
    %v2474 = vadd.f32 %v1115, %v2467
    %v2475 = vxor.u32 %v2384, 2147483648
    %v2476 = vmul.f32 %v2475, 1.442695
    %v2477 = vpow.pop %v2476
    %v2478 = vadd.f32 %v2477, 1.0
    %v2479 = vrcp.pop %v2478
    %v2480 = vmul.f32 1.0, %v2479
    %v2481 = vxor.u32 %v2385, 2147483648
    %v2482 = vmul.f32 %v2481, 1.442695
    %v2483 = vpow.pop %v2482
    %v2484 = vadd.f32 %v2483, 1.0
    %v2485 = vrcp.pop %v2484
    %v2486 = vmul.f32 1.0, %v2485
    %v2487 = vtanh.pop %v2386
    %v2488 = vxor.u32 %v2387, 2147483648
    %v2489 = vmul.f32 %v2488, 1.442695
    %v2490 = vpow.pop %v2489
    %v2491 = vadd.f32 %v2490, 1.0
    %v2492 = vrcp.pop %v2491
    %v2493 = vmul.f32 1.0, %v2492
    %v2495 = vrot.slane %v2280, 2
    %v2497 = vmul.f32 %v2486, %v2495
    %v2498 = vmul.f32 %v2480, %v2487
    %v2499 = vadd.f32 %v2497, %v2498
    %v2500 = vtanh.pop %v2499
    %v2501 = vmul.f32 %v2493, %v2500
    %v2502 = vxor.u32 %v2471, 2147483648
    %v2503 = vmul.f32 %v2502, 1.442695
    %v2504 = vpow.pop %v2503
    %v2505 = vadd.f32 %v2504, 1.0
    %v2506 = vrcp.pop %v2505
    %v2507 = vmul.f32 1.0, %v2506
    %v2508 = vxor.u32 %v2472, 2147483648
    %v2509 = vmul.f32 %v2508, 1.442695
    %v2510 = vpow.pop %v2509
    %v2511 = vadd.f32 %v2510, 1.0
    %v2512 = vrcp.pop %v2511
    %v2513 = vmul.f32 1.0, %v2512
    %v2514 = vtanh.pop %v2473
    %v2515 = vxor.u32 %v2474, 2147483648
    %v2516 = vmul.f32 %v2515, 1.442695
    %v2517 = vpow.pop %v2516
    %v2518 = vadd.f32 %v2517, 1.0
    %v2519 = vrcp.pop %v2518
    %v2520 = vmul.f32 1.0, %v2519
    %v2521 = vmul.f32 %v2513, %v2288
    %v2522 = vmul.f32 %v2507, %v2514
    %v2523 = vadd.f32 %v2521, %v2522
    %v2524 = vtanh.pop %v2523
    %v2525 = vmul.f32 %v2520, %v2524
    %vm2526 = vcmp.gt.s32.totalorder %v1120, 3
    %vm2527 = vcmp.gt.s32.totalorder %v1120, 4
    %v2529 = vrot.slane %v2501, 6
    %v2531 = vsel %vm2526, %v2529, %v2276
    %v2533 = vrot.slane %v2499, 6
    %v2535 = vsel %vm2526, %v2533, %v2280
    %v2536 = vsel %vm2527, %v2525, %v2284
    %v2537 = vsel %vm2527, %v2523, %v2288
    %v2538 = vpack.c.bf16 %v2531, %v2531
    %2539 = vmatprep.subr.bf16.mxu0 %v1282
    %2540 = vmatpush1.bf16.msra.mxu0 %v1281
    %2541 = vmatprep.subr.bf16.mxu0 %v1286
    %2542 = vmatpush1.bf16.msra.mxu0 %v1285
    %2543 = vmatprep.subr.bf16.mxu0 %v1290
    %2544 = vmatpush1.bf16.msra.mxu0 %v1289
    %2545 = vmatprep.subr.bf16.mxu0 %v1294
    %2546 = vmatpush1.bf16.msra.mxu0 %v1293
    %2547 = vmatprep.subr.bf16.mxu0 %v1298
    %2548 = vmatpush1.bf16.msra.mxu0 %v1297
    %2549 = vmatprep.subr.bf16.mxu0 %v1302
    %2550 = vmatpush1.bf16.msra.mxu0 %v1301
    %2551 = vmatprep.subr.bf16.mxu0 %v1306
    %2552 = vmatpush1.bf16.msra.mxu0 %v1305
    %2553 = vmatprep.subr.bf16.mxu0 %v1310
    %2554 = vmatpush1.bf16.msra.mxu0 %v1309
    %2555 = vmatprep.subr.bf16.mxu0 0
    %2556 = vmatpush1.bf16.msra.mxu0 0
    %2557 = vmatprep.subr.bf16.mxu0 0
    %2558 = vmatpush1.bf16.msra.mxu0 0
    %2559 = vmatprep.subr.bf16.mxu0 0
    %2560 = vmatpush1.bf16.msra.mxu0 0
    %2561 = vmatprep.subr.bf16.mxu0 0
    %2562 = vmatpush1.bf16.msra.mxu0 0
    %2563 = vmatprep.subr.bf16.mxu0 0
    %2564 = vmatpush1.bf16.msra.mxu0 0
    %2565 = vmatprep.subr.bf16.mxu0 0
    %2566 = vmatpush1.bf16.msra.mxu0 0
    %2567 = vmatprep.subr.bf16.mxu0 0
    %2568 = vmatpush1.bf16.msra.mxu0 0
    %2569 = vmatprep.subr.bf16.mxu0 0
    %2570 = vmatpush1.bf16.msra.mxu0 0
    %2571 = vmatprep.mubr.bf16.mxu0 0
    %2572 = vmatmul.mubr.bf16.gmra.mrb[0].mxu0 %v2538
    %v2573 = vpop.f32.mrb[0].mxu0
    %v2574 = vadd.f32 0.0, %v2573
    %v2575 = vpop.f32.mrb[0].mxu0
    %v2576 = vadd.f32 0.0, %v2575
    %v2577 = vpop.f32.mrb[0].mxu0
    %v2578 = vpop.f32.mrb[0].mxu0
    %2579 = vdwg.mxu0
    %2580 = vmatprep.subr.bf16.mxu0 %v1284
    %2581 = vmatpush1.bf16.msra.mxu0 %v1283
    %2582 = vmatprep.subr.bf16.mxu0 %v1288
    %2583 = vmatpush1.bf16.msra.mxu0 %v1287
    %2584 = vmatprep.subr.bf16.mxu0 %v1292
    %2585 = vmatpush1.bf16.msra.mxu0 %v1291
    %2586 = vmatprep.subr.bf16.mxu0 %v1296
    %2587 = vmatpush1.bf16.msra.mxu0 %v1295
    %2588 = vmatprep.subr.bf16.mxu0 %v1300
    %2589 = vmatpush1.bf16.msra.mxu0 %v1299
    %2590 = vmatprep.subr.bf16.mxu0 %v1304
    %2591 = vmatpush1.bf16.msra.mxu0 %v1303
    %2592 = vmatprep.subr.bf16.mxu0 %v1308
    %2593 = vmatpush1.bf16.msra.mxu0 %v1307
    %2594 = vmatprep.subr.bf16.mxu0 %v1312
    %2595 = vmatpush1.bf16.msra.mxu0 %v1311
    %2596 = vmatprep.subr.bf16.mxu0 0
    %2597 = vmatpush1.bf16.msra.mxu0 0
    %2598 = vmatprep.subr.bf16.mxu0 0
    %2599 = vmatpush1.bf16.msra.mxu0 0
    %2600 = vmatprep.subr.bf16.mxu0 0
    %2601 = vmatpush1.bf16.msra.mxu0 0
    %2602 = vmatprep.subr.bf16.mxu0 0
    %2603 = vmatpush1.bf16.msra.mxu0 0
    %2604 = vmatprep.subr.bf16.mxu0 0
    %2605 = vmatpush1.bf16.msra.mxu0 0
    %2606 = vmatprep.subr.bf16.mxu0 0
    %2607 = vmatpush1.bf16.msra.mxu0 0
    %2608 = vmatprep.subr.bf16.mxu0 0
    %2609 = vmatpush1.bf16.msra.mxu0 0
    %2610 = vmatprep.subr.bf16.mxu0 0
    %2611 = vmatpush1.bf16.msra.mxu0 0
    %2612 = vmatprep.mubr.bf16.mxu0 0
    %2613 = vmatmul.mubr.bf16.gmra.mrb[0].mxu0 %v2538
    %v2614 = vpop.f32.mrb[0].mxu0
    %v2615 = vadd.f32 0.0, %v2614
    %v2616 = vpop.f32.mrb[0].mxu0
    %v2617 = vadd.f32 0.0, %v2616
    %v2618 = vpop.f32.mrb[0].mxu0
    %v2619 = vpop.f32.mrb[0].mxu0
    %2620 = vdwg.mxu0
    %v2621 = vadd.f32 %v984, %v2574
    %v2622 = vadd.f32 %v986, %v2576
    %v2623 = vadd.f32 %v1027, %v2615
    %v2624 = vadd.f32 %v1029, %v2617
    %v2625 = vpack.c.bf16 %v2536, %v2536
    %2626 = vmatprep.subr.bf16.mxu0 %v1528
    %2627 = vmatpush1.bf16.msra.mxu0 %v1527
    %2628 = vmatprep.subr.bf16.mxu0 %v1532
    %2629 = vmatpush1.bf16.msra.mxu0 %v1531
    %2630 = vmatprep.subr.bf16.mxu0 %v1536
    %2631 = vmatpush1.bf16.msra.mxu0 %v1535
    %2632 = vmatprep.subr.bf16.mxu0 %v1540
    %2633 = vmatpush1.bf16.msra.mxu0 %v1539
    %2634 = vmatprep.subr.bf16.mxu0 %v1544
    %2635 = vmatpush1.bf16.msra.mxu0 %v1543
    %2636 = vmatprep.subr.bf16.mxu0 %v1548
    %2637 = vmatpush1.bf16.msra.mxu0 %v1547
    %2638 = vmatprep.subr.bf16.mxu0 %v1552
    %2639 = vmatpush1.bf16.msra.mxu0 %v1551
    %2640 = vmatprep.subr.bf16.mxu0 %v1556
    %2641 = vmatpush1.bf16.msra.mxu0 %v1555
    %2642 = vmatprep.subr.bf16.mxu0 0
    %2643 = vmatpush1.bf16.msra.mxu0 0
    %2644 = vmatprep.subr.bf16.mxu0 0
    %2645 = vmatpush1.bf16.msra.mxu0 0
    %2646 = vmatprep.subr.bf16.mxu0 0
    %2647 = vmatpush1.bf16.msra.mxu0 0
    %2648 = vmatprep.subr.bf16.mxu0 0
    %2649 = vmatpush1.bf16.msra.mxu0 0
    %2650 = vmatprep.subr.bf16.mxu0 0
    %2651 = vmatpush1.bf16.msra.mxu0 0
    %2652 = vmatprep.subr.bf16.mxu0 0
    %2653 = vmatpush1.bf16.msra.mxu0 0
    %2654 = vmatprep.subr.bf16.mxu0 0
    %2655 = vmatpush1.bf16.msra.mxu0 0
    %2656 = vmatprep.subr.bf16.mxu0 0
    %2657 = vmatpush1.bf16.msra.mxu0 0
    %2658 = vmatprep.mubr.bf16.mxu0 0
    %2659 = vmatmul.mubr.bf16.gmra.mrb[0].mxu0 %v2625
    %v2660 = vpop.f32.mrb[0].mxu0
    %v2661 = vadd.f32 0.0, %v2660
    %v2662 = vpop.f32.mrb[0].mxu0
    %v2663 = vadd.f32 0.0, %v2662
    %v2664 = vpop.f32.mrb[0].mxu0
    %v2665 = vpop.f32.mrb[0].mxu0
    %2666 = vdwg.mxu0
    %2667 = vmatprep.subr.bf16.mxu0 %v1530
    %2668 = vmatpush1.bf16.msra.mxu0 %v1529
    %2669 = vmatprep.subr.bf16.mxu0 %v1534
    %2670 = vmatpush1.bf16.msra.mxu0 %v1533
    %2671 = vmatprep.subr.bf16.mxu0 %v1538
    %2672 = vmatpush1.bf16.msra.mxu0 %v1537
    %2673 = vmatprep.subr.bf16.mxu0 %v1542
    %2674 = vmatpush1.bf16.msra.mxu0 %v1541
    %2675 = vmatprep.subr.bf16.mxu0 %v1546
    %2676 = vmatpush1.bf16.msra.mxu0 %v1545
    %2677 = vmatprep.subr.bf16.mxu0 %v1550
    %2678 = vmatpush1.bf16.msra.mxu0 %v1549
    %2679 = vmatprep.subr.bf16.mxu0 %v1554
    %2680 = vmatpush1.bf16.msra.mxu0 %v1553
    %2681 = vmatprep.subr.bf16.mxu0 %v1558
    %2682 = vmatpush1.bf16.msra.mxu0 %v1557
    %2683 = vmatprep.subr.bf16.mxu0 0
    %2684 = vmatpush1.bf16.msra.mxu0 0
    %2685 = vmatprep.subr.bf16.mxu0 0
    %2686 = vmatpush1.bf16.msra.mxu0 0
    %2687 = vmatprep.subr.bf16.mxu0 0
    %2688 = vmatpush1.bf16.msra.mxu0 0
    %2689 = vmatprep.subr.bf16.mxu0 0
    %2690 = vmatpush1.bf16.msra.mxu0 0
    %2691 = vmatprep.subr.bf16.mxu0 0
    %2692 = vmatpush1.bf16.msra.mxu0 0
    %2693 = vmatprep.subr.bf16.mxu0 0
    %2694 = vmatpush1.bf16.msra.mxu0 0
    %2695 = vmatprep.subr.bf16.mxu0 0
    %2696 = vmatpush1.bf16.msra.mxu0 0
    %2697 = vmatprep.subr.bf16.mxu0 0
    %2698 = vmatpush1.bf16.msra.mxu0 0
    %2699 = vmatprep.mubr.bf16.mxu0 0
    %2700 = vmatmul.mubr.bf16.gmra.mrb[0].mxu0 %v2625
    %v2701 = vpop.f32.mrb[0].mxu0
    %v2702 = vadd.f32 0.0, %v2701
    %v2703 = vpop.f32.mrb[0].mxu0
    %v2704 = vadd.f32 0.0, %v2703
    %v2705 = vpop.f32.mrb[0].mxu0
    %v2706 = vpop.f32.mrb[0].mxu0
    %2707 = vdwg.mxu0
    %v2712 = vrot.slane %v2661, 2
    %v2713 = vrot.slane %v2663, 2
    %v2714 = vrot.slane %v2702, 2
    %v2715 = vrot.slane %v2704, 2
    %v2720 = vadd.f32 %v1066, %v2712
    %v2721 = vadd.f32 %v1068, %v2713
    %v2722 = vadd.f32 %v1109, %v2714
    %v2723 = vadd.f32 %v1111, %v2715
    %v2724 = vxor.u32 %v2621, 2147483648
    %v2725 = vmul.f32 %v2724, 1.442695
    %v2726 = vpow.pop %v2725
    %v2727 = vadd.f32 %v2726, 1.0
    %v2728 = vrcp.pop %v2727
    %v2729 = vmul.f32 1.0, %v2728
    %v2730 = vxor.u32 %v2622, 2147483648
    %v2731 = vmul.f32 %v2730, 1.442695
    %v2732 = vpow.pop %v2731
    %v2733 = vadd.f32 %v2732, 1.0
    %v2734 = vrcp.pop %v2733
    %v2735 = vmul.f32 1.0, %v2734
    %v2736 = vtanh.pop %v2623
    %v2737 = vxor.u32 %v2624, 2147483648
    %v2738 = vmul.f32 %v2737, 1.442695
    %v2739 = vpow.pop %v2738
    %v2740 = vadd.f32 %v2739, 1.0
    %v2741 = vrcp.pop %v2740
    %v2742 = vmul.f32 1.0, %v2741
    %v2743 = vmul.f32 %v2735, %v2535
    %v2744 = vmul.f32 %v2729, %v2736
    %v2745 = vadd.f32 %v2743, %v2744
    %v2746 = vtanh.pop %v2745
    %v2747 = vmul.f32 %v2742, %v2746
    %v2748 = vxor.u32 %v2720, 2147483648
    %v2749 = vmul.f32 %v2748, 1.442695
    %v2750 = vpow.pop %v2749
    %v2751 = vadd.f32 %v2750, 1.0
    %v2752 = vrcp.pop %v2751
    %v2753 = vmul.f32 1.0, %v2752
    %v2754 = vxor.u32 %v2721, 2147483648
    %v2755 = vmul.f32 %v2754, 1.442695
    %v2756 = vpow.pop %v2755
    %v2757 = vadd.f32 %v2756, 1.0
    %v2758 = vrcp.pop %v2757
    %v2759 = vmul.f32 1.0, %v2758
    %v2760 = vtanh.pop %v2722
    %v2761 = vxor.u32 %v2723, 2147483648
    %v2762 = vmul.f32 %v2761, 1.442695
    %v2763 = vpow.pop %v2762
    %v2764 = vadd.f32 %v2763, 1.0
    %v2765 = vrcp.pop %v2764
    %v2766 = vmul.f32 1.0, %v2765
    %v2768 = vrot.slane %v2537, 2
    %v2770 = vmul.f32 %v2759, %v2768
    %v2771 = vmul.f32 %v2753, %v2760
    %v2772 = vadd.f32 %v2770, %v2771
    %v2773 = vtanh.pop %v2772
    %v2774 = vmul.f32 %v2766, %v2773
    %v2775 = vsel %vm2527, %v2747, %v2531
    %v2776 = vsel %vm2527, %v2745, %v2535
    %v2778 = vrot.slane %v2774, 6
    %v2780 = vsel %vm2526, %v2778, %v2536
    %v2782 = vrot.slane %v2772, 6
    %v2784 = vsel %vm2526, %v2782, %v2537
    %v2785 = vpack.c.bf16 %v2775, %v2775
    %2786 = vmatprep.subr.bf16.mxu0 %v1282
    %2787 = vmatpush1.bf16.msra.mxu0 %v1281
    %2788 = vmatprep.subr.bf16.mxu0 %v1286
    %2789 = vmatpush1.bf16.msra.mxu0 %v1285
    %2790 = vmatprep.subr.bf16.mxu0 %v1290
    %2791 = vmatpush1.bf16.msra.mxu0 %v1289
    %2792 = vmatprep.subr.bf16.mxu0 %v1294
    %2793 = vmatpush1.bf16.msra.mxu0 %v1293
    %2794 = vmatprep.subr.bf16.mxu0 %v1298
    %2795 = vmatpush1.bf16.msra.mxu0 %v1297
    %2796 = vmatprep.subr.bf16.mxu0 %v1302
    %2797 = vmatpush1.bf16.msra.mxu0 %v1301
    %2798 = vmatprep.subr.bf16.mxu0 %v1306
    %2799 = vmatpush1.bf16.msra.mxu0 %v1305
    %2800 = vmatprep.subr.bf16.mxu0 %v1310
    %2801 = vmatpush1.bf16.msra.mxu0 %v1309
    %2802 = vmatprep.subr.bf16.mxu0 0
    %2803 = vmatpush1.bf16.msra.mxu0 0
    %2804 = vmatprep.subr.bf16.mxu0 0
    %2805 = vmatpush1.bf16.msra.mxu0 0
    %2806 = vmatprep.subr.bf16.mxu0 0
    %2807 = vmatpush1.bf16.msra.mxu0 0
    %2808 = vmatprep.subr.bf16.mxu0 0
    %2809 = vmatpush1.bf16.msra.mxu0 0
    %2810 = vmatprep.subr.bf16.mxu0 0
    %2811 = vmatpush1.bf16.msra.mxu0 0
    %2812 = vmatprep.subr.bf16.mxu0 0
    %2813 = vmatpush1.bf16.msra.mxu0 0
    %2814 = vmatprep.subr.bf16.mxu0 0
    %2815 = vmatpush1.bf16.msra.mxu0 0
    %2816 = vmatprep.subr.bf16.mxu0 0
    %2817 = vmatpush1.bf16.msra.mxu0 0
    %2818 = vmatprep.mubr.bf16.mxu0 0
    %2819 = vmatmul.mubr.bf16.gmra.mrb[0].mxu0 %v2785
    %v2820 = vpop.f32.mrb[0].mxu0
    %v2821 = vadd.f32 0.0, %v2820
    %v2822 = vpop.f32.mrb[0].mxu0
    %v2823 = vadd.f32 0.0, %v2822
    %v2824 = vpop.f32.mrb[0].mxu0
    %v2825 = vpop.f32.mrb[0].mxu0
    %2826 = vdwg.mxu0
    %2827 = vmatprep.subr.bf16.mxu0 %v1284
    %2828 = vmatpush1.bf16.msra.mxu0 %v1283
    %2829 = vmatprep.subr.bf16.mxu0 %v1288
    %2830 = vmatpush1.bf16.msra.mxu0 %v1287
    %2831 = vmatprep.subr.bf16.mxu0 %v1292
    %2832 = vmatpush1.bf16.msra.mxu0 %v1291
    %2833 = vmatprep.subr.bf16.mxu0 %v1296
    %2834 = vmatpush1.bf16.msra.mxu0 %v1295
    %2835 = vmatprep.subr.bf16.mxu0 %v1300
    %2836 = vmatpush1.bf16.msra.mxu0 %v1299
    %2837 = vmatprep.subr.bf16.mxu0 %v1304
    %2838 = vmatpush1.bf16.msra.mxu0 %v1303
    %2839 = vmatprep.subr.bf16.mxu0 %v1308
    %2840 = vmatpush1.bf16.msra.mxu0 %v1307
    %2841 = vmatprep.subr.bf16.mxu0 %v1312
    %2842 = vmatpush1.bf16.msra.mxu0 %v1311
    %2843 = vmatprep.subr.bf16.mxu0 0
    %2844 = vmatpush1.bf16.msra.mxu0 0
    %2845 = vmatprep.subr.bf16.mxu0 0
    %2846 = vmatpush1.bf16.msra.mxu0 0
    %2847 = vmatprep.subr.bf16.mxu0 0
    %2848 = vmatpush1.bf16.msra.mxu0 0
    %2849 = vmatprep.subr.bf16.mxu0 0
    %2850 = vmatpush1.bf16.msra.mxu0 0
    %2851 = vmatprep.subr.bf16.mxu0 0
    %2852 = vmatpush1.bf16.msra.mxu0 0
    %2853 = vmatprep.subr.bf16.mxu0 0
    %2854 = vmatpush1.bf16.msra.mxu0 0
    %2855 = vmatprep.subr.bf16.mxu0 0
    %2856 = vmatpush1.bf16.msra.mxu0 0
    %2857 = vmatprep.subr.bf16.mxu0 0
    %2858 = vmatpush1.bf16.msra.mxu0 0
    %2859 = vmatprep.mubr.bf16.mxu0 0
    %2860 = vmatmul.mubr.bf16.gmra.mrb[0].mxu0 %v2785
    %v2861 = vpop.f32.mrb[0].mxu0
    %v2862 = vadd.f32 0.0, %v2861
    %v2863 = vpop.f32.mrb[0].mxu0
    %v2864 = vadd.f32 0.0, %v2863
    %v2865 = vpop.f32.mrb[0].mxu0
    %v2866 = vpop.f32.mrb[0].mxu0
    %2867 = vdwg.mxu0
    %v2872 = vrot.slane %v2821, 6
    %v2873 = vrot.slane %v2823, 6
    %v2874 = vrot.slane %v2862, 6
    %v2875 = vrot.slane %v2864, 6
    %v2880 = vadd.f32 %v984, %v2872
    %v2881 = vadd.f32 %v986, %v2873
    %v2882 = vadd.f32 %v1027, %v2874
    %v2883 = vadd.f32 %v1029, %v2875
    %v2884 = vpack.c.bf16 %v2780, %v2780
    %2885 = vmatprep.subr.bf16.mxu0 %v1528
    %2886 = vmatpush1.bf16.msra.mxu0 %v1527
    %2887 = vmatprep.subr.bf16.mxu0 %v1532
    %2888 = vmatpush1.bf16.msra.mxu0 %v1531
    %2889 = vmatprep.subr.bf16.mxu0 %v1536
    %2890 = vmatpush1.bf16.msra.mxu0 %v1535
    %2891 = vmatprep.subr.bf16.mxu0 %v1540
    %2892 = vmatpush1.bf16.msra.mxu0 %v1539
    %2893 = vmatprep.subr.bf16.mxu0 %v1544
    %2894 = vmatpush1.bf16.msra.mxu0 %v1543
    %2895 = vmatprep.subr.bf16.mxu0 %v1548
    %2896 = vmatpush1.bf16.msra.mxu0 %v1547
    %2897 = vmatprep.subr.bf16.mxu0 %v1552
    %2898 = vmatpush1.bf16.msra.mxu0 %v1551
    %2899 = vmatprep.subr.bf16.mxu0 %v1556
    %2900 = vmatpush1.bf16.msra.mxu0 %v1555
    %2901 = vmatprep.subr.bf16.mxu0 0
    %2902 = vmatpush1.bf16.msra.mxu0 0
    %2903 = vmatprep.subr.bf16.mxu0 0
    %2904 = vmatpush1.bf16.msra.mxu0 0
    %2905 = vmatprep.subr.bf16.mxu0 0
    %2906 = vmatpush1.bf16.msra.mxu0 0
    %2907 = vmatprep.subr.bf16.mxu0 0
    %2908 = vmatpush1.bf16.msra.mxu0 0
    %2909 = vmatprep.subr.bf16.mxu0 0
    %2910 = vmatpush1.bf16.msra.mxu0 0
    %2911 = vmatprep.subr.bf16.mxu0 0
    %2912 = vmatpush1.bf16.msra.mxu0 0
    %2913 = vmatprep.subr.bf16.mxu0 0
    %2914 = vmatpush1.bf16.msra.mxu0 0
    %2915 = vmatprep.subr.bf16.mxu0 0
    %2916 = vmatpush1.bf16.msra.mxu0 0
    %2917 = vmatprep.mubr.bf16.mxu0 0
    %2918 = vmatmul.mubr.bf16.gmra.mrb[0].mxu0 %v2884
    %v2919 = vpop.f32.mrb[0].mxu0
    %v2920 = vadd.f32 0.0, %v2919
    %v2921 = vpop.f32.mrb[0].mxu0
    %v2922 = vadd.f32 0.0, %v2921
    %v2923 = vpop.f32.mrb[0].mxu0
    %v2924 = vpop.f32.mrb[0].mxu0
    %2925 = vdwg.mxu0
    %2926 = vmatprep.subr.bf16.mxu0 %v1530
    %2927 = vmatpush1.bf16.msra.mxu0 %v1529
    %2928 = vmatprep.subr.bf16.mxu0 %v1534
    %2929 = vmatpush1.bf16.msra.mxu0 %v1533
    %2930 = vmatprep.subr.bf16.mxu0 %v1538
    %2931 = vmatpush1.bf16.msra.mxu0 %v1537
    %2932 = vmatprep.subr.bf16.mxu0 %v1542
    %2933 = vmatpush1.bf16.msra.mxu0 %v1541
    %2934 = vmatprep.subr.bf16.mxu0 %v1546
    %2935 = vmatpush1.bf16.msra.mxu0 %v1545
    %2936 = vmatprep.subr.bf16.mxu0 %v1550
    %2937 = vmatpush1.bf16.msra.mxu0 %v1549
    %2938 = vmatprep.subr.bf16.mxu0 %v1554
    %2939 = vmatpush1.bf16.msra.mxu0 %v1553
    %2940 = vmatprep.subr.bf16.mxu0 %v1558
    %2941 = vmatpush1.bf16.msra.mxu0 %v1557
    %2942 = vmatprep.subr.bf16.mxu0 0
    %2943 = vmatpush1.bf16.msra.mxu0 0
    %2944 = vmatprep.subr.bf16.mxu0 0
    %2945 = vmatpush1.bf16.msra.mxu0 0
    %2946 = vmatprep.subr.bf16.mxu0 0
    %2947 = vmatpush1.bf16.msra.mxu0 0
    %2948 = vmatprep.subr.bf16.mxu0 0
    %2949 = vmatpush1.bf16.msra.mxu0 0
    %2950 = vmatprep.subr.bf16.mxu0 0
    %2951 = vmatpush1.bf16.msra.mxu0 0
    %2952 = vmatprep.subr.bf16.mxu0 0
    %2953 = vmatpush1.bf16.msra.mxu0 0
    %2954 = vmatprep.subr.bf16.mxu0 0
    %2955 = vmatpush1.bf16.msra.mxu0 0
    %2956 = vmatprep.subr.bf16.mxu0 0
    %2957 = vmatpush1.bf16.msra.mxu0 0
    %2958 = vmatprep.mubr.bf16.mxu0 0
    %2959 = vmatmul.mubr.bf16.gmra.mrb[0].mxu0 %v2884
    %v2960 = vpop.f32.mrb[0].mxu0
    %v2961 = vadd.f32 0.0, %v2960
    %v2962 = vpop.f32.mrb[0].mxu0
    %v2963 = vadd.f32 0.0, %v2962
    %v2964 = vpop.f32.mrb[0].mxu0
    %v2965 = vpop.f32.mrb[0].mxu0
    %2966 = vdwg.mxu0
    %v2971 = vrot.slane %v2920, 4
    %v2972 = vrot.slane %v2922, 4
    %v2973 = vrot.slane %v2961, 4
    %v2974 = vrot.slane %v2963, 4
    %v2979 = vadd.f32 %v1066, %v2971
    %v2980 = vadd.f32 %v1068, %v2972
    %v2981 = vadd.f32 %v1109, %v2973
    %v2982 = vadd.f32 %v1111, %v2974
    %v2983 = vxor.u32 %v2880, 2147483648
    %v2984 = vmul.f32 %v2983, 1.442695
    %v2985 = vpow.pop %v2984
    %v2986 = vadd.f32 %v2985, 1.0
    %v2987 = vrcp.pop %v2986
    %v2988 = vmul.f32 1.0, %v2987
    %v2989 = vxor.u32 %v2881, 2147483648
    %v2990 = vmul.f32 %v2989, 1.442695
    %v2991 = vpow.pop %v2990
    %v2992 = vadd.f32 %v2991, 1.0
    %v2993 = vrcp.pop %v2992
    %v2994 = vmul.f32 1.0, %v2993
    %v2995 = vtanh.pop %v2882
    %v2996 = vxor.u32 %v2883, 2147483648
    %v2997 = vmul.f32 %v2996, 1.442695
    %v2998 = vpow.pop %v2997
    %v2999 = vadd.f32 %v2998, 1.0
    %v3000 = vrcp.pop %v2999
    %v3001 = vmul.f32 1.0, %v3000
    %v3003 = vrot.slane %v2776, 6
    %v3005 = vmul.f32 %v2994, %v3003
    %v3006 = vmul.f32 %v2988, %v2995
    %v3007 = vadd.f32 %v3005, %v3006
    %v3008 = vtanh.pop %v3007
    %v3009 = vmul.f32 %v3001, %v3008
    %v3010 = vxor.u32 %v2979, 2147483648
    %v3011 = vmul.f32 %v3010, 1.442695
    %v3012 = vpow.pop %v3011
    %v3013 = vadd.f32 %v3012, 1.0
    %v3014 = vrcp.pop %v3013
    %v3015 = vmul.f32 1.0, %v3014
    %v3016 = vxor.u32 %v2980, 2147483648
    %v3017 = vmul.f32 %v3016, 1.442695
    %v3018 = vpow.pop %v3017
    %v3019 = vadd.f32 %v3018, 1.0
    %v3020 = vrcp.pop %v3019
    %v3021 = vmul.f32 1.0, %v3020
    %v3022 = vtanh.pop %v2981
    %v3023 = vxor.u32 %v2982, 2147483648
    %v3024 = vmul.f32 %v3023, 1.442695
    %v3025 = vpow.pop %v3024
    %v3026 = vadd.f32 %v3025, 1.0
    %v3027 = vrcp.pop %v3026
    %v3028 = vmul.f32 1.0, %v3027
    %v3030 = vrot.slane %v2784, 4
    %v3032 = vmul.f32 %v3021, %v3030
    %v3033 = vmul.f32 %v3015, %v3022
    %v3034 = vadd.f32 %v3032, %v3033
    %v3035 = vtanh.pop %v3034
    %v3036 = vmul.f32 %v3028, %v3035
    %v3038 = vrot.slane %v3009, 2
    %v3040 = vsel %vm2272, %v3038, %v2775
    %v3042 = vrot.slane %v3007, 2
    %v3044 = vsel %vm2272, %v3042, %v2776
    %v3046 = vrot.slane %v3036, 4
    %v3048 = vsel %vm2271, %v3046, %v2780
    %v3050 = vrot.slane %v3034, 4
    %v3052 = vsel %vm2271, %v3050, %v2784
    %v3053 = vpack.c.bf16 %v3040, %v3040
    %3054 = vmatprep.subr.bf16.mxu0 %v1282
    %3055 = vmatpush1.bf16.msra.mxu0 %v1281
    %3056 = vmatprep.subr.bf16.mxu0 %v1286
    %3057 = vmatpush1.bf16.msra.mxu0 %v1285
    %3058 = vmatprep.subr.bf16.mxu0 %v1290
    %3059 = vmatpush1.bf16.msra.mxu0 %v1289
    %3060 = vmatprep.subr.bf16.mxu0 %v1294
    %3061 = vmatpush1.bf16.msra.mxu0 %v1293
    %3062 = vmatprep.subr.bf16.mxu0 %v1298
    %3063 = vmatpush1.bf16.msra.mxu0 %v1297
    %3064 = vmatprep.subr.bf16.mxu0 %v1302
    %3065 = vmatpush1.bf16.msra.mxu0 %v1301
    %3066 = vmatprep.subr.bf16.mxu0 %v1306
    %3067 = vmatpush1.bf16.msra.mxu0 %v1305
    %3068 = vmatprep.subr.bf16.mxu0 %v1310
    %3069 = vmatpush1.bf16.msra.mxu0 %v1309
    %3070 = vmatprep.subr.bf16.mxu0 0
    %3071 = vmatpush1.bf16.msra.mxu0 0
    %3072 = vmatprep.subr.bf16.mxu0 0
    %3073 = vmatpush1.bf16.msra.mxu0 0
    %3074 = vmatprep.subr.bf16.mxu0 0
    %3075 = vmatpush1.bf16.msra.mxu0 0
    %3076 = vmatprep.subr.bf16.mxu0 0
    %3077 = vmatpush1.bf16.msra.mxu0 0
    %3078 = vmatprep.subr.bf16.mxu0 0
    %3079 = vmatpush1.bf16.msra.mxu0 0
    %3080 = vmatprep.subr.bf16.mxu0 0
    %3081 = vmatpush1.bf16.msra.mxu0 0
    %3082 = vmatprep.subr.bf16.mxu0 0
    %3083 = vmatpush1.bf16.msra.mxu0 0
    %3084 = vmatprep.subr.bf16.mxu0 0
    %3085 = vmatpush1.bf16.msra.mxu0 0
    %3086 = vmatprep.mubr.bf16.mxu0 0
    %3087 = vmatmul.mubr.bf16.gmra.mrb[0].mxu0 %v3053
    %v3088 = vpop.f32.mrb[0].mxu0
    %v3089 = vadd.f32 0.0, %v3088
    %v3090 = vpop.f32.mrb[0].mxu0
    %v3091 = vadd.f32 0.0, %v3090
    %v3092 = vpop.f32.mrb[0].mxu0
    %v3093 = vpop.f32.mrb[0].mxu0
    %3094 = vdwg.mxu0
    %3095 = vmatprep.subr.bf16.mxu0 %v1284
    %3096 = vmatpush1.bf16.msra.mxu0 %v1283
    %3097 = vmatprep.subr.bf16.mxu0 %v1288
    %3098 = vmatpush1.bf16.msra.mxu0 %v1287
    %3099 = vmatprep.subr.bf16.mxu0 %v1292
    %3100 = vmatpush1.bf16.msra.mxu0 %v1291
    %3101 = vmatprep.subr.bf16.mxu0 %v1296
    %3102 = vmatpush1.bf16.msra.mxu0 %v1295
    %3103 = vmatprep.subr.bf16.mxu0 %v1300
    %3104 = vmatpush1.bf16.msra.mxu0 %v1299
    %3105 = vmatprep.subr.bf16.mxu0 %v1304
    %3106 = vmatpush1.bf16.msra.mxu0 %v1303
    %3107 = vmatprep.subr.bf16.mxu0 %v1308
    %3108 = vmatpush1.bf16.msra.mxu0 %v1307
    %3109 = vmatprep.subr.bf16.mxu0 %v1312
    %3110 = vmatpush1.bf16.msra.mxu0 %v1311
    %3111 = vmatprep.subr.bf16.mxu0 0
    %3112 = vmatpush1.bf16.msra.mxu0 0
    %3113 = vmatprep.subr.bf16.mxu0 0
    %3114 = vmatpush1.bf16.msra.mxu0 0
    %3115 = vmatprep.subr.bf16.mxu0 0
    %3116 = vmatpush1.bf16.msra.mxu0 0
    %3117 = vmatprep.subr.bf16.mxu0 0
    %3118 = vmatpush1.bf16.msra.mxu0 0
    %3119 = vmatprep.subr.bf16.mxu0 0
    %3120 = vmatpush1.bf16.msra.mxu0 0
    %3121 = vmatprep.subr.bf16.mxu0 0
    %3122 = vmatpush1.bf16.msra.mxu0 0
    %3123 = vmatprep.subr.bf16.mxu0 0
    %3124 = vmatpush1.bf16.msra.mxu0 0
    %3125 = vmatprep.subr.bf16.mxu0 0
    %3126 = vmatpush1.bf16.msra.mxu0 0
    %3127 = vmatprep.mubr.bf16.mxu0 0
    %3128 = vmatmul.mubr.bf16.gmra.mrb[0].mxu0 %v3053
    %v3129 = vpop.f32.mrb[0].mxu0
    %v3130 = vadd.f32 0.0, %v3129
    %v3131 = vpop.f32.mrb[0].mxu0
    %v3132 = vadd.f32 0.0, %v3131
    %v3133 = vpop.f32.mrb[0].mxu0
    %v3134 = vpop.f32.mrb[0].mxu0
    %3135 = vdwg.mxu0
    %v3140 = vrot.slane %v3089, 4
    %v3141 = vrot.slane %v3091, 4
    %v3142 = vrot.slane %v3130, 4
    %v3143 = vrot.slane %v3132, 4
    %v3148 = vadd.f32 %v984, %v3140
    %v3149 = vadd.f32 %v986, %v3141
    %v3150 = vadd.f32 %v1027, %v3142
    %v3151 = vadd.f32 %v1029, %v3143
    %v3152 = vpack.c.bf16 %v3048, %v3048
    %3153 = vmatprep.subr.bf16.mxu0 %v1528
    %3154 = vmatpush1.bf16.msra.mxu0 %v1527
    %3155 = vmatprep.subr.bf16.mxu0 %v1532
    %3156 = vmatpush1.bf16.msra.mxu0 %v1531
    %3157 = vmatprep.subr.bf16.mxu0 %v1536
    %3158 = vmatpush1.bf16.msra.mxu0 %v1535
    %3159 = vmatprep.subr.bf16.mxu0 %v1540
    %3160 = vmatpush1.bf16.msra.mxu0 %v1539
    %3161 = vmatprep.subr.bf16.mxu0 %v1544
    %3162 = vmatpush1.bf16.msra.mxu0 %v1543
    %3163 = vmatprep.subr.bf16.mxu0 %v1548
    %3164 = vmatpush1.bf16.msra.mxu0 %v1547
    %3165 = vmatprep.subr.bf16.mxu0 %v1552
    %3166 = vmatpush1.bf16.msra.mxu0 %v1551
    %3167 = vmatprep.subr.bf16.mxu0 %v1556
    %3168 = vmatpush1.bf16.msra.mxu0 %v1555
    %3169 = vmatprep.subr.bf16.mxu0 0
    %3170 = vmatpush1.bf16.msra.mxu0 0
    %3171 = vmatprep.subr.bf16.mxu0 0
    %3172 = vmatpush1.bf16.msra.mxu0 0
    %3173 = vmatprep.subr.bf16.mxu0 0
    %3174 = vmatpush1.bf16.msra.mxu0 0
    %3175 = vmatprep.subr.bf16.mxu0 0
    %3176 = vmatpush1.bf16.msra.mxu0 0
    %3177 = vmatprep.subr.bf16.mxu0 0
    %3178 = vmatpush1.bf16.msra.mxu0 0
    %3179 = vmatprep.subr.bf16.mxu0 0
    %3180 = vmatpush1.bf16.msra.mxu0 0
    %3181 = vmatprep.subr.bf16.mxu0 0
    %3182 = vmatpush1.bf16.msra.mxu0 0
    %3183 = vmatprep.subr.bf16.mxu0 0
    %3184 = vmatpush1.bf16.msra.mxu0 0
    %3185 = vmatprep.mubr.bf16.mxu0 0
    %3186 = vmatmul.mubr.bf16.gmra.mrb[0].mxu0 %v3152
    %v3187 = vpop.f32.mrb[0].mxu0
    %v3188 = vadd.f32 0.0, %v3187
    %v3189 = vpop.f32.mrb[0].mxu0
    %v3190 = vadd.f32 0.0, %v3189
    %v3191 = vpop.f32.mrb[0].mxu0
    %v3192 = vpop.f32.mrb[0].mxu0
    %3193 = vdwg.mxu0
    %3194 = vmatprep.subr.bf16.mxu0 %v1530
    %3195 = vmatpush1.bf16.msra.mxu0 %v1529
    %3196 = vmatprep.subr.bf16.mxu0 %v1534
    %3197 = vmatpush1.bf16.msra.mxu0 %v1533
    %3198 = vmatprep.subr.bf16.mxu0 %v1538
    %3199 = vmatpush1.bf16.msra.mxu0 %v1537
    %3200 = vmatprep.subr.bf16.mxu0 %v1542
    %3201 = vmatpush1.bf16.msra.mxu0 %v1541
    %3202 = vmatprep.subr.bf16.mxu0 %v1546
    %3203 = vmatpush1.bf16.msra.mxu0 %v1545
    %3204 = vmatprep.subr.bf16.mxu0 %v1550
    %3205 = vmatpush1.bf16.msra.mxu0 %v1549
    %3206 = vmatprep.subr.bf16.mxu0 %v1554
    %3207 = vmatpush1.bf16.msra.mxu0 %v1553
    %3208 = vmatprep.subr.bf16.mxu0 %v1558
    %3209 = vmatpush1.bf16.msra.mxu0 %v1557
    %3210 = vmatprep.subr.bf16.mxu0 0
    %3211 = vmatpush1.bf16.msra.mxu0 0
    %3212 = vmatprep.subr.bf16.mxu0 0
    %3213 = vmatpush1.bf16.msra.mxu0 0
    %3214 = vmatprep.subr.bf16.mxu0 0
    %3215 = vmatpush1.bf16.msra.mxu0 0
    %3216 = vmatprep.subr.bf16.mxu0 0
    %3217 = vmatpush1.bf16.msra.mxu0 0
    %3218 = vmatprep.subr.bf16.mxu0 0
    %3219 = vmatpush1.bf16.msra.mxu0 0
    %3220 = vmatprep.subr.bf16.mxu0 0
    %3221 = vmatpush1.bf16.msra.mxu0 0
    %3222 = vmatprep.subr.bf16.mxu0 0
    %3223 = vmatpush1.bf16.msra.mxu0 0
    %3224 = vmatprep.subr.bf16.mxu0 0
    %3225 = vmatpush1.bf16.msra.mxu0 0
    %3226 = vmatprep.mubr.bf16.mxu0 0
    %3227 = vmatmul.mubr.bf16.gmra.mrb[0].mxu0 %v3152
    %v3228 = vpop.f32.mrb[0].mxu0
    %v3229 = vadd.f32 0.0, %v3228
    %v3230 = vpop.f32.mrb[0].mxu0
    %v3231 = vadd.f32 0.0, %v3230
    %v3232 = vpop.f32.mrb[0].mxu0
    %v3233 = vpop.f32.mrb[0].mxu0
    %3234 = vdwg.mxu0
    %v3239 = vrot.slane %v3188, 6
    %v3240 = vrot.slane %v3190, 6
    %v3241 = vrot.slane %v3229, 6
    %v3242 = vrot.slane %v3231, 6
    %v3247 = vadd.f32 %v1066, %v3239
    %v3248 = vadd.f32 %v1068, %v3240
    %v3249 = vadd.f32 %v1109, %v3241
    %v3250 = vadd.f32 %v1111, %v3242
    %v3251 = vxor.u32 %v3148, 2147483648
    %v3252 = vmul.f32 %v3251, 1.442695
    %v3253 = vpow.pop %v3252
    %v3254 = vadd.f32 %v3253, 1.0
    %v3255 = vrcp.pop %v3254
    %v3256 = vmul.f32 1.0, %v3255
    %v3257 = vxor.u32 %v3149, 2147483648
    %v3258 = vmul.f32 %v3257, 1.442695
    %v3259 = vpow.pop %v3258
    %v3260 = vadd.f32 %v3259, 1.0
    %v3261 = vrcp.pop %v3260
    %v3262 = vmul.f32 1.0, %v3261
    %v3263 = vtanh.pop %v3150
    %v3264 = vxor.u32 %v3151, 2147483648
    %v3265 = vmul.f32 %v3264, 1.442695
    %v3266 = vpow.pop %v3265
    %v3267 = vadd.f32 %v3266, 1.0
    %v3268 = vrcp.pop %v3267
    %v3269 = vmul.f32 1.0, %v3268
    %v3271 = vrot.slane %v3044, 4
    %v3273 = vmul.f32 %v3262, %v3271
    %v3274 = vmul.f32 %v3256, %v3263
    %v3275 = vadd.f32 %v3273, %v3274
    %v3276 = vtanh.pop %v3275
    %v3277 = vmul.f32 %v3269, %v3276
    %v3278 = vxor.u32 %v3247, 2147483648
    %v3279 = vmul.f32 %v3278, 1.442695
    %v3280 = vpow.pop %v3279
    %v3281 = vadd.f32 %v3280, 1.0
    %v3282 = vrcp.pop %v3281
    %v3283 = vmul.f32 1.0, %v3282
    %v3284 = vxor.u32 %v3248, 2147483648
    %v3285 = vmul.f32 %v3284, 1.442695
    %v3286 = vpow.pop %v3285
    %v3287 = vadd.f32 %v3286, 1.0
    %v3288 = vrcp.pop %v3287
    %v3289 = vmul.f32 1.0, %v3288
    %v3290 = vtanh.pop %v3249
    %v3291 = vxor.u32 %v3250, 2147483648
    %v3292 = vmul.f32 %v3291, 1.442695
    %v3293 = vpow.pop %v3292
    %v3294 = vadd.f32 %v3293, 1.0
    %v3295 = vrcp.pop %v3294
    %v3296 = vmul.f32 1.0, %v3295
    %v3298 = vrot.slane %v3052, 6
    %v3300 = vmul.f32 %v3289, %v3298
    %v3301 = vmul.f32 %v3283, %v3290
    %v3302 = vadd.f32 %v3300, %v3301
    %v3303 = vtanh.pop %v3302
    %v3304 = vmul.f32 %v3296, %v3303
    %v3306 = vrot.slane %v3277, 4
    %v3308 = vsel %vm2002, %v3306, %v3040
    %v3310 = vrot.slane %v3275, 4
    %v3312 = vsel %vm2002, %v3310, %v3044
    %v3314 = vrot.slane %v3304, 2
    %v3316 = vsel %vm2001, %v3314, %v3048
    %v3318 = vrot.slane %v3302, 2
    %v3320 = vsel %vm2001, %v3318, %v3052
    %v3321 = vpack.c.bf16 %v3308, %v3308
    %3322 = vmatprep.subr.bf16.mxu0 %v1282
    %3323 = vmatpush1.bf16.msra.mxu0 %v1281
    %3324 = vmatprep.subr.bf16.mxu0 %v1286
    %3325 = vmatpush1.bf16.msra.mxu0 %v1285
    %3326 = vmatprep.subr.bf16.mxu0 %v1290
    %3327 = vmatpush1.bf16.msra.mxu0 %v1289
    %3328 = vmatprep.subr.bf16.mxu0 %v1294
    %3329 = vmatpush1.bf16.msra.mxu0 %v1293
    %3330 = vmatprep.subr.bf16.mxu0 %v1298
    %3331 = vmatpush1.bf16.msra.mxu0 %v1297
    %3332 = vmatprep.subr.bf16.mxu0 %v1302
    %3333 = vmatpush1.bf16.msra.mxu0 %v1301
    %3334 = vmatprep.subr.bf16.mxu0 %v1306
    %3335 = vmatpush1.bf16.msra.mxu0 %v1305
    %3336 = vmatprep.subr.bf16.mxu0 %v1310
    %3337 = vmatpush1.bf16.msra.mxu0 %v1309
    %3338 = vmatprep.subr.bf16.mxu0 0
    %3339 = vmatpush1.bf16.msra.mxu0 0
    %3340 = vmatprep.subr.bf16.mxu0 0
    %3341 = vmatpush1.bf16.msra.mxu0 0
    %3342 = vmatprep.subr.bf16.mxu0 0
    %3343 = vmatpush1.bf16.msra.mxu0 0
    %3344 = vmatprep.subr.bf16.mxu0 0
    %3345 = vmatpush1.bf16.msra.mxu0 0
    %3346 = vmatprep.subr.bf16.mxu0 0
    %3347 = vmatpush1.bf16.msra.mxu0 0
    %3348 = vmatprep.subr.bf16.mxu0 0
    %3349 = vmatpush1.bf16.msra.mxu0 0
    %3350 = vmatprep.subr.bf16.mxu0 0
    %3351 = vmatpush1.bf16.msra.mxu0 0
    %3352 = vmatprep.subr.bf16.mxu0 0
    %3353 = vmatpush1.bf16.msra.mxu0 0
    %3354 = vmatprep.mubr.bf16.mxu0 0
    %3355 = vmatmul.mubr.bf16.gmra.mrb[0].mxu0 %v3321
    %v3356 = vpop.f32.mrb[0].mxu0
    %v3357 = vadd.f32 0.0, %v3356
    %v3358 = vpop.f32.mrb[0].mxu0
    %v3359 = vadd.f32 0.0, %v3358
    %v3360 = vpop.f32.mrb[0].mxu0
    %v3361 = vpop.f32.mrb[0].mxu0
    %3362 = vdwg.mxu0
    %3363 = vmatprep.subr.bf16.mxu0 %v1284
    %3364 = vmatpush1.bf16.msra.mxu0 %v1283
    %3365 = vmatprep.subr.bf16.mxu0 %v1288
    %3366 = vmatpush1.bf16.msra.mxu0 %v1287
    %3367 = vmatprep.subr.bf16.mxu0 %v1292
    %3368 = vmatpush1.bf16.msra.mxu0 %v1291
    %3369 = vmatprep.subr.bf16.mxu0 %v1296
    %3370 = vmatpush1.bf16.msra.mxu0 %v1295
    %3371 = vmatprep.subr.bf16.mxu0 %v1300
    %3372 = vmatpush1.bf16.msra.mxu0 %v1299
    %3373 = vmatprep.subr.bf16.mxu0 %v1304
    %3374 = vmatpush1.bf16.msra.mxu0 %v1303
    %3375 = vmatprep.subr.bf16.mxu0 %v1308
    %3376 = vmatpush1.bf16.msra.mxu0 %v1307
    %3377 = vmatprep.subr.bf16.mxu0 %v1312
    %3378 = vmatpush1.bf16.msra.mxu0 %v1311
    %3379 = vmatprep.subr.bf16.mxu0 0
    %3380 = vmatpush1.bf16.msra.mxu0 0
    %3381 = vmatprep.subr.bf16.mxu0 0
    %3382 = vmatpush1.bf16.msra.mxu0 0
    %3383 = vmatprep.subr.bf16.mxu0 0
    %3384 = vmatpush1.bf16.msra.mxu0 0
    %3385 = vmatprep.subr.bf16.mxu0 0
    %3386 = vmatpush1.bf16.msra.mxu0 0
    %3387 = vmatprep.subr.bf16.mxu0 0
    %3388 = vmatpush1.bf16.msra.mxu0 0
    %3389 = vmatprep.subr.bf16.mxu0 0
    %3390 = vmatpush1.bf16.msra.mxu0 0
    %3391 = vmatprep.subr.bf16.mxu0 0
    %3392 = vmatpush1.bf16.msra.mxu0 0
    %3393 = vmatprep.subr.bf16.mxu0 0
    %3394 = vmatpush1.bf16.msra.mxu0 0
    %3395 = vmatprep.mubr.bf16.mxu0 0
    %3396 = vmatmul.mubr.bf16.gmra.mrb[0].mxu0 %v3321
    %v3397 = vpop.f32.mrb[0].mxu0
    %v3398 = vadd.f32 0.0, %v3397
    %v3399 = vpop.f32.mrb[0].mxu0
    %v3400 = vadd.f32 0.0, %v3399
    %v3401 = vpop.f32.mrb[0].mxu0
    %v3402 = vpop.f32.mrb[0].mxu0
    %3403 = vdwg.mxu0
    %v3408 = vrot.slane %v3357, 2
    %v3409 = vrot.slane %v3359, 2
    %v3410 = vrot.slane %v3398, 2
    %v3411 = vrot.slane %v3400, 2
    %v3416 = vadd.f32 %v984, %v3408
    %v3417 = vadd.f32 %v986, %v3409
    %v3418 = vadd.f32 %v1027, %v3410
    %v3419 = vadd.f32 %v1029, %v3411
    %v3420 = vpack.c.bf16 %v3316, %v3316
    %3421 = vmatprep.subr.bf16.mxu0 %v1528
    %3422 = vmatpush1.bf16.msra.mxu0 %v1527
    %3423 = vmatprep.subr.bf16.mxu0 %v1532
    %3424 = vmatpush1.bf16.msra.mxu0 %v1531
    %3425 = vmatprep.subr.bf16.mxu0 %v1536
    %3426 = vmatpush1.bf16.msra.mxu0 %v1535
    %3427 = vmatprep.subr.bf16.mxu0 %v1540
    %3428 = vmatpush1.bf16.msra.mxu0 %v1539
    %3429 = vmatprep.subr.bf16.mxu0 %v1544
    %3430 = vmatpush1.bf16.msra.mxu0 %v1543
    %3431 = vmatprep.subr.bf16.mxu0 %v1548
    %3432 = vmatpush1.bf16.msra.mxu0 %v1547
    %3433 = vmatprep.subr.bf16.mxu0 %v1552
    %3434 = vmatpush1.bf16.msra.mxu0 %v1551
    %3435 = vmatprep.subr.bf16.mxu0 %v1556
    %3436 = vmatpush1.bf16.msra.mxu0 %v1555
    %3437 = vmatprep.subr.bf16.mxu0 0
    %3438 = vmatpush1.bf16.msra.mxu0 0
    %3439 = vmatprep.subr.bf16.mxu0 0
    %3440 = vmatpush1.bf16.msra.mxu0 0
    %3441 = vmatprep.subr.bf16.mxu0 0
    %3442 = vmatpush1.bf16.msra.mxu0 0
    %3443 = vmatprep.subr.bf16.mxu0 0
    %3444 = vmatpush1.bf16.msra.mxu0 0
    %3445 = vmatprep.subr.bf16.mxu0 0
    %3446 = vmatpush1.bf16.msra.mxu0 0
    %3447 = vmatprep.subr.bf16.mxu0 0
    %3448 = vmatpush1.bf16.msra.mxu0 0
    %3449 = vmatprep.subr.bf16.mxu0 0
    %3450 = vmatpush1.bf16.msra.mxu0 0
    %3451 = vmatprep.subr.bf16.mxu0 0
    %3452 = vmatpush1.bf16.msra.mxu0 0
    %3453 = vmatprep.mubr.bf16.mxu0 0
    %3454 = vmatmul.mubr.bf16.gmra.mrb[0].mxu0 %v3420
    %v3455 = vpop.f32.mrb[0].mxu0
    %v3456 = vadd.f32 0.0, %v3455
    %v3457 = vpop.f32.mrb[0].mxu0
    %v3458 = vadd.f32 0.0, %v3457
    %v3459 = vpop.f32.mrb[0].mxu0
    %v3460 = vpop.f32.mrb[0].mxu0
    %3461 = vdwg.mxu0
    %3462 = vmatprep.subr.bf16.mxu0 %v1530
    %3463 = vmatpush1.bf16.msra.mxu0 %v1529
    %3464 = vmatprep.subr.bf16.mxu0 %v1534
    %3465 = vmatpush1.bf16.msra.mxu0 %v1533
    %3466 = vmatprep.subr.bf16.mxu0 %v1538
    %3467 = vmatpush1.bf16.msra.mxu0 %v1537
    %3468 = vmatprep.subr.bf16.mxu0 %v1542
    %3469 = vmatpush1.bf16.msra.mxu0 %v1541
    %3470 = vmatprep.subr.bf16.mxu0 %v1546
    %3471 = vmatpush1.bf16.msra.mxu0 %v1545
    %3472 = vmatprep.subr.bf16.mxu0 %v1550
    %3473 = vmatpush1.bf16.msra.mxu0 %v1549
    %3474 = vmatprep.subr.bf16.mxu0 %v1554
    %3475 = vmatpush1.bf16.msra.mxu0 %v1553
    %3476 = vmatprep.subr.bf16.mxu0 %v1558
    %3477 = vmatpush1.bf16.msra.mxu0 %v1557
    %3478 = vmatprep.subr.bf16.mxu0 0
    %3479 = vmatpush1.bf16.msra.mxu0 0
    %3480 = vmatprep.subr.bf16.mxu0 0
    %3481 = vmatpush1.bf16.msra.mxu0 0
    %3482 = vmatprep.subr.bf16.mxu0 0
    %3483 = vmatpush1.bf16.msra.mxu0 0
    %3484 = vmatprep.subr.bf16.mxu0 0
    %3485 = vmatpush1.bf16.msra.mxu0 0
    %3486 = vmatprep.subr.bf16.mxu0 0
    %3487 = vmatpush1.bf16.msra.mxu0 0
    %3488 = vmatprep.subr.bf16.mxu0 0
    %3489 = vmatpush1.bf16.msra.mxu0 0
    %3490 = vmatprep.subr.bf16.mxu0 0
    %3491 = vmatpush1.bf16.msra.mxu0 0
    %3492 = vmatprep.subr.bf16.mxu0 0
    %3493 = vmatpush1.bf16.msra.mxu0 0
    %3494 = vmatprep.mubr.bf16.mxu0 0
    %3495 = vmatmul.mubr.bf16.gmra.mrb[0].mxu0 %v3420
    %v3496 = vpop.f32.mrb[0].mxu0
    %v3497 = vadd.f32 0.0, %v3496
    %v3498 = vpop.f32.mrb[0].mxu0
    %v3499 = vadd.f32 0.0, %v3498
    %v3500 = vpop.f32.mrb[0].mxu0
    %v3501 = vpop.f32.mrb[0].mxu0
    %3502 = vdwg.mxu0
    %v3503 = vadd.f32 %v1066, %v3456
    %v3504 = vadd.f32 %v1068, %v3458
    %v3505 = vadd.f32 %v1109, %v3497
    %v3506 = vadd.f32 %v1111, %v3499
    %v3507 = vxor.u32 %v3416, 2147483648
    %v3508 = vmul.f32 %v3507, 1.442695
    %v3509 = vpow.pop %v3508
    %v3510 = vadd.f32 %v3509, 1.0
    %v3511 = vrcp.pop %v3510
    %v3512 = vmul.f32 1.0, %v3511
    %v3513 = vxor.u32 %v3417, 2147483648
    %v3514 = vmul.f32 %v3513, 1.442695
    %v3515 = vpow.pop %v3514
    %v3516 = vadd.f32 %v3515, 1.0
    %v3517 = vrcp.pop %v3516
    %v3518 = vmul.f32 1.0, %v3517
    %v3519 = vtanh.pop %v3418
    %v3520 = vxor.u32 %v3419, 2147483648
    %v3521 = vmul.f32 %v3520, 1.442695
    %v3522 = vpow.pop %v3521
    %v3523 = vadd.f32 %v3522, 1.0
    %v3524 = vrcp.pop %v3523
    %v3525 = vmul.f32 1.0, %v3524
    %v3527 = vrot.slane %v3312, 2
    %v3529 = vmul.f32 %v3518, %v3527
    %v3530 = vmul.f32 %v3512, %v3519
    %v3531 = vadd.f32 %v3529, %v3530
    %v3532 = vtanh.pop %v3531
    %v3533 = vmul.f32 %v3525, %v3532
    %v3534 = vxor.u32 %v3503, 2147483648
    %v3535 = vmul.f32 %v3534, 1.442695
    %v3536 = vpow.pop %v3535
    %v3537 = vadd.f32 %v3536, 1.0
    %v3538 = vrcp.pop %v3537
    %v3539 = vmul.f32 1.0, %v3538
    %v3540 = vxor.u32 %v3504, 2147483648
    %v3541 = vmul.f32 %v3540, 1.442695
    %v3542 = vpow.pop %v3541
    %v3543 = vadd.f32 %v3542, 1.0
    %v3544 = vrcp.pop %v3543
    %v3545 = vmul.f32 1.0, %v3544
    %v3546 = vtanh.pop %v3505
    %v3547 = vxor.u32 %v3506, 2147483648
    %v3548 = vmul.f32 %v3547, 1.442695
    %v3549 = vpow.pop %v3548
    %v3550 = vadd.f32 %v3549, 1.0
    %v3551 = vrcp.pop %v3550
    %v3552 = vmul.f32 1.0, %v3551
    %v3553 = vmul.f32 %v3545, %v3320
    %v3554 = vmul.f32 %v3539, %v3546
    %v3555 = vadd.f32 %v3553, %v3554
    %v3556 = vtanh.pop %v3555
    %v3557 = vmul.f32 %v3552, %v3556
    %v3559 = vrot.slane %v3533, 6
    %v3561 = vsel %vm1738, %v3559, %v3308
    %v3562 = vsel %vm1737, %v3557, %v3316
    %v3563 = vpack.c.bf16 %v3561, %v3561
    %v3564 = vpack.c.bf16 %v3562, %v3562
    %v3565 = vld [vmem:[#allocation5] sm:$0xf]
    %v3566 = vld [vmem:[#allocation5 + $0x4] sm:$0xf]
    %v3567 = vld [vmem:[#allocation5 + $0x8] sm:$0xf]
    %v3568 = vld [vmem:[#allocation5 + $0xc] sm:$0xf]
    %v3569 = vld [vmem:[#allocation5 + $0x10] sm:$0xf]
    %v3570 = vld [vmem:[#allocation5 + $0x14] sm:$0xf]
    %v3571 = vld [vmem:[#allocation5 + $0x18] sm:$0xf]
    %v3572 = vld [vmem:[#allocation5 + $0x1c] sm:$0xf]
    %v3573 = vld [vmem:[#allocation5 + $0x20] sm:$0xf]
    %v3574 = vld [vmem:[#allocation5 + $0x24] sm:$0xf]
    %v3575 = vld [vmem:[#allocation5 + $0x28] sm:$0xf]
    %v3576 = vld [vmem:[#allocation5 + $0x2c] sm:$0xf]
    %v3577 = vld [vmem:[#allocation5 + $0x30] sm:$0xf]
    %v3578 = vld [vmem:[#allocation5 + $0x34] sm:$0xf]
    %v3579 = vld [vmem:[#allocation5 + $0x38] sm:$0xf]
    %v3580 = vld [vmem:[#allocation5 + $0x3c] sm:$0xf]
    %v3581 = vld [vmem:[#allocation5 + $0x40] sm:$0xf]
    %v3582 = vld [vmem:[#allocation5 + $0x44] sm:$0xf]
    %v3583 = vld [vmem:[#allocation5 + $0x48] sm:$0xf]
    %v3584 = vld [vmem:[#allocation5 + $0x4c] sm:$0xf]
    %v3585 = vld [vmem:[#allocation5 + $0x50] sm:$0xf]
    %v3586 = vld [vmem:[#allocation5 + $0x54] sm:$0xf]
    %v3587 = vld [vmem:[#allocation5 + $0x58] sm:$0xf]
    %v3588 = vld [vmem:[#allocation5 + $0x5c] sm:$0xf]
    %v3589 = vld [vmem:[#allocation5 + $0x60] sm:$0xf]
    %v3590 = vld [vmem:[#allocation5 + $0x64] sm:$0xf]
    %v3591 = vld [vmem:[#allocation5 + $0x68] sm:$0xf]
    %v3592 = vld [vmem:[#allocation5 + $0x6c] sm:$0xf]
    %v3593 = vld [vmem:[#allocation5 + $0x70] sm:$0xf]
    %v3594 = vld [vmem:[#allocation5 + $0x74] sm:$0xf]
    %v3595 = vld [vmem:[#allocation5 + $0x78] sm:$0xf]
    %v3596 = vld [vmem:[#allocation5 + $0x7c] sm:$0xf]
    %v3598 = vlaneseq
    %v3599 = vshrl.u32 %v3598, 7
    %v3600 = vsub.s32 0, %v3599
    %v3601 = vrot.slane %v697, %v3600
    %v3635 = vunpack.c.l.b16 %v3565
    %v3636 = vunpack.c.l.b16 %v3566
    %v3637 = vunpack.c.l.b16 %v3567
    %v3638 = vunpack.c.l.b16 %v3568
    %v3639 = vunpack.c.l.b16 %v3569
    %v3640 = vunpack.c.l.b16 %v3570
    %v3641 = vunpack.c.l.b16 %v3571
    %v3642 = vunpack.c.l.b16 %v3572
    %v3643 = vunpack.c.l.b16 %v3573
    %v3644 = vunpack.c.l.b16 %v3574
    %v3645 = vunpack.c.l.b16 %v3575
    %v3646 = vunpack.c.l.b16 %v3576
    %v3647 = vunpack.c.l.b16 %v3577
    %v3648 = vunpack.c.l.b16 %v3578
    %v3649 = vunpack.c.l.b16 %v3579
    %v3650 = vunpack.c.l.b16 %v3580
    %v3651 = vunpack.c.l.b16 %v3581
    %v3652 = vunpack.c.l.b16 %v3582
    %v3653 = vunpack.c.l.b16 %v3583
    %v3654 = vunpack.c.l.b16 %v3584
    %v3655 = vunpack.c.l.b16 %v3585
    %v3656 = vunpack.c.l.b16 %v3586
    %v3657 = vunpack.c.l.b16 %v3587
    %v3658 = vunpack.c.l.b16 %v3588
    %v3659 = vunpack.c.l.b16 %v3589
    %v3660 = vunpack.c.l.b16 %v3590
    %v3661 = vunpack.c.l.b16 %v3591
    %v3662 = vunpack.c.l.b16 %v3592
    %v3663 = vunpack.c.l.b16 %v3593
    %v3664 = vunpack.c.l.b16 %v3594
    %v3665 = vunpack.c.l.b16 %v3595
    %v3666 = vunpack.c.l.b16 %v3596
    %v3667 = vpack.c.b16 %v3636, %v3635
    %v3668 = vpack.c.b16 %v3638, %v3637
    %v3669 = vpack.c.b16 %v3640, %v3639
    %v3670 = vpack.c.b16 %v3642, %v3641
    %v3671 = vpack.c.b16 %v3644, %v3643
    %v3672 = vpack.c.b16 %v3646, %v3645
    %v3673 = vpack.c.b16 %v3648, %v3647
    %v3674 = vpack.c.b16 %v3650, %v3649
    %v3675 = vpack.c.b16 %v3652, %v3651
    %v3676 = vpack.c.b16 %v3654, %v3653
    %v3677 = vpack.c.b16 %v3656, %v3655
    %v3678 = vpack.c.b16 %v3658, %v3657
    %v3679 = vpack.c.b16 %v3660, %v3659
    %v3680 = vpack.c.b16 %v3662, %v3661
    %v3681 = vpack.c.b16 %v3664, %v3663
    %v3682 = vpack.c.b16 %v3666, %v3665
    %3699 = vmatprep.subr.bf16.mxu0 0
    %3700 = vmatpush1.bf16.msra.mxu0 %v3667
    %3701 = vmatprep.subr.bf16.mxu0 0
    %3702 = vmatpush1.bf16.msra.mxu0 %v3668
    %3703 = vmatprep.subr.bf16.mxu0 0
    %3704 = vmatpush1.bf16.msra.mxu0 %v3669
    %3705 = vmatprep.subr.bf16.mxu0 0
    %3706 = vmatpush1.bf16.msra.mxu0 %v3670
    %3707 = vmatprep.subr.bf16.mxu0 0
    %3708 = vmatpush1.bf16.msra.mxu0 %v3671
    %3709 = vmatprep.subr.bf16.mxu0 0
    %3710 = vmatpush1.bf16.msra.mxu0 %v3672
    %3711 = vmatprep.subr.bf16.mxu0 0
    %3712 = vmatpush1.bf16.msra.mxu0 %v3673
    %3713 = vmatprep.subr.bf16.mxu0 0
    %3714 = vmatpush1.bf16.msra.mxu0 %v3674
    %3715 = vmatprep.subr.bf16.mxu0 0
    %3716 = vmatpush1.bf16.msra.mxu0 %v3675
    %3717 = vmatprep.subr.bf16.mxu0 0
    %3718 = vmatpush1.bf16.msra.mxu0 %v3676
    %3719 = vmatprep.subr.bf16.mxu0 0
    %3720 = vmatpush1.bf16.msra.mxu0 %v3677
    %3721 = vmatprep.subr.bf16.mxu0 0
    %3722 = vmatpush1.bf16.msra.mxu0 %v3678
    %3723 = vmatprep.subr.bf16.mxu0 0
    %3724 = vmatpush1.bf16.msra.mxu0 %v3679
    %3725 = vmatprep.subr.bf16.mxu0 0
    %3726 = vmatpush1.bf16.msra.mxu0 %v3680
    %3727 = vmatprep.subr.bf16.mxu0 0
    %3728 = vmatpush1.bf16.msra.mxu0 %v3681
    %3729 = vmatprep.subr.bf16.mxu0 0
    %3730 = vmatpush1.bf16.msra.mxu0 %v3682
    %3731 = vmatprep.mubr.bf16.mxu0 %v3564
    %3732 = vmatmul.mubr.bf16.gmra.mrb[0].mxu0 %v3563
    %v3733 = vpop.f32.mrb[0].mxu0
    %v3734 = vadd.f32 %v3601, %v3733
    %v3735 = vpop.f32.mrb[0].mxu0
    %v3736 = vpop.f32.mrb[0].mxu0
    %v3737 = vpop.f32.mrb[0].mxu0
    %3738 = vdwg.mxu0
    %v3739 = vmax.f32 %v3734, 0.0
    %s3740 = smul.u32 4, 96
    %s3741 = smul.u32 %s3740, 4
    %s3742 = sshll.u32 %s3741, 4
    %3743 = dma.done [#allocation4], %s3742
    %s3744 = smul.u32 4, 64
    %s3745 = smul.u32 %s3744, 2
    %s3746 = sshll.u32 %s3745, 4
    %3747 = dma.done %s133, %s3746
    %v3748 = vld [vmem:[%s2] sm:$0xff]
    %v3749 = vld [vmem:[%s2 + $0x8] sm:$0xff]
    %v3750 = vld [vmem:[%s2 + $0x10] sm:$0xff]
    %v3751 = vld [vmem:[%s2 + $0x18] sm:$0x11]
    %v3752 = vld [vmem:[%s2 + $0x20] sm:$0x11]
    %v3753 = vld [vmem:[%s2 + $0x28] sm:$0x11]
    %v3754 = vld [vmem:[#allocation2] sm:$0xff]
    %v3755 = vld [vmem:[#allocation2 + $0x8] sm:$0xff]
    %v3756 = vld [vmem:[#allocation2 + $0x10] sm:$0xff]
    %v3757 = vld [vmem:[#allocation2 + $0x18] sm:$0xff]
    %v3758 = vld [vmem:[#allocation2 + $0x20] sm:$0xff]
    %v3759 = vld [vmem:[#allocation2 + $0x28] sm:$0xff]
    %v3760 = vld [vmem:[#allocation2 + $0x30] sm:$0xff]
    %v3761 = vld [vmem:[#allocation2 + $0x38] sm:$0xff]
    %v3762 = vld [vmem:[#allocation2 + $0x40] sm:$0xff]
    %v3763 = vld [vmem:[#allocation2 + $0x48] sm:$0xff]
    %v3764 = vld [vmem:[#allocation2 + $0x50] sm:$0xff]
    %v3765 = vld [vmem:[#allocation2 + $0x58] sm:$0xff]
    %v3766 = vld [vmem:[#allocation2 + $0x60] sm:$0xff]
    %v3767 = vld [vmem:[#allocation2 + $0x68] sm:$0xff]
    %v3768 = vld [vmem:[#allocation2 + $0x70] sm:$0xff]
    %v3769 = vld [vmem:[#allocation2 + $0x78] sm:$0xff]
    %v3770 = vld [vmem:[#allocation2 + $0x80] sm:$0xff]
    %v3771 = vld [vmem:[#allocation2 + $0x88] sm:$0xff]
    %v3772 = vld [vmem:[#allocation2 + $0x90] sm:$0xff]
    %v3773 = vld [vmem:[#allocation2 + $0x98] sm:$0xff]
    %v3774 = vld [vmem:[#allocation2 + $0xa0] sm:$0xff]
    %v3775 = vld [vmem:[#allocation2 + $0xa8] sm:$0xff]
    %v3776 = vld [vmem:[#allocation2 + $0xb0] sm:$0xff]
    %v3777 = vld [vmem:[#allocation2 + $0xb8] sm:$0xff]
    %v3778 = vld [vmem:[#allocation2 + $0xc0] sm:$0xff]
    %v3779 = vld [vmem:[#allocation2 + $0xc8] sm:$0xff]
    %v3780 = vld [vmem:[#allocation2 + $0xd0] sm:$0xff]
    %v3781 = vld [vmem:[#allocation2 + $0xd8] sm:$0xff]
    %v3782 = vld [vmem:[#allocation2 + $0xe0] sm:$0xff]
    %v3783 = vld [vmem:[#allocation2 + $0xe8] sm:$0xff]
    %v3784 = vld [vmem:[#allocation2 + $0xf0] sm:$0xff]
    %v3785 = vld [vmem:[#allocation2 + $0xf8] sm:$0xff]
    %v3786 = vld [vmem:[#allocation2 + $0x100] sm:$0xff]
    %v3787 = vld [vmem:[#allocation2 + $0x108] sm:$0xff]
    %v3788 = vld [vmem:[#allocation2 + $0x110] sm:$0xff]
    %v3789 = vld [vmem:[#allocation2 + $0x118] sm:$0xff]
    %v3790 = vld [vmem:[#allocation2 + $0x120] sm:$0xff]
    %v3791 = vld [vmem:[#allocation2 + $0x128] sm:$0xff]
    %v3792 = vld [vmem:[#allocation2 + $0x130] sm:$0xff]
    %v3793 = vld [vmem:[#allocation2 + $0x138] sm:$0xff]
    %v3794 = vld [vmem:[#allocation2 + $0x140] sm:$0xff]
    %v3795 = vld [vmem:[#allocation2 + $0x148] sm:$0xff]
    %v3796 = vld [vmem:[#allocation2 + $0x150] sm:$0xff]
    %v3797 = vld [vmem:[#allocation2 + $0x158] sm:$0xff]
    %v3798 = vld [vmem:[#allocation2 + $0x160] sm:$0xff]
    %v3799 = vld [vmem:[#allocation2 + $0x168] sm:$0xff]
    %v3800 = vld [vmem:[#allocation2 + $0x170] sm:$0xff]
    %v3801 = vld [vmem:[#allocation2 + $0x178] sm:$0xff]
    %v3802 = vld [vmem:[#allocation2 + $0x180] sm:$0xff]
    %v3803 = vld [vmem:[#allocation2 + $0x188] sm:$0xff]
    %v3804 = vld [vmem:[#allocation2 + $0x190] sm:$0xff]
    %v3805 = vld [vmem:[#allocation2 + $0x198] sm:$0xff]
    %v3806 = vld [vmem:[#allocation2 + $0x1a0] sm:$0xff]
    %v3807 = vld [vmem:[#allocation2 + $0x1a8] sm:$0xff]
    %v3808 = vld [vmem:[#allocation2 + $0x1b0] sm:$0xff]
    %v3809 = vld [vmem:[#allocation2 + $0x1b8] sm:$0xff]
    %v3810 = vld [vmem:[#allocation2 + $0x1c0] sm:$0xff]
    %v3811 = vld [vmem:[#allocation2 + $0x1c8] sm:$0xff]
    %v3812 = vld [vmem:[#allocation2 + $0x1d0] sm:$0xff]
    %v3813 = vld [vmem:[#allocation2 + $0x1d8] sm:$0xff]
    %v3814 = vld [vmem:[#allocation2 + $0x1e0] sm:$0xff]
    %v3815 = vld [vmem:[#allocation2 + $0x1e8] sm:$0xff]
    %v3816 = vld [vmem:[#allocation2 + $0x1f0] sm:$0xff]
    %v3817 = vld [vmem:[#allocation2 + $0x1f8] sm:$0xff]
    %v3818 = vld [vmem:[#allocation2 + $0x200] sm:$0xff]
    %v3819 = vld [vmem:[#allocation2 + $0x208] sm:$0xff]
    %v3820 = vld [vmem:[#allocation2 + $0x210] sm:$0xff]
    %v3821 = vld [vmem:[#allocation2 + $0x218] sm:$0xff]
    %v3822 = vld [vmem:[#allocation2 + $0x220] sm:$0xff]
    %v3823 = vld [vmem:[#allocation2 + $0x228] sm:$0xff]
    %v3824 = vld [vmem:[#allocation2 + $0x230] sm:$0xff]
    %v3825 = vld [vmem:[#allocation2 + $0x238] sm:$0xff]
    %v3826 = vld [vmem:[#allocation2 + $0x240] sm:$0xff]
    %v3827 = vld [vmem:[#allocation2 + $0x248] sm:$0xff]
    %v3828 = vld [vmem:[#allocation2 + $0x250] sm:$0xff]
    %v3829 = vld [vmem:[#allocation2 + $0x258] sm:$0xff]
    %v3830 = vld [vmem:[#allocation2 + $0x260] sm:$0xff]
    %v3831 = vld [vmem:[#allocation2 + $0x268] sm:$0xff]
    %v3832 = vld [vmem:[#allocation2 + $0x270] sm:$0xff]
    %v3833 = vld [vmem:[#allocation2 + $0x278] sm:$0xff]
    %v3834 = vld [vmem:[#allocation2 + $0x280] sm:$0xff]
    %v3835 = vld [vmem:[#allocation2 + $0x288] sm:$0xff]
    %v3836 = vld [vmem:[#allocation2 + $0x290] sm:$0xff]
    %v3837 = vld [vmem:[#allocation2 + $0x298] sm:$0xff]
    %v3838 = vld [vmem:[#allocation2 + $0x2a0] sm:$0xff]
    %v3839 = vld [vmem:[#allocation2 + $0x2a8] sm:$0xff]
    %v3840 = vld [vmem:[#allocation2 + $0x2b0] sm:$0xff]
    %v3841 = vld [vmem:[#allocation2 + $0x2b8] sm:$0xff]
    %v3842 = vld [vmem:[#allocation2 + $0x2c0] sm:$0xff]
    %v3843 = vld [vmem:[#allocation2 + $0x2c8] sm:$0xff]
    %v3844 = vld [vmem:[#allocation2 + $0x2d0] sm:$0xff]
    %v3845 = vld [vmem:[#allocation2 + $0x2d8] sm:$0xff]
    %v3846 = vld [vmem:[#allocation2 + $0x2e0] sm:$0xff]
    %v3847 = vld [vmem:[#allocation2 + $0x2e8] sm:$0xff]
    %v3848 = vld [vmem:[#allocation2 + $0x2f0] sm:$0xff]
    %v3849 = vld [vmem:[#allocation2 + $0x2f8] sm:$0xff]
    %v3850 = vld [vmem:[#allocation2 + $0x300] sm:$0xff]
    %v3851 = vld [vmem:[#allocation2 + $0x308] sm:$0xff]
    %v3852 = vld [vmem:[#allocation2 + $0x310] sm:$0xff]
    %v3853 = vld [vmem:[#allocation2 + $0x318] sm:$0xff]
    %v3854 = vld [vmem:[#allocation2 + $0x320] sm:$0xff]
    %v3855 = vld [vmem:[#allocation2 + $0x328] sm:$0xff]
    %v3856 = vld [vmem:[#allocation2 + $0x330] sm:$0xff]
    %v3857 = vld [vmem:[#allocation2 + $0x338] sm:$0xff]
    %v3858 = vld [vmem:[#allocation2 + $0x340] sm:$0xff]
    %v3859 = vld [vmem:[#allocation2 + $0x348] sm:$0xff]
    %v3860 = vld [vmem:[#allocation2 + $0x350] sm:$0xff]
    %v3861 = vld [vmem:[#allocation2 + $0x358] sm:$0xff]
    %v3862 = vld [vmem:[#allocation2 + $0x360] sm:$0xff]
    %v3863 = vld [vmem:[#allocation2 + $0x368] sm:$0xff]
    %v3864 = vld [vmem:[#allocation2 + $0x370] sm:$0xff]
    %v3865 = vld [vmem:[#allocation2 + $0x378] sm:$0xff]
    %v3866 = vld [vmem:[#allocation2 + $0x380] sm:$0xff]
    %v3867 = vld [vmem:[#allocation2 + $0x388] sm:$0xff]
    %v3868 = vld [vmem:[#allocation2 + $0x390] sm:$0xff]
    %v3869 = vld [vmem:[#allocation2 + $0x398] sm:$0xff]
    %v3870 = vld [vmem:[#allocation2 + $0x3a0] sm:$0xff]
    %v3871 = vld [vmem:[#allocation2 + $0x3a8] sm:$0xff]
    %v3872 = vld [vmem:[#allocation2 + $0x3b0] sm:$0xff]
    %v3873 = vld [vmem:[#allocation2 + $0x3b8] sm:$0xff]
    %v3874 = vld [vmem:[#allocation2 + $0x3c0] sm:$0xff]
    %v3875 = vld [vmem:[#allocation2 + $0x3c8] sm:$0xff]
    %v3876 = vld [vmem:[#allocation2 + $0x3d0] sm:$0xff]
    %v3877 = vld [vmem:[#allocation2 + $0x3d8] sm:$0xff]
    %v3878 = vld [vmem:[#allocation2 + $0x3e0] sm:$0xff]
    %v3879 = vld [vmem:[#allocation2 + $0x3e8] sm:$0xff]
    %v3880 = vld [vmem:[#allocation2 + $0x3f0] sm:$0xff]
    %v3881 = vld [vmem:[#allocation2 + $0x3f8] sm:$0xff]
    %v3882 = vld [vmem:[#allocation2 + $0x400] sm:$0xff]
    %v3883 = vld [vmem:[#allocation2 + $0x408] sm:$0xff]
    %v3884 = vld [vmem:[#allocation2 + $0x410] sm:$0xff]
    %v3885 = vld [vmem:[#allocation2 + $0x418] sm:$0xff]
    %v3886 = vld [vmem:[#allocation2 + $0x420] sm:$0xff]
    %v3887 = vld [vmem:[#allocation2 + $0x428] sm:$0xff]
    %v3888 = vld [vmem:[#allocation2 + $0x430] sm:$0xff]
    %v3889 = vld [vmem:[#allocation2 + $0x438] sm:$0xff]
    %v3890 = vld [vmem:[#allocation2 + $0x440] sm:$0xff]
    %v3891 = vld [vmem:[#allocation2 + $0x448] sm:$0xff]
    %v3892 = vld [vmem:[#allocation2 + $0x450] sm:$0xff]
    %v3893 = vld [vmem:[#allocation2 + $0x458] sm:$0xff]
    %v3894 = vld [vmem:[#allocation2 + $0x460] sm:$0xff]
    %v3895 = vld [vmem:[#allocation2 + $0x468] sm:$0xff]
    %v3896 = vld [vmem:[#allocation2 + $0x470] sm:$0xff]
    %v3897 = vld [vmem:[#allocation2 + $0x478] sm:$0xff]
    %v3898 = vld [vmem:[#allocation2 + $0x480] sm:$0xff]
    %v3899 = vld [vmem:[#allocation2 + $0x488] sm:$0xff]
    %v3900 = vld [vmem:[#allocation2 + $0x490] sm:$0xff]
    %v3901 = vld [vmem:[#allocation2 + $0x498] sm:$0xff]
    %v3902 = vld [vmem:[#allocation2 + $0x4a0] sm:$0xff]
    %v3903 = vld [vmem:[#allocation2 + $0x4a8] sm:$0xff]
    %v3904 = vld [vmem:[#allocation2 + $0x4b0] sm:$0xff]
    %v3905 = vld [vmem:[#allocation2 + $0x4b8] sm:$0xff]
    %v3906 = vld [vmem:[#allocation2 + $0x4c0] sm:$0xff]
    %v3907 = vld [vmem:[#allocation2 + $0x4c8] sm:$0xff]
    %v3908 = vld [vmem:[#allocation2 + $0x4d0] sm:$0xff]
    %v3909 = vld [vmem:[#allocation2 + $0x4d8] sm:$0xff]
    %v3910 = vld [vmem:[#allocation2 + $0x4e0] sm:$0xff]
    %v3911 = vld [vmem:[#allocation2 + $0x4e8] sm:$0xff]
    %v3912 = vld [vmem:[#allocation2 + $0x4f0] sm:$0xff]
    %v3913 = vld [vmem:[#allocation2 + $0x4f8] sm:$0xff]
    %v3914 = vld [vmem:[#allocation2 + $0x500] sm:$0xff]
    %v3915 = vld [vmem:[#allocation2 + $0x508] sm:$0xff]
    %v3916 = vld [vmem:[#allocation2 + $0x510] sm:$0xff]
    %v3917 = vld [vmem:[#allocation2 + $0x518] sm:$0xff]
    %v3918 = vld [vmem:[#allocation2 + $0x520] sm:$0xff]
    %v3919 = vld [vmem:[#allocation2 + $0x528] sm:$0xff]
    %v3920 = vld [vmem:[#allocation2 + $0x530] sm:$0xff]
    %v3921 = vld [vmem:[#allocation2 + $0x538] sm:$0xff]
    %v3922 = vld [vmem:[#allocation2 + $0x540] sm:$0xff]
    %v3923 = vld [vmem:[#allocation2 + $0x548] sm:$0xff]
    %v3924 = vld [vmem:[#allocation2 + $0x550] sm:$0xff]
    %v3925 = vld [vmem:[#allocation2 + $0x558] sm:$0xff]
    %v3926 = vld [vmem:[#allocation2 + $0x560] sm:$0xff]
    %v3927 = vld [vmem:[#allocation2 + $0x568] sm:$0xff]
    %v3928 = vld [vmem:[#allocation2 + $0x570] sm:$0xff]
    %v3929 = vld [vmem:[#allocation2 + $0x578] sm:$0xff]
    %v3930 = vld [vmem:[#allocation2 + $0x580] sm:$0xff]
    %v3931 = vld [vmem:[#allocation2 + $0x588] sm:$0xff]
    %v3932 = vld [vmem:[#allocation2 + $0x590] sm:$0xff]
    %v3933 = vld [vmem:[#allocation2 + $0x598] sm:$0xff]
    %v3934 = vld [vmem:[#allocation2 + $0x5a0] sm:$0xff]
    %v3935 = vld [vmem:[#allocation2 + $0x5a8] sm:$0xff]
    %v3936 = vld [vmem:[#allocation2 + $0x5b0] sm:$0xff]
    %v3937 = vld [vmem:[#allocation2 + $0x5b8] sm:$0xff]
    %v3938 = vld [vmem:[#allocation2 + $0x5c0] sm:$0xff]
    %v3939 = vld [vmem:[#allocation2 + $0x5c8] sm:$0xff]
    %v3940 = vld [vmem:[#allocation2 + $0x5d0] sm:$0xff]
    %v3941 = vld [vmem:[#allocation2 + $0x5d8] sm:$0xff]
    %v3942 = vld [vmem:[#allocation2 + $0x5e0] sm:$0xff]
    %v3943 = vld [vmem:[#allocation2 + $0x5e8] sm:$0xff]
    %v3944 = vld [vmem:[#allocation2 + $0x5f0] sm:$0xff]
    %v3945 = vld [vmem:[#allocation2 + $0x5f8] sm:$0xff]
    %v3947 = vlaneseq
    %v3948 = vshrl.u32 %v3947, 7
    %v3949 = vsub.s32 0, %v3948
    %v3950 = vrot.slane %v695, %v3949
    %v3951 = vlaneseq
    %v3952 = vshrl.u32 %v3951, 7
    %v3953 = vsub.s32 1, %v3952
    %v3954 = vrot.slane %v695, %v3953
    %v3955 = vlaneseq
    %v3956 = vshrl.u32 %v3955, 7
    %v3957 = vsub.s32 2, %v3956
    %v3958 = vrot.slane %v695, %v3957
    %v3959 = vlaneseq
    %v3960 = vshrl.u32 %v3959, 7
    %v3961 = vsub.s32 3, %v3960
    %v3962 = vrot.slane %v695, %v3961
    %v3973 = vunpack.c.l.b16 %v3748
    %v3974 = vunpack.c.h.b16 %v3748
    %v3975 = vunpack.c.l.b16 %v3749
    %v3976 = vunpack.c.h.b16 %v3749
    %v3977 = vunpack.c.l.b16 %v3750
    %v3978 = vunpack.c.h.b16 %v3750
    %v3979 = vunpack.c.l.b16 %v3751
    %v3980 = vunpack.c.h.b16 %v3751
    %v3981 = vunpack.c.l.b16 %v3752
    %v3982 = vunpack.c.h.b16 %v3752
    %v3983 = vunpack.c.l.b16 %v3753
    %v3984 = vunpack.c.h.b16 %v3753
    %v3985 = vpack.c.b16 %v3979, %v3973
    %v3986 = vpack.c.b16 %v3980, %v3974
    %v3987 = vpack.c.b16 %v3981, %v3975
    %v3988 = vpack.c.b16 %v3982, %v3976
    %v3989 = vpack.c.b16 %v3983, %v3977
    %v3990 = vpack.c.b16 %v3984, %v3978
    %3997 = vmatprep.subr.bf16.mxu0 %v3755
    %3998 = vmatpush1.bf16.msra.mxu0 %v3754
    %3999 = vmatprep.subr.bf16.mxu0 %v3759
    %4000 = vmatpush1.bf16.msra.mxu0 %v3758
    %4001 = vmatprep.subr.bf16.mxu0 %v3763
    %4002 = vmatpush1.bf16.msra.mxu0 %v3762
    %4003 = vmatprep.subr.bf16.mxu0 %v3767
    %4004 = vmatpush1.bf16.msra.mxu0 %v3766
    %4005 = vmatprep.subr.bf16.mxu0 %v3771
    %4006 = vmatpush1.bf16.msra.mxu0 %v3770
    %4007 = vmatprep.subr.bf16.mxu0 %v3775
    %4008 = vmatpush1.bf16.msra.mxu0 %v3774
    %4009 = vmatprep.subr.bf16.mxu0 %v3779
    %4010 = vmatpush1.bf16.msra.mxu0 %v3778
    %4011 = vmatprep.subr.bf16.mxu0 %v3783
    %4012 = vmatpush1.bf16.msra.mxu0 %v3782
    %4013 = vmatprep.subr.bf16.mxu0 %v3787
    %4014 = vmatpush1.bf16.msra.mxu0 %v3786
    %4015 = vmatprep.subr.bf16.mxu0 %v3791
    %4016 = vmatpush1.bf16.msra.mxu0 %v3790
    %4017 = vmatprep.subr.bf16.mxu0 %v3795
    %4018 = vmatpush1.bf16.msra.mxu0 %v3794
    %4019 = vmatprep.subr.bf16.mxu0 %v3799
    %4020 = vmatpush1.bf16.msra.mxu0 %v3798
    %4021 = vmatprep.subr.bf16.mxu0 %v3803
    %4022 = vmatpush1.bf16.msra.mxu0 %v3802
    %4023 = vmatprep.subr.bf16.mxu0 %v3807
    %4024 = vmatpush1.bf16.msra.mxu0 %v3806
    %4025 = vmatprep.subr.bf16.mxu0 %v3811
    %4026 = vmatpush1.bf16.msra.mxu0 %v3810
    %4027 = vmatprep.subr.bf16.mxu0 %v3815
    %4028 = vmatpush1.bf16.msra.mxu0 %v3814
    %4029 = vmatprep.mubr.bf16.mxu0 %v3986
    %4030 = vmatmul.mubr.bf16.gmra.mrb[0].mxu0 %v3985
    %v4031 = vpop.f32.mrb[0].mxu0
    %v4032 = vadd.f32 %v3950, %v4031
    %v4033 = vpop.f32.mrb[0].mxu0
    %v4034 = vadd.f32 %v3954, %v4033
    %v4035 = vpop.f32.mrb[0].mxu0
    %v4036 = vadd.f32 %v3950, %v4035
    %v4037 = vpop.f32.mrb[0].mxu0
    %v4038 = vadd.f32 %v3954, %v4037
    %4039 = vdwg.mxu0
    %4040 = vmatprep.subr.bf16.mxu0 %v3819
    %4041 = vmatpush1.bf16.msra.mxu0 %v3818
    %4042 = vmatprep.subr.bf16.mxu0 %v3823
    %4043 = vmatpush1.bf16.msra.mxu0 %v3822
    %4044 = vmatprep.subr.bf16.mxu0 %v3827
    %4045 = vmatpush1.bf16.msra.mxu0 %v3826
    %4046 = vmatprep.subr.bf16.mxu0 %v3831
    %4047 = vmatpush1.bf16.msra.mxu0 %v3830
    %4048 = vmatprep.subr.bf16.mxu0 %v3835
    %4049 = vmatpush1.bf16.msra.mxu0 %v3834
    %4050 = vmatprep.subr.bf16.mxu0 %v3839
    %4051 = vmatpush1.bf16.msra.mxu0 %v3838
    %4052 = vmatprep.subr.bf16.mxu0 %v3843
    %4053 = vmatpush1.bf16.msra.mxu0 %v3842
    %4054 = vmatprep.subr.bf16.mxu0 %v3847
    %4055 = vmatpush1.bf16.msra.mxu0 %v3846
    %4056 = vmatprep.subr.bf16.mxu0 %v3851
    %4057 = vmatpush1.bf16.msra.mxu0 %v3850
    %4058 = vmatprep.subr.bf16.mxu0 %v3855
    %4059 = vmatpush1.bf16.msra.mxu0 %v3854
    %4060 = vmatprep.subr.bf16.mxu0 %v3859
    %4061 = vmatpush1.bf16.msra.mxu0 %v3858
    %4062 = vmatprep.subr.bf16.mxu0 %v3863
    %4063 = vmatpush1.bf16.msra.mxu0 %v3862
    %4064 = vmatprep.subr.bf16.mxu0 %v3867
    %4065 = vmatpush1.bf16.msra.mxu0 %v3866
    %4066 = vmatprep.subr.bf16.mxu0 %v3871
    %4067 = vmatpush1.bf16.msra.mxu0 %v3870
    %4068 = vmatprep.subr.bf16.mxu0 %v3875
    %4069 = vmatpush1.bf16.msra.mxu0 %v3874
    %4070 = vmatprep.subr.bf16.mxu0 %v3879
    %4071 = vmatpush1.bf16.msra.mxu0 %v3878
    %4072 = vmatprep.mubr.bf16.mxu0 %v3988
    %4073 = vmatmul.mubr.bf16.gmra.mrb[0].mxu0 %v3987
    %v4074 = vpop.f32.mrb[0].mxu0
    %v4075 = vadd.f32 %v4032, %v4074
    %v4076 = vpop.f32.mrb[0].mxu0
    %v4077 = vadd.f32 %v4034, %v4076
    %v4078 = vpop.f32.mrb[0].mxu0
    %v4079 = vadd.f32 %v4036, %v4078
    %v4080 = vpop.f32.mrb[0].mxu0
    %v4081 = vadd.f32 %v4038, %v4080
    %4082 = vdwg.mxu0
    %4083 = vmatprep.subr.bf16.mxu0 %v3883
    %4084 = vmatpush1.bf16.msra.mxu0 %v3882
    %4085 = vmatprep.subr.bf16.mxu0 %v3887
    %4086 = vmatpush1.bf16.msra.mxu0 %v3886
    %4087 = vmatprep.subr.bf16.mxu0 %v3891
    %4088 = vmatpush1.bf16.msra.mxu0 %v3890
    %4089 = vmatprep.subr.bf16.mxu0 %v3895
    %4090 = vmatpush1.bf16.msra.mxu0 %v3894
    %4091 = vmatprep.subr.bf16.mxu0 %v3899
    %4092 = vmatpush1.bf16.msra.mxu0 %v3898
    %4093 = vmatprep.subr.bf16.mxu0 %v3903
    %4094 = vmatpush1.bf16.msra.mxu0 %v3902
    %4095 = vmatprep.subr.bf16.mxu0 %v3907
    %4096 = vmatpush1.bf16.msra.mxu0 %v3906
    %4097 = vmatprep.subr.bf16.mxu0 %v3911
    %4098 = vmatpush1.bf16.msra.mxu0 %v3910
    %4099 = vmatprep.subr.bf16.mxu0 %v3915
    %4100 = vmatpush1.bf16.msra.mxu0 %v3914
    %4101 = vmatprep.subr.bf16.mxu0 %v3919
    %4102 = vmatpush1.bf16.msra.mxu0 %v3918
    %4103 = vmatprep.subr.bf16.mxu0 %v3923
    %4104 = vmatpush1.bf16.msra.mxu0 %v3922
    %4105 = vmatprep.subr.bf16.mxu0 %v3927
    %4106 = vmatpush1.bf16.msra.mxu0 %v3926
    %4107 = vmatprep.subr.bf16.mxu0 %v3931
    %4108 = vmatpush1.bf16.msra.mxu0 %v3930
    %4109 = vmatprep.subr.bf16.mxu0 %v3935
    %4110 = vmatpush1.bf16.msra.mxu0 %v3934
    %4111 = vmatprep.subr.bf16.mxu0 %v3939
    %4112 = vmatpush1.bf16.msra.mxu0 %v3938
    %4113 = vmatprep.subr.bf16.mxu0 %v3943
    %4114 = vmatpush1.bf16.msra.mxu0 %v3942
    %4115 = vmatprep.mubr.bf16.mxu0 %v3990
    %4116 = vmatmul.mubr.bf16.gmra.mrb[0].mxu0 %v3989
    %v4117 = vpop.f32.mrb[0].mxu0
    %v4118 = vadd.f32 %v4075, %v4117
    %v4119 = vpop.f32.mrb[0].mxu0
    %v4120 = vadd.f32 %v4077, %v4119
    %v4121 = vpop.f32.mrb[0].mxu0
    %v4122 = vadd.f32 %v4079, %v4121
    %v4123 = vpop.f32.mrb[0].mxu0
    %v4124 = vadd.f32 %v4081, %v4123
    %4125 = vdwg.mxu0
    %4126 = vmatprep.subr.bf16.mxu0 %v3757
    %4127 = vmatpush1.bf16.msra.mxu0 %v3756
    %4128 = vmatprep.subr.bf16.mxu0 %v3761
    %4129 = vmatpush1.bf16.msra.mxu0 %v3760
    %4130 = vmatprep.subr.bf16.mxu0 %v3765
    %4131 = vmatpush1.bf16.msra.mxu0 %v3764
    %4132 = vmatprep.subr.bf16.mxu0 %v3769
    %4133 = vmatpush1.bf16.msra.mxu0 %v3768
    %4134 = vmatprep.subr.bf16.mxu0 %v3773
    %4135 = vmatpush1.bf16.msra.mxu0 %v3772
    %4136 = vmatprep.subr.bf16.mxu0 %v3777
    %4137 = vmatpush1.bf16.msra.mxu0 %v3776
    %4138 = vmatprep.subr.bf16.mxu0 %v3781
    %4139 = vmatpush1.bf16.msra.mxu0 %v3780
    %4140 = vmatprep.subr.bf16.mxu0 %v3785
    %4141 = vmatpush1.bf16.msra.mxu0 %v3784
    %4142 = vmatprep.subr.bf16.mxu0 %v3789
    %4143 = vmatpush1.bf16.msra.mxu0 %v3788
    %4144 = vmatprep.subr.bf16.mxu0 %v3793
    %4145 = vmatpush1.bf16.msra.mxu0 %v3792
    %4146 = vmatprep.subr.bf16.mxu0 %v3797
    %4147 = vmatpush1.bf16.msra.mxu0 %v3796
    %4148 = vmatprep.subr.bf16.mxu0 %v3801
    %4149 = vmatpush1.bf16.msra.mxu0 %v3800
    %4150 = vmatprep.subr.bf16.mxu0 %v3805
    %4151 = vmatpush1.bf16.msra.mxu0 %v3804
    %4152 = vmatprep.subr.bf16.mxu0 %v3809
    %4153 = vmatpush1.bf16.msra.mxu0 %v3808
    %4154 = vmatprep.subr.bf16.mxu0 %v3813
    %4155 = vmatpush1.bf16.msra.mxu0 %v3812
    %4156 = vmatprep.subr.bf16.mxu0 %v3817
    %4157 = vmatpush1.bf16.msra.mxu0 %v3816
    %4158 = vmatprep.mubr.bf16.mxu0 %v3986
    %4159 = vmatmul.mubr.bf16.gmra.mrb[0].mxu0 %v3985
    %v4160 = vpop.f32.mrb[0].mxu0
    %v4161 = vadd.f32 %v3958, %v4160
    %v4162 = vpop.f32.mrb[0].mxu0
    %v4163 = vadd.f32 %v3962, %v4162
    %v4164 = vpop.f32.mrb[0].mxu0
    %v4165 = vadd.f32 %v3958, %v4164
    %v4166 = vpop.f32.mrb[0].mxu0
    %v4167 = vadd.f32 %v3962, %v4166
    %4168 = vdwg.mxu0
    %4169 = vmatprep.subr.bf16.mxu0 %v3821
    %4170 = vmatpush1.bf16.msra.mxu0 %v3820
    %4171 = vmatprep.subr.bf16.mxu0 %v3825
    %4172 = vmatpush1.bf16.msra.mxu0 %v3824
    %4173 = vmatprep.subr.bf16.mxu0 %v3829
    %4174 = vmatpush1.bf16.msra.mxu0 %v3828
    %4175 = vmatprep.subr.bf16.mxu0 %v3833
    %4176 = vmatpush1.bf16.msra.mxu0 %v3832
    %4177 = vmatprep.subr.bf16.mxu0 %v3837
    %4178 = vmatpush1.bf16.msra.mxu0 %v3836
    %4179 = vmatprep.subr.bf16.mxu0 %v3841
    %4180 = vmatpush1.bf16.msra.mxu0 %v3840
    %4181 = vmatprep.subr.bf16.mxu0 %v3845
    %4182 = vmatpush1.bf16.msra.mxu0 %v3844
    %4183 = vmatprep.subr.bf16.mxu0 %v3849
    %4184 = vmatpush1.bf16.msra.mxu0 %v3848
    %4185 = vmatprep.subr.bf16.mxu0 %v3853
    %4186 = vmatpush1.bf16.msra.mxu0 %v3852
    %4187 = vmatprep.subr.bf16.mxu0 %v3857
    %4188 = vmatpush1.bf16.msra.mxu0 %v3856
    %4189 = vmatprep.subr.bf16.mxu0 %v3861
    %4190 = vmatpush1.bf16.msra.mxu0 %v3860
    %4191 = vmatprep.subr.bf16.mxu0 %v3865
    %4192 = vmatpush1.bf16.msra.mxu0 %v3864
    %4193 = vmatprep.subr.bf16.mxu0 %v3869
    %4194 = vmatpush1.bf16.msra.mxu0 %v3868
    %4195 = vmatprep.subr.bf16.mxu0 %v3873
    %4196 = vmatpush1.bf16.msra.mxu0 %v3872
    %4197 = vmatprep.subr.bf16.mxu0 %v3877
    %4198 = vmatpush1.bf16.msra.mxu0 %v3876
    %4199 = vmatprep.subr.bf16.mxu0 %v3881
    %4200 = vmatpush1.bf16.msra.mxu0 %v3880
    %4201 = vmatprep.mubr.bf16.mxu0 %v3988
    %4202 = vmatmul.mubr.bf16.gmra.mrb[0].mxu0 %v3987
    %v4203 = vpop.f32.mrb[0].mxu0
    %v4204 = vadd.f32 %v4161, %v4203
    %v4205 = vpop.f32.mrb[0].mxu0
    %v4206 = vadd.f32 %v4163, %v4205
    %v4207 = vpop.f32.mrb[0].mxu0
    %v4208 = vadd.f32 %v4165, %v4207
    %v4209 = vpop.f32.mrb[0].mxu0
    %v4210 = vadd.f32 %v4167, %v4209
    %4211 = vdwg.mxu0
    %4212 = vmatprep.subr.bf16.mxu0 %v3885
    %4213 = vmatpush1.bf16.msra.mxu0 %v3884
    %4214 = vmatprep.subr.bf16.mxu0 %v3889
    %4215 = vmatpush1.bf16.msra.mxu0 %v3888
    %4216 = vmatprep.subr.bf16.mxu0 %v3893
    %4217 = vmatpush1.bf16.msra.mxu0 %v3892
    %4218 = vmatprep.subr.bf16.mxu0 %v3897
    %4219 = vmatpush1.bf16.msra.mxu0 %v3896
    %4220 = vmatprep.subr.bf16.mxu0 %v3901
    %4221 = vmatpush1.bf16.msra.mxu0 %v3900
    %4222 = vmatprep.subr.bf16.mxu0 %v3905
    %4223 = vmatpush1.bf16.msra.mxu0 %v3904
    %4224 = vmatprep.subr.bf16.mxu0 %v3909
    %4225 = vmatpush1.bf16.msra.mxu0 %v3908
    %4226 = vmatprep.subr.bf16.mxu0 %v3913
    %4227 = vmatpush1.bf16.msra.mxu0 %v3912
    %4228 = vmatprep.subr.bf16.mxu0 %v3917
    %4229 = vmatpush1.bf16.msra.mxu0 %v3916
    %4230 = vmatprep.subr.bf16.mxu0 %v3921
    %4231 = vmatpush1.bf16.msra.mxu0 %v3920
    %4232 = vmatprep.subr.bf16.mxu0 %v3925
    %4233 = vmatpush1.bf16.msra.mxu0 %v3924
    %4234 = vmatprep.subr.bf16.mxu0 %v3929
    %4235 = vmatpush1.bf16.msra.mxu0 %v3928
    %4236 = vmatprep.subr.bf16.mxu0 %v3933
    %4237 = vmatpush1.bf16.msra.mxu0 %v3932
    %4238 = vmatprep.subr.bf16.mxu0 %v3937
    %4239 = vmatpush1.bf16.msra.mxu0 %v3936
    %4240 = vmatprep.subr.bf16.mxu0 %v3941
    %4241 = vmatpush1.bf16.msra.mxu0 %v3940
    %4242 = vmatprep.subr.bf16.mxu0 %v3945
    %4243 = vmatpush1.bf16.msra.mxu0 %v3944
    %4244 = vmatprep.mubr.bf16.mxu0 %v3990
    %4245 = vmatmul.mubr.bf16.gmra.mrb[0].mxu0 %v3989
    %v4246 = vpop.f32.mrb[0].mxu0
    %v4247 = vadd.f32 %v4204, %v4246
    %v4248 = vpop.f32.mrb[0].mxu0
    %v4249 = vadd.f32 %v4206, %v4248
    %v4250 = vpop.f32.mrb[0].mxu0
    %v4251 = vadd.f32 %v4208, %v4250
    %v4252 = vpop.f32.mrb[0].mxu0
    %v4253 = vadd.f32 %v4210, %v4252
    %4254 = vdwg.mxu0
    %v4255 = vmax.f32 %v4118, 0.0
    %v4256 = vmax.f32 %v4120, 0.0
    %v4257 = vmax.f32 %v4247, 0.0
    %v4258 = vmax.f32 %v4249, 0.0
    %v4259 = vmax.f32 %v4122, 0.0
    %v4260 = vmax.f32 %v4124, 0.0
    %v4261 = vmax.f32 %v4251, 0.0
    %v4262 = vmax.f32 %v4253, 0.0
    %v4263 = vpack.c.bf16 %v4259, %v4255
    %v4264 = vpack.c.bf16 %v4260, %v4256
    %v4265 = vpack.c.bf16 %v4261, %v4257
    %v4266 = vpack.c.bf16 %v4262, %v4258
    %v4267 = vld [vmem:[#allocation3] sm:$0xff]
    %v4268 = vld [vmem:[#allocation3 + $0x8] sm:$0xff]
    %v4269 = vld [vmem:[#allocation3 + $0x10] sm:$0xff]
    %v4270 = vld [vmem:[#allocation3 + $0x18] sm:$0xff]
    %v4271 = vld [vmem:[#allocation3 + $0x20] sm:$0xff]
    %v4272 = vld [vmem:[#allocation3 + $0x28] sm:$0xff]
    %v4273 = vld [vmem:[#allocation3 + $0x30] sm:$0xff]
    %v4274 = vld [vmem:[#allocation3 + $0x38] sm:$0xff]
    %v4275 = vld [vmem:[#allocation3 + $0x40] sm:$0xff]
    %v4276 = vld [vmem:[#allocation3 + $0x48] sm:$0xff]
    %v4277 = vld [vmem:[#allocation3 + $0x50] sm:$0xff]
    %v4278 = vld [vmem:[#allocation3 + $0x58] sm:$0xff]
    %v4279 = vld [vmem:[#allocation3 + $0x60] sm:$0xff]
    %v4280 = vld [vmem:[#allocation3 + $0x68] sm:$0xff]
    %v4281 = vld [vmem:[#allocation3 + $0x70] sm:$0xff]
    %v4282 = vld [vmem:[#allocation3 + $0x78] sm:$0xff]
    %v4283 = vld [vmem:[#allocation3 + $0x80] sm:$0xff]
    %v4284 = vld [vmem:[#allocation3 + $0x88] sm:$0xff]
    %v4285 = vld [vmem:[#allocation3 + $0x90] sm:$0xff]
    %v4286 = vld [vmem:[#allocation3 + $0x98] sm:$0xff]
    %v4287 = vld [vmem:[#allocation3 + $0xa0] sm:$0xff]
    %v4288 = vld [vmem:[#allocation3 + $0xa8] sm:$0xff]
    %v4289 = vld [vmem:[#allocation3 + $0xb0] sm:$0xff]
    %v4290 = vld [vmem:[#allocation3 + $0xb8] sm:$0xff]
    %v4291 = vld [vmem:[#allocation3 + $0xc0] sm:$0xff]
    %v4292 = vld [vmem:[#allocation3 + $0xc8] sm:$0xff]
    %v4293 = vld [vmem:[#allocation3 + $0xd0] sm:$0xff]
    %v4294 = vld [vmem:[#allocation3 + $0xd8] sm:$0xff]
    %v4295 = vld [vmem:[#allocation3 + $0xe0] sm:$0xff]
    %v4296 = vld [vmem:[#allocation3 + $0xe8] sm:$0xff]
    %v4297 = vld [vmem:[#allocation3 + $0xf0] sm:$0xff]
    %v4298 = vld [vmem:[#allocation3 + $0xf8] sm:$0xff]
    %v4299 = vld [vmem:[#allocation3 + $0x100] sm:$0xff]
    %v4300 = vld [vmem:[#allocation3 + $0x108] sm:$0xff]
    %v4301 = vld [vmem:[#allocation3 + $0x110] sm:$0xff]
    %v4302 = vld [vmem:[#allocation3 + $0x118] sm:$0xff]
    %v4303 = vld [vmem:[#allocation3 + $0x120] sm:$0xff]
    %v4304 = vld [vmem:[#allocation3 + $0x128] sm:$0xff]
    %v4305 = vld [vmem:[#allocation3 + $0x130] sm:$0xff]
    %v4306 = vld [vmem:[#allocation3 + $0x138] sm:$0xff]
    %v4307 = vld [vmem:[#allocation3 + $0x140] sm:$0xff]
    %v4308 = vld [vmem:[#allocation3 + $0x148] sm:$0xff]
    %v4309 = vld [vmem:[#allocation3 + $0x150] sm:$0xff]
    %v4310 = vld [vmem:[#allocation3 + $0x158] sm:$0xff]
    %v4311 = vld [vmem:[#allocation3 + $0x160] sm:$0xff]
    %v4312 = vld [vmem:[#allocation3 + $0x168] sm:$0xff]
    %v4313 = vld [vmem:[#allocation3 + $0x170] sm:$0xff]
    %v4314 = vld [vmem:[#allocation3 + $0x178] sm:$0xff]
    %v4315 = vld [vmem:[#allocation3 + $0x180] sm:$0xff]
    %v4316 = vld [vmem:[#allocation3 + $0x188] sm:$0xff]
    %v4317 = vld [vmem:[#allocation3 + $0x190] sm:$0xff]
    %v4318 = vld [vmem:[#allocation3 + $0x198] sm:$0xff]
    %v4319 = vld [vmem:[#allocation3 + $0x1a0] sm:$0xff]
    %v4320 = vld [vmem:[#allocation3 + $0x1a8] sm:$0xff]
    %v4321 = vld [vmem:[#allocation3 + $0x1b0] sm:$0xff]
    %v4322 = vld [vmem:[#allocation3 + $0x1b8] sm:$0xff]
    %v4323 = vld [vmem:[#allocation3 + $0x1c0] sm:$0xff]
    %v4324 = vld [vmem:[#allocation3 + $0x1c8] sm:$0xff]
    %v4325 = vld [vmem:[#allocation3 + $0x1d0] sm:$0xff]
    %v4326 = vld [vmem:[#allocation3 + $0x1d8] sm:$0xff]
    %v4327 = vld [vmem:[#allocation3 + $0x1e0] sm:$0xff]
    %v4328 = vld [vmem:[#allocation3 + $0x1e8] sm:$0xff]
    %v4329 = vld [vmem:[#allocation3 + $0x1f0] sm:$0xff]
    %v4330 = vld [vmem:[#allocation3 + $0x1f8] sm:$0xff]
    %v4332 = vlaneseq
    %v4333 = vshrl.u32 %v4332, 7
    %v4334 = vsub.s32 0, %v4333
    %v4335 = vrot.slane %v696, %v4334
    %v4336 = vlaneseq
    %v4337 = vshrl.u32 %v4336, 7
    %v4338 = vsub.s32 1, %v4337
    %v4339 = vrot.slane %v696, %v4338
    %4342 = vmatprep.subr.bf16.mxu0 %v4268
    %4343 = vmatpush1.bf16.msra.mxu0 %v4267
    %4344 = vmatprep.subr.bf16.mxu0 %v4270
    %4345 = vmatpush1.bf16.msra.mxu0 %v4269
    %4346 = vmatprep.subr.bf16.mxu0 %v4272
    %4347 = vmatpush1.bf16.msra.mxu0 %v4271
    %4348 = vmatprep.subr.bf16.mxu0 %v4274
    %4349 = vmatpush1.bf16.msra.mxu0 %v4273
    %4350 = vmatprep.subr.bf16.mxu0 %v4276
    %4351 = vmatpush1.bf16.msra.mxu0 %v4275
    %4352 = vmatprep.subr.bf16.mxu0 %v4278
    %4353 = vmatpush1.bf16.msra.mxu0 %v4277
    %4354 = vmatprep.subr.bf16.mxu0 %v4280
    %4355 = vmatpush1.bf16.msra.mxu0 %v4279
    %4356 = vmatprep.subr.bf16.mxu0 %v4282
    %4357 = vmatpush1.bf16.msra.mxu0 %v4281
    %4358 = vmatprep.subr.bf16.mxu0 %v4284
    %4359 = vmatpush1.bf16.msra.mxu0 %v4283
    %4360 = vmatprep.subr.bf16.mxu0 %v4286
    %4361 = vmatpush1.bf16.msra.mxu0 %v4285
    %4362 = vmatprep.subr.bf16.mxu0 %v4288
    %4363 = vmatpush1.bf16.msra.mxu0 %v4287
    %4364 = vmatprep.subr.bf16.mxu0 %v4290
    %4365 = vmatpush1.bf16.msra.mxu0 %v4289
    %4366 = vmatprep.subr.bf16.mxu0 %v4292
    %4367 = vmatpush1.bf16.msra.mxu0 %v4291
    %4368 = vmatprep.subr.bf16.mxu0 %v4294
    %4369 = vmatpush1.bf16.msra.mxu0 %v4293
    %4370 = vmatprep.subr.bf16.mxu0 %v4296
    %4371 = vmatpush1.bf16.msra.mxu0 %v4295
    %4372 = vmatprep.subr.bf16.mxu0 %v4298
    %4373 = vmatpush1.bf16.msra.mxu0 %v4297
    %4374 = vmatprep.mubr.bf16.mxu0 %v4264
    %4375 = vmatmul.mubr.bf16.gmra.mrb[0].mxu0 %v4263
    %v4376 = vpop.f32.mrb[0].mxu0
    %v4377 = vadd.f32 %v4335, %v4376
    %v4378 = vpop.f32.mrb[0].mxu0
    %v4379 = vadd.f32 %v4339, %v4378
    %v4380 = vpop.f32.mrb[0].mxu0
    %v4381 = vadd.f32 %v4335, %v4380
    %v4382 = vpop.f32.mrb[0].mxu0
    %v4383 = vadd.f32 %v4339, %v4382
    %4384 = vdwg.mxu0
    %4385 = vmatprep.subr.bf16.mxu0 %v4300
    %4386 = vmatpush1.bf16.msra.mxu0 %v4299
    %4387 = vmatprep.subr.bf16.mxu0 %v4302
    %4388 = vmatpush1.bf16.msra.mxu0 %v4301
    %4389 = vmatprep.subr.bf16.mxu0 %v4304
    %4390 = vmatpush1.bf16.msra.mxu0 %v4303
    %4391 = vmatprep.subr.bf16.mxu0 %v4306
    %4392 = vmatpush1.bf16.msra.mxu0 %v4305
    %4393 = vmatprep.subr.bf16.mxu0 %v4308
    %4394 = vmatpush1.bf16.msra.mxu0 %v4307
    %4395 = vmatprep.subr.bf16.mxu0 %v4310
    %4396 = vmatpush1.bf16.msra.mxu0 %v4309
    %4397 = vmatprep.subr.bf16.mxu0 %v4312
    %4398 = vmatpush1.bf16.msra.mxu0 %v4311
    %4399 = vmatprep.subr.bf16.mxu0 %v4314
    %4400 = vmatpush1.bf16.msra.mxu0 %v4313
    %4401 = vmatprep.subr.bf16.mxu0 %v4316
    %4402 = vmatpush1.bf16.msra.mxu0 %v4315
    %4403 = vmatprep.subr.bf16.mxu0 %v4318
    %4404 = vmatpush1.bf16.msra.mxu0 %v4317
    %4405 = vmatprep.subr.bf16.mxu0 %v4320
    %4406 = vmatpush1.bf16.msra.mxu0 %v4319
    %4407 = vmatprep.subr.bf16.mxu0 %v4322
    %4408 = vmatpush1.bf16.msra.mxu0 %v4321
    %4409 = vmatprep.subr.bf16.mxu0 %v4324
    %4410 = vmatpush1.bf16.msra.mxu0 %v4323
    %4411 = vmatprep.subr.bf16.mxu0 %v4326
    %4412 = vmatpush1.bf16.msra.mxu0 %v4325
    %4413 = vmatprep.subr.bf16.mxu0 %v4328
    %4414 = vmatpush1.bf16.msra.mxu0 %v4327
    %4415 = vmatprep.subr.bf16.mxu0 %v4330
    %4416 = vmatpush1.bf16.msra.mxu0 %v4329
    %4417 = vmatprep.mubr.bf16.mxu0 %v4266
    %4418 = vmatmul.mubr.bf16.gmra.mrb[0].mxu0 %v4265
    %v4419 = vpop.f32.mrb[0].mxu0
    %v4420 = vadd.f32 %v4377, %v4419
    %v4421 = vpop.f32.mrb[0].mxu0
    %v4422 = vadd.f32 %v4379, %v4421
    %v4423 = vpop.f32.mrb[0].mxu0
    %v4424 = vadd.f32 %v4381, %v4423
    %v4425 = vpop.f32.mrb[0].mxu0
    %v4426 = vadd.f32 %v4383, %v4425
    %4427 = vdwg.mxu0
    %v4428 = vmax.f32 %v4420, 0.0
    %v4429 = vmax.f32 %v4422, 0.0
    %v4430 = vmax.f32 %v4424, 0.0
    %v4431 = vmax.f32 %v4426, 0.0
    %v4432 = vlaneseq
    %v4433 = vshrl.u32 %v4432, 7
    %v4434 = vlaneseq
    %v4435 = vand.u32 %v4434, 127
    %v4436 = vmul.u32 %v4433, 5
    %vm4437 = vcmp.ge.s32.totalorder %v4435, %v4436
    %v4438 = vadd.s32 %v4433, 1
    %v4439 = vmul.u32 %v4438, 5
    %vm4440 = vcmp.lt.s32.totalorder %v4435, %v4439
    %vm4441 = vmand %vm4437, %vm4440
    %v4442 = vsel %vm4441, 1.0, 0.0
    %v4443 = vpack.c.bf16 %v4442, %v4442
    %v4444 = vpack.c.bf16 %v4430, %v4428
    %v4445 = vpack.c.bf16 %v4431, %v4429
    %vm4446 = vcmask 80896
    %v4448 = vsel %vm4446, %v4443, 0
    %vm4450 = vcmask 1044480
    %v4452 = vsel %vm4450, %v4444, 0
    %v4455 = vsel %vm4450, %v4445, 0
    %4457 = vmatprep.subr.bf16.mxu0 %v4455
    %4458 = vmatpush1.bf16.msra.mxu0 %v4452
    %4459 = vmatprep.subr.bf16.mxu0 0
    %4460 = vmatpush1.bf16.msra.mxu0 0
    %4461 = vmatprep.subr.bf16.mxu0 0
    %4462 = vmatpush1.bf16.msra.mxu0 0
    %4463 = vmatprep.subr.bf16.mxu0 0
    %4464 = vmatpush1.bf16.msra.mxu0 0
    %4465 = vmatprep.subr.bf16.mxu0 0
    %4466 = vmatpush1.bf16.msra.mxu0 0
    %4467 = vmatprep.subr.bf16.mxu0 0
    %4468 = vmatpush1.bf16.msra.mxu0 0
    %4469 = vmatprep.subr.bf16.mxu0 0
    %4470 = vmatpush1.bf16.msra.mxu0 0
    %4471 = vmatprep.subr.bf16.mxu0 0
    %4472 = vmatpush1.bf16.msra.mxu0 0
    %4473 = vmatprep.subr.bf16.mxu0 0
    %4474 = vmatpush1.bf16.msra.mxu0 0
    %4475 = vmatprep.subr.bf16.mxu0 0
    %4476 = vmatpush1.bf16.msra.mxu0 0
    %4477 = vmatprep.subr.bf16.mxu0 0
    %4478 = vmatpush1.bf16.msra.mxu0 0
    %4479 = vmatprep.subr.bf16.mxu0 0
    %4480 = vmatpush1.bf16.msra.mxu0 0
    %4481 = vmatprep.subr.bf16.mxu0 0
    %4482 = vmatpush1.bf16.msra.mxu0 0
    %4483 = vmatprep.subr.bf16.mxu0 0
    %4484 = vmatpush1.bf16.msra.mxu0 0
    %4485 = vmatprep.subr.bf16.mxu0 0
    %4486 = vmatpush1.bf16.msra.mxu0 0
    %4487 = vmatprep.subr.bf16.mxu0 0
    %4488 = vmatpush1.bf16.msra.mxu0 0
    %4489 = vmatprep.mubr.bf16.mxu0 0
    %4490 = vmatmul.mubr.bf16.gmra.mrb[0].mxu0 %v4448
    %v4491 = vpop.f32.mrb[0].mxu0
    %v4492 = vadd.f32 0.0, %v4491
    %v4493 = vpop.f32.mrb[0].mxu0
    %v4494 = vadd.f32 0.0, %v4493
    %v4495 = vpop.f32.mrb[0].mxu0
    %v4496 = vpop.f32.mrb[0].mxu0
    %4497 = vdwg.mxu0
    %v4498 = vmul.f32 %v4492, 0.2
    %v4499 = vmul.f32 %v4494, 0.2
    %v4500 = vpack.c.bf16 %v3739, %v3739
    %v4501 = vpack.c.bf16 %v4498, %v4498
    %v4502 = vpack.c.bf16 %v4499, %v4499
    %v4503 = vld [vmem:[#allocation8] sm:$0xf]
    %v4504 = vld [vmem:[#allocation8 + $0x4] sm:$0xf]
    %v4505 = vld [vmem:[#allocation8 + $0x8] sm:$0xf]
    %v4506 = vld [vmem:[#allocation8 + $0xc] sm:$0xf]
    %v4507 = vld [vmem:[#allocation8 + $0x10] sm:$0xf]
    %v4508 = vld [vmem:[#allocation8 + $0x14] sm:$0xf]
    %v4509 = vld [vmem:[#allocation8 + $0x18] sm:$0xf]
    %v4510 = vld [vmem:[#allocation8 + $0x1c] sm:$0xf]
    %v4511 = vld [vmem:[#allocation8 + $0x20] sm:$0xf]
    %v4512 = vld [vmem:[#allocation8 + $0x24] sm:$0xf]
    %v4513 = vld [vmem:[#allocation8 + $0x28] sm:$0xf]
    %v4514 = vld [vmem:[#allocation8 + $0x2c] sm:$0xf]
    %v4515 = vld [vmem:[#allocation8 + $0x30] sm:$0xf]
    %v4516 = vld [vmem:[#allocation8 + $0x34] sm:$0xf]
    %v4517 = vld [vmem:[#allocation8 + $0x38] sm:$0xf]
    %v4518 = vld [vmem:[#allocation8 + $0x3c] sm:$0xf]
    %v4519 = vld [vmem:[#allocation8 + $0x40] sm:$0xf]
    %v4520 = vld [vmem:[#allocation8 + $0x44] sm:$0xf]
    %v4521 = vld [vmem:[#allocation8 + $0x48] sm:$0xf]
    %v4522 = vld [vmem:[#allocation8 + $0x4c] sm:$0xf]
    %v4523 = vld [vmem:[#allocation8 + $0x50] sm:$0xf]
    %v4524 = vld [vmem:[#allocation8 + $0x54] sm:$0xf]
    %v4525 = vld [vmem:[#allocation8 + $0x58] sm:$0xf]
    %v4526 = vld [vmem:[#allocation8 + $0x5c] sm:$0xf]
    %v4527 = vld [vmem:[#allocation8 + $0x60] sm:$0xf]
    %v4528 = vld [vmem:[#allocation8 + $0x64] sm:$0xf]
    %v4529 = vld [vmem:[#allocation8 + $0x68] sm:$0xf]
    %v4530 = vld [vmem:[#allocation8 + $0x6c] sm:$0xf]
    %v4531 = vld [vmem:[#allocation8 + $0x70] sm:$0xf]
    %v4532 = vld [vmem:[#allocation8 + $0x74] sm:$0xf]
    %v4533 = vld [vmem:[#allocation8 + $0x78] sm:$0xf]
    %v4534 = vld [vmem:[#allocation8 + $0x7c] sm:$0xf]
    %v4535 = vld [vmem:[#allocation8 + $0x80] sm:$0xf]
    %v4536 = vld [vmem:[#allocation8 + $0x84] sm:$0xf]
    %v4537 = vld [vmem:[#allocation8 + $0x88] sm:$0xf]
    %v4538 = vld [vmem:[#allocation8 + $0x8c] sm:$0xf]
    %v4539 = vld [vmem:[#allocation8 + $0x90] sm:$0xf]
    %v4540 = vld [vmem:[#allocation8 + $0x94] sm:$0xf]
    %v4541 = vld [vmem:[#allocation8 + $0x98] sm:$0xf]
    %v4542 = vld [vmem:[#allocation8 + $0x9c] sm:$0xf]
    %v4543 = vld [vmem:[#allocation8 + $0xa0] sm:$0xf]
    %v4544 = vld [vmem:[#allocation8 + $0xa4] sm:$0xf]
    %v4545 = vld [vmem:[#allocation8 + $0xa8] sm:$0xf]
    %v4546 = vld [vmem:[#allocation8 + $0xac] sm:$0xf]
    %v4547 = vld [vmem:[#allocation8 + $0xb0] sm:$0xf]
    %v4548 = vld [vmem:[#allocation8 + $0xb4] sm:$0xf]
    %v4549 = vld [vmem:[#allocation8 + $0xb8] sm:$0xf]
    %v4550 = vld [vmem:[#allocation8 + $0xbc] sm:$0xf]
    %v4552 = vlaneseq
    %v4553 = vshrl.u32 %v4552, 7
    %v4554 = vsub.s32 0, %v4553
    %v4555 = vrot.slane %v698, %v4554
    %v4605 = vunpack.c.l.b16 %v4503
    %v4606 = vunpack.c.l.b16 %v4504
    %v4607 = vunpack.c.l.b16 %v4505
    %v4608 = vunpack.c.l.b16 %v4506
    %v4609 = vunpack.c.l.b16 %v4507
    %v4610 = vunpack.c.l.b16 %v4508
    %v4611 = vunpack.c.l.b16 %v4509
    %v4612 = vunpack.c.l.b16 %v4510
    %v4613 = vunpack.c.l.b16 %v4511
    %v4614 = vunpack.c.l.b16 %v4512
    %v4615 = vunpack.c.l.b16 %v4513
    %v4616 = vunpack.c.l.b16 %v4514
    %v4617 = vunpack.c.l.b16 %v4515
    %v4618 = vunpack.c.l.b16 %v4516
    %v4619 = vunpack.c.l.b16 %v4517
    %v4620 = vunpack.c.l.b16 %v4518
    %v4621 = vunpack.c.l.b16 %v4519
    %v4622 = vunpack.c.l.b16 %v4520
    %v4623 = vunpack.c.l.b16 %v4521
    %v4624 = vunpack.c.l.b16 %v4522
    %v4625 = vunpack.c.l.b16 %v4523
    %v4626 = vunpack.c.l.b16 %v4524
    %v4627 = vunpack.c.l.b16 %v4525
    %v4628 = vunpack.c.l.b16 %v4526
    %v4629 = vunpack.c.l.b16 %v4527
    %v4630 = vunpack.c.l.b16 %v4528
    %v4631 = vunpack.c.l.b16 %v4529
    %v4632 = vunpack.c.l.b16 %v4530
    %v4633 = vunpack.c.l.b16 %v4531
    %v4634 = vunpack.c.l.b16 %v4532
    %v4635 = vunpack.c.l.b16 %v4533
    %v4636 = vunpack.c.l.b16 %v4534
    %v4637 = vunpack.c.l.b16 %v4535
    %v4638 = vunpack.c.l.b16 %v4536
    %v4639 = vunpack.c.l.b16 %v4537
    %v4640 = vunpack.c.l.b16 %v4538
    %v4641 = vunpack.c.l.b16 %v4539
    %v4642 = vunpack.c.l.b16 %v4540
    %v4643 = vunpack.c.l.b16 %v4541
    %v4644 = vunpack.c.l.b16 %v4542
    %v4645 = vunpack.c.l.b16 %v4543
    %v4646 = vunpack.c.l.b16 %v4544
    %v4647 = vunpack.c.l.b16 %v4545
    %v4648 = vunpack.c.l.b16 %v4546
    %v4649 = vunpack.c.l.b16 %v4547
    %v4650 = vunpack.c.l.b16 %v4548
    %v4651 = vunpack.c.l.b16 %v4549
    %v4652 = vunpack.c.l.b16 %v4550
    %v4653 = vpack.c.b16 %v4606, %v4605
    %v4654 = vpack.c.b16 %v4608, %v4607
    %v4655 = vpack.c.b16 %v4610, %v4609
    %v4656 = vpack.c.b16 %v4612, %v4611
    %v4657 = vpack.c.b16 %v4614, %v4613
    %v4658 = vpack.c.b16 %v4616, %v4615
    %v4659 = vpack.c.b16 %v4618, %v4617
    %v4660 = vpack.c.b16 %v4620, %v4619
    %v4661 = vpack.c.b16 %v4622, %v4621
    %v4662 = vpack.c.b16 %v4624, %v4623
    %v4663 = vpack.c.b16 %v4626, %v4625
    %v4664 = vpack.c.b16 %v4628, %v4627
    %v4665 = vpack.c.b16 %v4630, %v4629
    %v4666 = vpack.c.b16 %v4632, %v4631
    %v4667 = vpack.c.b16 %v4634, %v4633
    %v4668 = vpack.c.b16 %v4636, %v4635
    %v4669 = vpack.c.b16 %v4638, %v4637
    %v4670 = vpack.c.b16 %v4640, %v4639
    %v4671 = vpack.c.b16 %v4642, %v4641
    %v4672 = vpack.c.b16 %v4644, %v4643
    %v4673 = vpack.c.b16 %v4646, %v4645
    %v4674 = vpack.c.b16 %v4648, %v4647
    %v4675 = vpack.c.b16 %v4650, %v4649
    %v4676 = vpack.c.b16 %v4652, %v4651
    %4701 = vmatprep.subr.bf16.mxu0 0
    %4702 = vmatpush1.bf16.msra.mxu0 %v4653
    %4703 = vmatprep.subr.bf16.mxu0 0
    %4704 = vmatpush1.bf16.msra.mxu0 %v4654
    %4705 = vmatprep.subr.bf16.mxu0 0
    %4706 = vmatpush1.bf16.msra.mxu0 %v4655
    %4707 = vmatprep.subr.bf16.mxu0 0
    %4708 = vmatpush1.bf16.msra.mxu0 %v4656
    %4709 = vmatprep.subr.bf16.mxu0 0
    %4710 = vmatpush1.bf16.msra.mxu0 %v4657
    %4711 = vmatprep.subr.bf16.mxu0 0
    %4712 = vmatpush1.bf16.msra.mxu0 %v4658
    %4713 = vmatprep.subr.bf16.mxu0 0
    %4714 = vmatpush1.bf16.msra.mxu0 %v4659
    %4715 = vmatprep.subr.bf16.mxu0 0
    %4716 = vmatpush1.bf16.msra.mxu0 %v4660
    %4717 = vmatprep.subr.bf16.mxu0 0
    %4718 = vmatpush1.bf16.msra.mxu0 %v4661
    %4719 = vmatprep.subr.bf16.mxu0 0
    %4720 = vmatpush1.bf16.msra.mxu0 %v4662
    %4721 = vmatprep.subr.bf16.mxu0 0
    %4722 = vmatpush1.bf16.msra.mxu0 %v4663
    %4723 = vmatprep.subr.bf16.mxu0 0
    %4724 = vmatpush1.bf16.msra.mxu0 %v4664
    %4725 = vmatprep.subr.bf16.mxu0 0
    %4726 = vmatpush1.bf16.msra.mxu0 %v4665
    %4727 = vmatprep.subr.bf16.mxu0 0
    %4728 = vmatpush1.bf16.msra.mxu0 %v4666
    %4729 = vmatprep.subr.bf16.mxu0 0
    %4730 = vmatpush1.bf16.msra.mxu0 %v4667
    %4731 = vmatprep.subr.bf16.mxu0 0
    %4732 = vmatpush1.bf16.msra.mxu0 %v4668
    %4733 = vmatprep.mubr.bf16.mxu0 %v4501
    %4734 = vmatmul.mubr.bf16.gmra.mrb[0].mxu0 %v4500
    %v4735 = vpop.f32.mrb[0].mxu0
    %v4736 = vadd.f32 %v4555, %v4735
    %v4737 = vpop.f32.mrb[0].mxu0
    %v4738 = vpop.f32.mrb[0].mxu0
    %v4739 = vpop.f32.mrb[0].mxu0
    %4740 = vdwg.mxu0
    %4741 = vmatprep.subr.bf16.mxu0 0
    %4742 = vmatpush1.bf16.msra.mxu0 %v4669
    %4743 = vmatprep.subr.bf16.mxu0 0
    %4744 = vmatpush1.bf16.msra.mxu0 %v4670
    %4745 = vmatprep.subr.bf16.mxu0 0
    %4746 = vmatpush1.bf16.msra.mxu0 %v4671
    %4747 = vmatprep.subr.bf16.mxu0 0
    %4748 = vmatpush1.bf16.msra.mxu0 %v4672
    %4749 = vmatprep.subr.bf16.mxu0 0
    %4750 = vmatpush1.bf16.msra.mxu0 %v4673
    %4751 = vmatprep.subr.bf16.mxu0 0
    %4752 = vmatpush1.bf16.msra.mxu0 %v4674
    %4753 = vmatprep.subr.bf16.mxu0 0
    %4754 = vmatpush1.bf16.msra.mxu0 %v4675
    %4755 = vmatprep.subr.bf16.mxu0 0
    %4756 = vmatpush1.bf16.msra.mxu0 %v4676
    %4757 = vmatprep.subr.bf16.mxu0 0
    %4758 = vmatpush1.bf16.msra.mxu0 0
    %4759 = vmatprep.subr.bf16.mxu0 0
    %4760 = vmatpush1.bf16.msra.mxu0 0
    %4761 = vmatprep.subr.bf16.mxu0 0
    %4762 = vmatpush1.bf16.msra.mxu0 0
    %4763 = vmatprep.subr.bf16.mxu0 0
    %4764 = vmatpush1.bf16.msra.mxu0 0
    %4765 = vmatprep.subr.bf16.mxu0 0
    %4766 = vmatpush1.bf16.msra.mxu0 0
    %4767 = vmatprep.subr.bf16.mxu0 0
    %4768 = vmatpush1.bf16.msra.mxu0 0
    %4769 = vmatprep.subr.bf16.mxu0 0
    %4770 = vmatpush1.bf16.msra.mxu0 0
    %4771 = vmatprep.subr.bf16.mxu0 0
    %4772 = vmatpush1.bf16.msra.mxu0 0
    %4773 = vmatprep.mubr.bf16.mxu0 0
    %4774 = vmatmul.mubr.bf16.gmra.mrb[0].mxu0 %v4502
    %v4775 = vpop.f32.mrb[0].mxu0
    %v4776 = vadd.f32 %v4736, %v4775
    %v4777 = vpop.f32.mrb[0].mxu0
    %v4778 = vpop.f32.mrb[0].mxu0
    %v4779 = vpop.f32.mrb[0].mxu0
    %4780 = vdwg.mxu0
    %v4781 = vmax.f32 %v4776, 0.0
    %v4782 = vpack.c.bf16 %v4781, %v4781
    %v4783 = vld [vmem:[#allocation10] sm:$0xf]
    %v4784 = vld [vmem:[#allocation10 + $0x4] sm:$0xf]
    %v4785 = vld [vmem:[#allocation10 + $0x8] sm:$0xf]
    %v4786 = vld [vmem:[#allocation10 + $0xc] sm:$0xf]
    %v4787 = vld [vmem:[#allocation10 + $0x10] sm:$0xf]
    %v4788 = vld [vmem:[#allocation10 + $0x14] sm:$0xf]
    %v4789 = vld [vmem:[#allocation10 + $0x18] sm:$0xf]
    %v4790 = vld [vmem:[#allocation10 + $0x1c] sm:$0xf]
    %v4791 = vld [vmem:[#allocation10 + $0x20] sm:$0xf]
    %v4792 = vld [vmem:[#allocation10 + $0x24] sm:$0xf]
    %v4793 = vld [vmem:[#allocation10 + $0x28] sm:$0xf]
    %v4794 = vld [vmem:[#allocation10 + $0x2c] sm:$0xf]
    %v4795 = vld [vmem:[#allocation10 + $0x30] sm:$0xf]
    %v4796 = vld [vmem:[#allocation10 + $0x34] sm:$0xf]
    %v4797 = vld [vmem:[#allocation10 + $0x38] sm:$0xf]
    %v4798 = vld [vmem:[#allocation10 + $0x3c] sm:$0x3]
    %v4799 = vld [vmem:[%s3] sm:$0x1]
    %v4800 = vld [vmem:[%s11] sm:$0x3]
    %vm4801 = vcmask 31744
    %v4803 = vsel %vm4801, %v4799, 0
    %vm4805 = vcmask 1041408
    %v4807 = vsel %vm4805, %v4800, 0
    %4809 = vmatprep.subr.bf16.mxu0 0
    %4810 = vmatpush1.bf16.msra.mxu0 %v4807
    %4811 = vmatprep.subr.bf16.mxu0 0
    %4812 = vmatpush1.bf16.msra.mxu0 0
    %4813 = vmatprep.subr.bf16.mxu0 0
    %4814 = vmatpush1.bf16.msra.mxu0 0
    %4815 = vmatprep.subr.bf16.mxu0 0
    %4816 = vmatpush1.bf16.msra.mxu0 0
    %4817 = vmatprep.subr.bf16.mxu0 0
    %4818 = vmatpush1.bf16.msra.mxu0 0
    %4819 = vmatprep.subr.bf16.mxu0 0
    %4820 = vmatpush1.bf16.msra.mxu0 0
    %4821 = vmatprep.subr.bf16.mxu0 0
    %4822 = vmatpush1.bf16.msra.mxu0 0
    %4823 = vmatprep.subr.bf16.mxu0 0
    %4824 = vmatpush1.bf16.msra.mxu0 0
    %4825 = vmatprep.subr.bf16.mxu0 0
    %4826 = vmatpush1.bf16.msra.mxu0 0
    %4827 = vmatprep.subr.bf16.mxu0 0
    %4828 = vmatpush1.bf16.msra.mxu0 0
    %4829 = vmatprep.subr.bf16.mxu0 0
    %4830 = vmatpush1.bf16.msra.mxu0 0
    %4831 = vmatprep.subr.bf16.mxu0 0
    %4832 = vmatpush1.bf16.msra.mxu0 0
    %4833 = vmatprep.subr.bf16.mxu0 0
    %4834 = vmatpush1.bf16.msra.mxu0 0
    %4835 = vmatprep.subr.bf16.mxu0 0
    %4836 = vmatpush1.bf16.msra.mxu0 0
    %4837 = vmatprep.subr.bf16.mxu0 0
    %4838 = vmatpush1.bf16.msra.mxu0 0
    %4839 = vmatprep.subr.bf16.mxu0 0
    %4840 = vmatpush1.bf16.msra.mxu0 0
    %4841 = vmatprep.mubr.bf16.mxu0 0
    %4842 = vmatmul.mubr.bf16.gmra.mrb[0].mxu0 %v4803
    %v4843 = vpop.f32.mrb[0].mxu0
    %v4844 = vadd.f32 0.0, %v4843
    %v4845 = vpop.f32.mrb[0].mxu0
    %v4846 = vpop.f32.mrb[0].mxu0
    %v4847 = vpop.f32.mrb[0].mxu0
    %4848 = vdwg.mxu0
    %v4865 = vunpack.c.l.b16 %v4783
    %v4866 = vunpack.c.l.b16 %v4784
    %v4867 = vunpack.c.l.b16 %v4785
    %v4868 = vunpack.c.l.b16 %v4786
    %v4869 = vunpack.c.l.b16 %v4787
    %v4870 = vunpack.c.l.b16 %v4788
    %v4871 = vunpack.c.l.b16 %v4789
    %v4872 = vunpack.c.l.b16 %v4790
    %v4873 = vunpack.c.l.b16 %v4791
    %v4874 = vunpack.c.l.b16 %v4792
    %v4875 = vunpack.c.l.b16 %v4793
    %v4876 = vunpack.c.l.b16 %v4794
    %v4877 = vunpack.c.l.b16 %v4795
    %v4878 = vunpack.c.l.b16 %v4796
    %v4879 = vunpack.c.l.b16 %v4797
    %v4880 = vunpack.c.l.b16 %v4798
    %v4881 = vpack.c.b16 %v4866, %v4865
    %v4882 = vpack.c.b16 %v4868, %v4867
    %v4883 = vpack.c.b16 %v4870, %v4869
    %v4884 = vpack.c.b16 %v4872, %v4871
    %v4885 = vpack.c.b16 %v4874, %v4873
    %v4886 = vpack.c.b16 %v4876, %v4875
    %v4887 = vpack.c.b16 %v4878, %v4877
    %v4888 = vpack.c.b16 %v4880, %v4879
    %vm4896 = vcmask 1014784
    %v4898 = vsel %vm4896, %v4782, 0
    %vm4900 = vcmask 1045504
    %v4902 = vsel %vm4900, %v4888, 0
    %4904 = vmatprep.subr.bf16.mxu0 0
    %4905 = vmatpush1.bf16.msra.mxu0 %v4881
    %4906 = vmatprep.subr.bf16.mxu0 0
    %4907 = vmatpush1.bf16.msra.mxu0 %v4882
    %4908 = vmatprep.subr.bf16.mxu0 0
    %4909 = vmatpush1.bf16.msra.mxu0 %v4883
    %4910 = vmatprep.subr.bf16.mxu0 0
    %4911 = vmatpush1.bf16.msra.mxu0 %v4884
    %4912 = vmatprep.subr.bf16.mxu0 0
    %4913 = vmatpush1.bf16.msra.mxu0 %v4885
    %4914 = vmatprep.subr.bf16.mxu0 0
    %4915 = vmatpush1.bf16.msra.mxu0 %v4886
    %4916 = vmatprep.subr.bf16.mxu0 0
    %4917 = vmatpush1.bf16.msra.mxu0 %v4887
    %4918 = vmatprep.subr.bf16.mxu0 0
    %4919 = vmatpush1.bf16.msra.mxu0 %v4902
    %4920 = vmatprep.subr.bf16.mxu0 0
    %4921 = vmatpush1.bf16.msra.mxu0 0
    %4922 = vmatprep.subr.bf16.mxu0 0
    %4923 = vmatpush1.bf16.msra.mxu0 0
    %4924 = vmatprep.subr.bf16.mxu0 0
    %4925 = vmatpush1.bf16.msra.mxu0 0
    %4926 = vmatprep.subr.bf16.mxu0 0
    %4927 = vmatpush1.bf16.msra.mxu0 0
    %4928 = vmatprep.subr.bf16.mxu0 0
    %4929 = vmatpush1.bf16.msra.mxu0 0
    %4930 = vmatprep.subr.bf16.mxu0 0
    %4931 = vmatpush1.bf16.msra.mxu0 0
    %4932 = vmatprep.subr.bf16.mxu0 0
    %4933 = vmatpush1.bf16.msra.mxu0 0
    %4934 = vmatprep.subr.bf16.mxu0 0
    %4935 = vmatpush1.bf16.msra.mxu0 0
    %4936 = vmatprep.mubr.bf16.mxu0 0
    %4937 = vmatmul.mubr.bf16.gmra.mrb[0].mxu0 %v4898
    %v4938 = vpop.f32.mrb[0].mxu0
    %v4939 = vadd.f32 %v4844, %v4938
    %v4940 = vpop.f32.mrb[0].mxu0
    %v4941 = vpop.f32.mrb[0].mxu0
    %v4942 = vpop.f32.mrb[0].mxu0
    %4943 = vdwg.mxu0
    %v4945 = vlaneseq
    %v4946 = vshrl.u32 %v4945, 7
    %v4947 = vsub.s32 0, %v4946
    %v4948 = vrot.slane %v699, %v4947
    %v4950 = vadd.f32 %v4939, %v4948
    %v4951 = vmax.f32 %v4950, 0.0
    %v4952 = vpack.c.bf16 %v4951, %v4951
    %v4953 = vld [vmem:[%s12] sm:$0xf]
    %v4954 = vld [vmem:[%s12 + $0x4] sm:$0xf]
    %v4955 = vld [vmem:[%s12 + $0x8] sm:$0xf]
    %v4956 = vld [vmem:[%s12 + $0xc] sm:$0xf]
    %v4957 = vld [vmem:[%s12 + $0x10] sm:$0xf]
    %v4958 = vld [vmem:[%s12 + $0x14] sm:$0xf]
    %v4959 = vld [vmem:[%s12 + $0x18] sm:$0xf]
    %v4960 = vld [vmem:[%s12 + $0x1c] sm:$0xf]
    %v4961 = vld [vmem:[%s12 + $0x20] sm:$0xf]
    %v4962 = vld [vmem:[%s12 + $0x24] sm:$0xf]
    %v4963 = vld [vmem:[%s12 + $0x28] sm:$0xf]
    %v4964 = vld [vmem:[%s12 + $0x2c] sm:$0xf]
    %v4965 = vld [vmem:[%s12 + $0x30] sm:$0xf]
    %v4966 = vld [vmem:[%s12 + $0x34] sm:$0xf]
    %v4967 = vld [vmem:[%s12 + $0x38] sm:$0xf]
    %v4968 = vld [vmem:[%s12 + $0x3c] sm:$0xf]
    %v4970 = vlaneseq
    %v4971 = vshrl.u32 %v4970, 7
    %v4972 = vsub.s32 0, %v4971
    %v4973 = vrot.slane %v700, %v4972
    %v4991 = vunpack.c.l.b16 %v4953
    %v4992 = vunpack.c.l.b16 %v4954
    %v4993 = vunpack.c.l.b16 %v4955
    %v4994 = vunpack.c.l.b16 %v4956
    %v4995 = vunpack.c.l.b16 %v4957
    %v4996 = vunpack.c.l.b16 %v4958
    %v4997 = vunpack.c.l.b16 %v4959
    %v4998 = vunpack.c.l.b16 %v4960
    %v4999 = vunpack.c.l.b16 %v4961
    %v5000 = vunpack.c.l.b16 %v4962
    %v5001 = vunpack.c.l.b16 %v4963
    %v5002 = vunpack.c.l.b16 %v4964
    %v5003 = vunpack.c.l.b16 %v4965
    %v5004 = vunpack.c.l.b16 %v4966
    %v5005 = vunpack.c.l.b16 %v4967
    %v5006 = vunpack.c.l.b16 %v4968
    %v5007 = vpack.c.b16 %v4992, %v4991
    %v5008 = vpack.c.b16 %v4994, %v4993
    %v5009 = vpack.c.b16 %v4996, %v4995
    %v5010 = vpack.c.b16 %v4998, %v4997
    %v5011 = vpack.c.b16 %v5000, %v4999
    %v5012 = vpack.c.b16 %v5002, %v5001
    %v5013 = vpack.c.b16 %v5004, %v5003
    %v5014 = vpack.c.b16 %v5006, %v5005
    %5023 = vmatprep.subr.bf16.mxu0 0
    %5024 = vmatpush1.bf16.msra.mxu0 %v5007
    %5025 = vmatprep.subr.bf16.mxu0 0
    %5026 = vmatpush1.bf16.msra.mxu0 %v5008
    %5027 = vmatprep.subr.bf16.mxu0 0
    %5028 = vmatpush1.bf16.msra.mxu0 %v5009
    %5029 = vmatprep.subr.bf16.mxu0 0
    %5030 = vmatpush1.bf16.msra.mxu0 %v5010
    %5031 = vmatprep.subr.bf16.mxu0 0
    %5032 = vmatpush1.bf16.msra.mxu0 %v5011
    %5033 = vmatprep.subr.bf16.mxu0 0
    %5034 = vmatpush1.bf16.msra.mxu0 %v5012
    %5035 = vmatprep.subr.bf16.mxu0 0
    %5036 = vmatpush1.bf16.msra.mxu0 %v5013
    %5037 = vmatprep.subr.bf16.mxu0 0
    %5038 = vmatpush1.bf16.msra.mxu0 %v5014
    %5039 = vmatprep.subr.bf16.mxu0 0
    %5040 = vmatpush1.bf16.msra.mxu0 0
    %5041 = vmatprep.subr.bf16.mxu0 0
    %5042 = vmatpush1.bf16.msra.mxu0 0
    %5043 = vmatprep.subr.bf16.mxu0 0
    %5044 = vmatpush1.bf16.msra.mxu0 0
    %5045 = vmatprep.subr.bf16.mxu0 0
    %5046 = vmatpush1.bf16.msra.mxu0 0
    %5047 = vmatprep.subr.bf16.mxu0 0
    %5048 = vmatpush1.bf16.msra.mxu0 0
    %5049 = vmatprep.subr.bf16.mxu0 0
    %5050 = vmatpush1.bf16.msra.mxu0 0
    %5051 = vmatprep.subr.bf16.mxu0 0
    %5052 = vmatpush1.bf16.msra.mxu0 0
    %5053 = vmatprep.subr.bf16.mxu0 0
    %5054 = vmatpush1.bf16.msra.mxu0 0
    %5055 = vmatprep.mubr.bf16.mxu0 0
    %5056 = vmatmul.mubr.bf16.gmra.mrb[0].mxu0 %v4952
    %v5057 = vpop.f32.mrb[0].mxu0
    %v5058 = vadd.f32 %v4973, %v5057
    %v5059 = vpop.f32.mrb[0].mxu0
    %v5060 = vpop.f32.mrb[0].mxu0
    %v5061 = vpop.f32.mrb[0].mxu0
    %5062 = vdwg.mxu0
    %vm5063 = vcmask 9216
    %v5064 = vsel %vm5063, %v5058, -inf
    %5065 = vmax.xlane.f32.xlu0 %v5064
    %v5066 = vpop.xlane.xlu0 %5065
    %v5067 = vsub.f32 %v5058, %v5066
    %v5068 = vmul.f32 %v5067, 1.442695
    %v5069 = vpow.pop %v5068
    %v5070 = vsel %vm5063, %v5069, 0.0
    %5071 = vadd.xlane.f32.xlu0 %v5070
    %v5072 = vpop.xlane.xlu0 %5071
    %v5073 = vrcp.pop %v5072
    %v5074 = vmul.f32 %v5069, %v5073
    %5075 = vst.msk [vmem:[#allocation13] sm:$0x3] %vm5063, %v5074
    // Predicated region
    $region103: #{multimodal_rumor_detector.1} parent=1 // pred_check
      _
    $region104: #{multimodal_rumor_detector.1} parent=1 // pred_check_branch
      %5077 = sbr.rel (0) target = $region106
    $region105: #{multimodal_rumor_detector.1} parent=1 // pred_region
      %s5079 = ssub.s32 32, 32
      %5080 = vsyncadd [#allocation7], %s5079
      %s5082 = sshll.u32 [#allocation13], 4
      %s5083 = int_to_ptr.vmem [resolvable:$true] %s5082
      %5085 = dma.vmem_to_hbm [thread:$0]  %s5083, 32, %s14, [#allocation7]
    $region106: #{multimodal_rumor_detector.1} parent=1 // pred_fallthru
      _
    // Predicated region
    $region107: #{multimodal_rumor_detector.1} parent=1 // pred_check
      _
    $region108: #{multimodal_rumor_detector.1} parent=1 // pred_check_branch
      %5087 = sbr.rel (0) target = $region110
    $region109: #{multimodal_rumor_detector.1} parent=1 // pred_region
      %5088 = dma.done [#allocation7], 32
    $region110: #{multimodal_rumor_detector.1} parent=1 // pred_fallthru
      _
    %5089 = vsyncpa [#allocation6], 1
    %5090 = vsyncpa [#allocation9], 1
    %5091 = vsyncpa [#allocation12], 1
    %5092 = vsyncpa [#allocation7], 1
  %5093 = vsyncmov [#allocation4]
  %s5094 = vpop.sfrf %5093
  %p5095 = scmp.eq.s32.totalorder %s5094, 0
  %p5096 = pneg %p5095
  %5098 = shalt.err (%p5096)
  %s5099 = scalar_lea.sflag [#allocation4], 1
  %5100 = vsyncmov %s5099
  %s5101 = vpop.sfrf %5100
  %p5102 = scmp.eq.s32.totalorder %s5101, 0
  %p5103 = pneg %p5102
  %5105 = shalt.err (%p5103)

</llo_original>
